<compile_context>
chip_gen: v7x
topology: tpu7x:2x2x1
jax: 0.10.0
libtpu: 0.0.40
codegen_flags: <defaults>
</compile_context>

<pallas_src>
import functools

import jax
import jax.numpy as jnp
from jax.experimental import pallas as pl
from jax.experimental.pallas import tpu as pltpu

EPS = 1e-5
LANE = 128


def _round_up(x, m):
    return ((x + m - 1) // m) * m


# ----------------------------- Pallas kernels -------------------------------

def _norm_epilogue(acc, g_ref, b_ref, res_ref, o_ref, out_h, out_w,
                   apply_relu, pad_out, eps):
    """Instance norm (one-pass stats) + affine + optional ReLU/residual + store."""
    m, cout = acc.shape
    inv_m = 1.0 / float(m)
    s = jnp.sum(acc, axis=0, keepdims=True)
    ss = jnp.sum(acc * acc, axis=0, keepdims=True)
    mean = s * inv_m
    var = jnp.maximum(ss * inv_m - mean * mean, 0.0)
    y = (acc - mean) * jax.lax.rsqrt(var + eps)
    y = y * g_ref[...] + b_ref[...]
    if apply_relu:
        y = jnp.maximum(y, 0.0)
    if res_ref is not None:
        y = y + res_ref[0].reshape(m, cout).astype(jnp.float32)
    y = y.reshape(out_h, out_w, cout).astype(o_ref.dtype)
    if pad_out:
        # Write a zero halo so the next 3x3 conv reads this block directly
        # (no XLA jnp.pad -> extra HBM round trip of the mid activation).
        o_ref[0] = jnp.zeros((out_h + 2, out_w + 2, cout), o_ref.dtype)
        o_ref[0, 1:1 + out_h, 1:1 + out_w, :] = y
    else:
        o_ref[0] = y


def _make_strip_conv_kernel(out_h, out_w, cin_p, apply_relu, has_res,
                            pad_out, eps):
    """3x3 stride-1 conv as 3 K=3*cin_p MXU dots over a W-im2col strip."""
    m = out_h * out_w

    def kernel(*refs):
        if has_res:
            x_ref, w_ref, g_ref, b_ref, res_ref, o_ref, strip_ref = refs
        else:
            x_ref, w_ref, g_ref, b_ref, o_ref, strip_ref = refs
            res_ref = None
        cout = o_ref.shape[-1]

        # Build the W-direction strip once per step: three dw-shifted slabs
        # side-by-side on lanes (lane offsets are multiples of 128 -> aligned).
        for dw in range(3):
            strip_ref[:, :, dw * cin_p:(dw + 1) * cin_p] = (
                x_ref[0, :, dw:dw + out_w, :])

        acc = jnp.zeros((m, cout), jnp.float32)
        for dh in range(3):
            a = strip_ref[dh:dh + out_h]            # (out_h, out_w, 3*cin_p)
            acc = acc + jnp.dot(a.reshape(m, 3 * cin_p), w_ref[dh],
                                preferred_element_type=jnp.float32)

        _norm_epilogue(acc, g_ref, b_ref, res_ref, o_ref, out_h, out_w,
                       apply_relu, pad_out, eps)

    return kernel


def _make_grouped_conv_kernel(groups, out_h, out_w, apply_relu, has_res,
                              pad_out, eps):
    """Conv as tap-group MXU dots; each group = (dh, dw, c0, kdim) reads a
    channel-contiguous slice so several taps fold into one wide-K dot."""
    m = out_h * out_w

    def kernel(*refs):
        if has_res:
            x_ref, w_ref, g_ref, b_ref, res_ref, o_ref = refs
        else:
            x_ref, w_ref, g_ref, b_ref, o_ref = refs
            res_ref = None
        cout = o_ref.shape[-1]

        acc = jnp.zeros((m, cout), jnp.float32)
        koff = 0
        for (dh, dw, c0, kdim) in groups:
            a = x_ref[0, dh:dh + out_h, dw:dw + out_w, c0:c0 + kdim]
            acc = acc + jnp.dot(a.reshape(m, kdim),
                                w_ref[koff:koff + kdim, :],
                                preferred_element_type=jnp.float32)
            koff += kdim

        _norm_epilogue(acc, g_ref, b_ref, res_ref, o_ref, out_h, out_w,
                       apply_relu, pad_out, eps)

    return kernel


# ------------------------------ pallas_call ---------------------------------

def fused_conv_norm(x, w, gamma, beta, *, out_h, out_w, cin_p, mode,
                    groups=None, apply_relu=False, residual=None,
                    pad_out=False, out_dtype=jnp.bfloat16):
    """One fused pallas_call: conv + instance norm (+ ReLU) (+ residual add).

    x     : (N, Hx, Wx, Cx)  bf16 spatially padded / space-to-depth input
    w     : strip mode   -> (3, 3*cin_p, cout_p)  bf16
            grouped mode -> (sum_K, cout_p)       bf16
    gamma, beta : (cout_p,) f32
    """
    n, hx, wx, cx = x.shape
    cout_p = w.shape[-1]
    cout_tile = 256 if cout_p % 256 == 0 else LANE   # wider MXU N on v6e/v7x
    n_ct = cout_p // cout_tile

    oh_p = out_h + 2 if pad_out else out_h
    ow_p = out_w + 2 if pad_out else out_w
    has_res = residual is not None

    if mode == 'strip':
        kernel = _make_strip_conv_kernel(out_h, out_w, cin_p, apply_relu,
                                         has_res, pad_out, EPS)
        w_spec = pl.BlockSpec((3, 3 * cin_p, cout_tile), lambda i, j: (0, 0, j))
        scratch = [pltpu.VMEM((hx, out_w, 3 * cin_p), jnp.bfloat16)]
        scratch_bytes = hx * out_w * 3 * cin_p * 2
    else:
        kernel = _make_grouped_conv_kernel(tuple(groups), out_h, out_w,
                                           apply_relu, has_res, pad_out, EPS)
        w_spec = pl.BlockSpec((w.shape[0], cout_tile), lambda i, j: (0, j))
        scratch = []
        scratch_bytes = 0

    args = [x.astype(jnp.bfloat16),
            w.astype(jnp.bfloat16),
            gamma.reshape(1, cout_p).astype(jnp.float32),
            beta.reshape(1, cout_p).astype(jnp.float32)]
    in_specs = [
        pl.BlockSpec((1, hx, wx, cx), lambda i, j: (i, 0, 0, 0)),
        w_spec,
        pl.BlockSpec((1, cout_tile), lambda i, j: (0, j)),
        pl.BlockSpec((1, cout_tile), lambda i, j: (0, j)),
    ]
    if has_res:
        args.append(residual.astype(jnp.bfloat16))
        in_specs.append(pl.BlockSpec((1, out_h, out_w, cout_tile),
                                     lambda i, j: (i, 0, 0, j)))

    # Right-size VMEM from actual block footprints (double-buffered blocks +
    # scratch + f32 accumulator), capped under v7x's 64 MiB physical VMEM.
    def _nbytes(shape, dt):
        sz = 1
        for d in shape:
            sz *= d
        return sz * jnp.dtype(dt).itemsize

    block_bytes = (_nbytes((1, hx, wx, cx), jnp.bfloat16)
                   + _nbytes(w.shape, jnp.bfloat16)
                   + _nbytes((1, oh_p, ow_p, cout_tile), out_dtype)
                   + (_nbytes((1, out_h, out_w, cout_tile), jnp.bfloat16)
                      if has_res else 0))
    acc_bytes = out_h * out_w * cout_tile * 4
    vmem_limit = int(min(60 * 2 ** 20,
                         max(16 * 2 ** 20,
                             3 * block_bytes + scratch_bytes + 2 * acc_bytes)))

    return pl.pallas_call(
        kernel,
        out_shape=jax.ShapeDtypeStruct((n, oh_p, ow_p, cout_p), out_dtype),
        grid=(n, n_ct),
        in_specs=in_specs,
        out_specs=pl.BlockSpec((1, oh_p, ow_p, cout_tile),
                               lambda i, j: (i, 0, 0, j)),
        scratch_shapes=scratch,
        compiler_params=pltpu.CompilerParams(
            dimension_semantics=("parallel", "parallel"),
            vmem_limit_bytes=vmem_limit),
    )(*args)


# ------------------------------ glue (JAX) ----------------------------------

def _pad_last(x, target):
    c = x.shape[-1]
    if c == target:
        return x
    pad = [(0, 0)] * (x.ndim - 1) + [(0, target - c)]
    return jnp.pad(x, pad)


def _prep_weight_strip(w_oihw, cin_p, cout_p):
    """(O, I, 3, 3) -> (3, 3*cin_p, cout_p): per-dh, the 3 dw tap matrices
    stacked along K (matches the in-kernel W-strip channel layout)."""
    o, i, kh, kw = w_oihw.shape
    w = jnp.transpose(w_oihw, (2, 3, 1, 0))               # (kh, kw, I, O)
    w = jnp.pad(w, ((0, 0), (0, 0), (0, cin_p - i), (0, cout_p - o)))
    return w.reshape(kh, kw * cin_p, cout_p)


def _prep_weight_grouped(w_oihw, tap_lists, cin_p, cout_p):
    """(O, I, KH, KW) -> (sum_K, cout_p): tap matrices concatenated along K in
    group order (matches the grouped kernel's channel-contiguous reads)."""
    o, i, _, _ = w_oihw.shape
    w = jnp.transpose(w_oihw, (2, 3, 1, 0))               # (KH, KW, I, O)
    w = jnp.pad(w, ((0, 0), (0, 0), (0, cin_p - i), (0, cout_p - o)))
    blocks = [w[a, b] for taps in tap_lists for (a, b) in taps]
    return jnp.concatenate(blocks, axis=0)


def _space_to_depth_pad1(x):
    """Pad H/W by 1 and fold 2x2 phases onto channels (stride-2 conv input).
    Phase p = 2*(h%2) + (w%2) occupies channel block [p*C, (p+1)*C)."""
    n, h, w, c = x.shape
    xp = jnp.pad(x, ((0, 0), (1, 1), (1, 1), (0, 0)))
    hp, wp = h + 2, w + 2
    return (xp.reshape(n, hp // 2, 2, wp // 2, 2, c)
              .transpose(0, 1, 3, 2, 4, 5)
              .reshape(n, hp // 2, wp // 2, 4 * c))


def _stride2_3x3_groups(cin_p):
    """Tap groups over the space-to-depth tensor; contiguous channel-phase
    runs merged into wide-K dots (5 dots instead of 9)."""
    groups = ((0, 0, 0 * cin_p, 4 * cin_p),
              (0, 1, 0 * cin_p, 1 * cin_p),
              (0, 1, 2 * cin_p, 1 * cin_p),
              (1, 0, 0 * cin_p, 2 * cin_p),
              (1, 1, 0 * cin_p, 1 * cin_p))
    tap_lists = (((0, 0), (0, 1), (1, 0), (1, 1)),
                 ((0, 2),),
                 ((1, 2),),
                 ((2, 0), (2, 1)),
                 ((2, 2),))
    return groups, tap_lists


def basic_block_ins_forward(x_nchw, params, in_channel, out_channel):
    n, _, h, w = x_nchw.shape
    cin_p = _round_up(in_channel, LANE)
    cout_p = _round_up(out_channel, LANE)

    # NHWC + bf16 *before* all padding / layout plumbing (halves HBM traffic
    # of the largest tensors); in-kernel math stays f32.
    x = jnp.transpose(x_nchw, (0, 2, 3, 1)).astype(jnp.bfloat16)
    x = _pad_last(x, cin_p)

    g1 = _pad_last(params['g1'], cout_p)
    b1 = _pad_last(params['b1'], cout_p)
    g2 = _pad_last(params['g2'], cout_p)
    b2 = _pad_last(params['b2'], cout_p)

    if in_channel != out_channel:
        assert h % 2 == 0 and w % 2 == 0, "stride-2 branch requires even H/W"
        ho, wo = h // 2, w // 2
        xs2d = _space_to_depth_pad1(x)
        groups, tap_lists = _stride2_3x3_groups(cin_p)
        w1 = _prep_weight_grouped(params['w1'], tap_lists, cin_p, cout_p)
        # conv1 (3x3, s2) + norm + ReLU; writes a zero-haloed mid block.
        hmid_p = fused_conv_norm(xs2d, w1, g1, b1, out_h=ho, out_w=wo,
                                 cin_p=cin_p, mode='grouped', groups=groups,
                                 apply_relu=True, pad_out=True)
        # 1x1 stride-2 projection + norm: phase (1,1) of the SAME s2d tensor.
        wp = _prep_weight_grouped(params['wp'], (((0, 0),),), cin_p, cout_p)
        gp = _pad_last(params['gp'], cout_p)
        bp = _pad_last(params['bp'], cout_p)
        res = fused_conv_norm(xs2d, wp, gp, bp, out_h=ho, out_w=wo,
                              cin_p=cin_p, mode='grouped',
                              groups=((0, 0, 3 * cin_p, cin_p),),
                              apply_relu=False)
    else:
        ho, wo = h, w
        xp = jnp.pad(x, ((0, 0), (1, 1), (1, 1), (0, 0)))   # bf16 pad
        w1 = _prep_weight_strip(params['w1'], cin_p, cout_p)
        hmid_p = fused_conv_norm(xp, w1, g1, b1, out_h=ho, out_w=wo,
                                 cin_p=cin_p, mode='strip',
                                 apply_relu=True, pad_out=True)
        res = x   # identity residual (bf16, already channel-padded)

    # conv2 (3x3, s1) + norm; residual add fused in the epilogue; consumes the
    # zero-haloed mid block directly (no XLA pad round trip).
    w2 = _prep_weight_strip(params['w2'], cout_p, cout_p)
    out = fused_conv_norm(hmid_p, w2, g2, b2, out_h=ho, out_w=wo,
                          cin_p=cout_p, mode='strip', apply_relu=False,
                          residual=res)

    out = out[:, :, :, :out_channel]
    return jnp.transpose(out, (0, 3, 1, 2)).astype(jnp.float32)   # NCHW f32


def init_params(key, in_channel, out_channel):
    ks = jax.random.split(key, 9)

    def conv_w(k, o, i, kh, kw):
        fan_in = i * kh * kw
        return jax.random.normal(k, (o, i, kh, kw), jnp.float32) / jnp.sqrt(fan_in)

    def affine(kg, kb, c):
        g = 1.0 + 0.1 * jax.random.normal(kg, (c,), jnp.float32)
        b = 0.1 * jax.random.normal(kb, (c,), jnp.float32)
        return g, b

    p = {}
    p['w1'] = conv_w(ks[0], out_channel, in_channel, 3, 3)
    p['g1'], p['b1'] = affine(ks[1], ks[2], out_channel)
    p['w2'] = conv_w(ks[3], out_channel, out_channel, 3, 3)
    p['g2'], p['b2'] = affine(ks[4], ks[5], out_channel)
    if in_channel != out_channel:
        p['wp'] = conv_w(ks[6], out_channel, in_channel, 1, 1)
        p['gp'], p['bp'] = affine(ks[7], ks[8], out_channel)
    return p


if __name__ == "__main__":
    key = jax.random.PRNGKey(0)
    kx, kp1, kp2 = jax.random.split(key, 3)

    n, h, w = 2, 16, 16

    # --- downsampling branch: in_channel != out_channel (stride-2 + proj) ---
    in_c, out_c = 4, 8
    x = jax.random.normal(kx, (n, in_c, h, w), jnp.float32)
    params = init_params(kp1, in_c, out_c)
    fwd = jax.jit(functools.partial(basic_block_ins_forward,
                                    in_channel=in_c, out_channel=out_c))
    y = jax.block_until_ready(fwd(x, params))
    assert y.shape == (n, out_c, h // 2, w // 2), y.shape
    assert bool(jnp.all(jnp.isfinite(y)))

    # --- identity branch: in_channel == out_channel (stride-1, no proj) ---
    in_c2 = out_c2 = 8
    x2 = jax.random.normal(kx, (n, in_c2, h, w), jnp.float32)
    params2 = init_params(kp2, in_c2, out_c2)
    fwd2 = jax.jit(functools.partial(basic_block_ins_forward,
                                     in_channel=in_c2, out_channel=out_c2))
    y2 = jax.block_until_ready(fwd2(x2, params2))
    assert y2.shape == (n, out_c2, h, w), y2.shape
    assert bool(jnp.all(jnp.isfinite(y2)))

    print("KERNEL_OK")
</pallas_src>

<mosaic_0001>
module attributes {stable_mosaic.version = 11 : i64} {
  func.func @kernel(%arg0: i32, %arg1: i32, %arg2: memref<1x9x9x512xbf16, #tpu.memory_space<vmem>>, %arg3: memref<1152x128xbf16, #tpu.memory_space<vmem>>, %arg4: memref<1x128xf32, #tpu.memory_space<vmem>>, %arg5: memref<1x128xf32, #tpu.memory_space<vmem>>, %arg6: memref<1x10x10x128xbf16, #tpu.memory_space<vmem>>) attributes {dimension_semantics = [#tpu.dimension_semantics<parallel>, #tpu.dimension_semantics<parallel>], iteration_bounds = array<i64: 2, 1>, scalar_prefetch = 0 : i64, scratch_operands = 0 : i64, tpu.core_type = #tpu.core_type<tc>, window_params = [{transform_indices = @transform_0, window_bounds = array<i64: 1, 9, 9, 512>}, {transform_indices = @transform_1, window_bounds = array<i64: 1152, 128>}, {transform_indices = @transform_2, window_bounds = array<i64: 1, 128>}, {transform_indices = @transform_3, window_bounds = array<i64: 1, 128>}, {transform_indices = @transform_4, window_bounds = array<i64: 1, 10, 10, 128>}]} {
    %cst = arith.constant 0.000000e+00 : f32
    %0 = vector.broadcast %cst : f32 to vector<64x128xf32>
    %c0 = arith.constant 0 : index
    %c0_0 = arith.constant 0 : index
    %c0_1 = arith.constant 0 : index
    %c0_2 = arith.constant 0 : index
    %1 = vector.load %arg2[%c0, %c0_0, %c0_1, %c0_2] : memref<1x9x9x512xbf16, #tpu.memory_space<vmem>>, vector<1x8x8x512xbf16>
    %2 = vector.shape_cast %1 : vector<1x8x8x512xbf16> to vector<8x8x512xbf16>
    %3 = vector.shape_cast %2 : vector<8x8x512xbf16> to vector<64x512xbf16>
    %c0_3 = arith.constant 0 : index
    %c0_4 = arith.constant 0 : index
    %4 = vector.load %arg3[%c0_3, %c0_4] : memref<1152x128xbf16, #tpu.memory_space<vmem>>, vector<512x128xbf16>
    %cst_5 = arith.constant dense<0.000000e+00> : vector<64x128xf32>
    %5 = tpu.matmul %3, %4, %cst_5 {dimension_numbers = #tpu.dot_dimension_numbers<[1], [0], [0], [1], [0, 0, 1, 1], [], []>} : vector<64x512xbf16>, vector<512x128xbf16>, vector<64x128xf32> -> vector<64x128xf32>
    %6 = arith.addf %0, %5 : vector<64x128xf32>
    %c0_6 = arith.constant 0 : index
    %c0_7 = arith.constant 0 : index
    %c1 = arith.constant 1 : index
    %c0_8 = arith.constant 0 : index
    %7 = vector.load %arg2[%c0_6, %c0_7, %c1, %c0_8] : memref<1x9x9x512xbf16, #tpu.memory_space<vmem>>, vector<1x8x8x128xbf16>
    %8 = vector.shape_cast %7 : vector<1x8x8x128xbf16> to vector<8x8x128xbf16>
    %9 = vector.shape_cast %8 : vector<8x8x128xbf16> to vector<64x128xbf16>
    %c512 = arith.constant 512 : index
    %c0_9 = arith.constant 0 : index
    %10 = vector.load %arg3[%c512, %c0_9] : memref<1152x128xbf16, #tpu.memory_space<vmem>>, vector<128x128xbf16>
    %cst_10 = arith.constant dense<0.000000e+00> : vector<64x128xf32>
    %11 = tpu.matmul %9, %10, %cst_10 {dimension_numbers = #tpu.dot_dimension_numbers<[1], [0], [0], [1], [0, 0, 1, 1], [], []>} : vector<64x128xbf16>, vector<128x128xbf16>, vector<64x128xf32> -> vector<64x128xf32>
    %12 = arith.addf %6, %11 : vector<64x128xf32>
    %c0_11 = arith.constant 0 : index
    %c0_12 = arith.constant 0 : index
    %c1_13 = arith.constant 1 : index
    %c256 = arith.constant 256 : index
    %13 = vector.load %arg2[%c0_11, %c0_12, %c1_13, %c256] : memref<1x9x9x512xbf16, #tpu.memory_space<vmem>>, vector<1x8x8x128xbf16>
    %14 = vector.shape_cast %13 : vector<1x8x8x128xbf16> to vector<8x8x128xbf16>
    %15 = vector.shape_cast %14 : vector<8x8x128xbf16> to vector<64x128xbf16>
    %c640 = arith.constant 640 : index
    %c0_14 = arith.constant 0 : index
    %16 = vector.load %arg3[%c640, %c0_14] : memref<1152x128xbf16, #tpu.memory_space<vmem>>, vector<128x128xbf16>
    %cst_15 = arith.constant dense<0.000000e+00> : vector<64x128xf32>
    %17 = tpu.matmul %15, %16, %cst_15 {dimension_numbers = #tpu.dot_dimension_numbers<[1], [0], [0], [1], [0, 0, 1, 1], [], []>} : vector<64x128xbf16>, vector<128x128xbf16>, vector<64x128xf32> -> vector<64x128xf32>
    %18 = arith.addf %12, %17 : vector<64x128xf32>
    %c0_16 = arith.constant 0 : index
    %c1_17 = arith.constant 1 : index
    %c0_18 = arith.constant 0 : index
    %c0_19 = arith.constant 0 : index
    %19 = vector.load %arg2[%c0_16, %c1_17, %c0_18, %c0_19] : memref<1x9x9x512xbf16, #tpu.memory_space<vmem>>, vector<1x8x8x256xbf16>
    %20 = vector.shape_cast %19 : vector<1x8x8x256xbf16> to vector<8x8x256xbf16>
    %21 = vector.shape_cast %20 : vector<8x8x256xbf16> to vector<64x256xbf16>
    %c768 = arith.constant 768 : index
    %c0_20 = arith.constant 0 : index
    %22 = vector.load %arg3[%c768, %c0_20] : memref<1152x128xbf16, #tpu.memory_space<vmem>>, vector<256x128xbf16>
    %cst_21 = arith.constant dense<0.000000e+00> : vector<64x128xf32>
    %23 = tpu.matmul %21, %22, %cst_21 {dimension_numbers = #tpu.dot_dimension_numbers<[1], [0], [0], [1], [0, 0, 1, 1], [], []>} : vector<64x256xbf16>, vector<256x128xbf16>, vector<64x128xf32> -> vector<64x128xf32>
    %24 = arith.addf %18, %23 : vector<64x128xf32>
    %c0_22 = arith.constant 0 : index
    %c1_23 = arith.constant 1 : index
    %c1_24 = arith.constant 1 : index
    %c0_25 = arith.constant 0 : index
    %25 = vector.load %arg2[%c0_22, %c1_23, %c1_24, %c0_25] : memref<1x9x9x512xbf16, #tpu.memory_space<vmem>>, vector<1x8x8x128xbf16>
    %26 = vector.shape_cast %25 : vector<1x8x8x128xbf16> to vector<8x8x128xbf16>
    %27 = vector.shape_cast %26 : vector<8x8x128xbf16> to vector<64x128xbf16>
    %c1024 = arith.constant 1024 : index
    %c0_26 = arith.constant 0 : index
    %28 = vector.load %arg3[%c1024, %c0_26] : memref<1152x128xbf16, #tpu.memory_space<vmem>>, vector<128x128xbf16>
    %cst_27 = arith.constant dense<0.000000e+00> : vector<64x128xf32>
    %29 = tpu.matmul %27, %28, %cst_27 {dimension_numbers = #tpu.dot_dimension_numbers<[1], [0], [0], [1], [0, 0, 1, 1], [], []>} : vector<64x128xbf16>, vector<128x128xbf16>, vector<64x128xf32> -> vector<64x128xf32>
    %30 = arith.addf %24, %29 : vector<64x128xf32>
    %cst_28 = arith.constant dense<0.000000e+00> : vector<128xf32>
    %31 = vector.multi_reduction <add>, %30, %cst_28 [0] : vector<64x128xf32> to vector<128xf32>
    %32 = vector.shape_cast %31 : vector<128xf32> to vector<1x128xf32>
    %33 = arith.mulf %30, %30 : vector<64x128xf32>
    %cst_29 = arith.constant dense<0.000000e+00> : vector<128xf32>
    %34 = vector.multi_reduction <add>, %33, %cst_29 [0] : vector<64x128xf32> to vector<128xf32>
    %35 = vector.shape_cast %34 : vector<128xf32> to vector<1x128xf32>
    %cst_30 = arith.constant 1.562500e-02 : f32
    %36 = vector.broadcast %cst_30 : f32 to vector<1x128xf32>
    %37 = arith.mulf %32, %36 : vector<1x128xf32>
    %cst_31 = arith.constant 1.562500e-02 : f32
    %38 = vector.broadcast %cst_31 : f32 to vector<1x128xf32>
    %39 = arith.mulf %35, %38 : vector<1x128xf32>
    %40 = arith.mulf %37, %37 : vector<1x128xf32>
    %41 = arith.subf %39, %40 : vector<1x128xf32>
    %cst_32 = arith.constant 0.000000e+00 : f32
    %42 = vector.broadcast %cst_32 : f32 to vector<1x128xf32>
    %43 = arith.maximumf %41, %42 : vector<1x128xf32>
    %44 = vector.broadcast %37 : vector<1x128xf32> to vector<64x128xf32>
    %45 = arith.subf %30, %44 : vector<64x128xf32>
    %cst_33 = arith.constant 9.99999974E-6 : f32
    %46 = vector.broadcast %cst_33 : f32 to vector<1x128xf32>
    %47 = arith.addf %43, %46 : vector<1x128xf32>
    %48 = math.rsqrt %47 : vector<1x128xf32>
    %49 = vector.broadcast %48 : vector<1x128xf32> to vector<64x128xf32>
    %50 = arith.mulf %45, %49 : vector<64x128xf32>
    %c0_34 = arith.constant 0 : index
    %c0_35 = arith.constant 0 : index
    %51 = vector.load %arg4[%c0_34, %c0_35] : memref<1x128xf32, #tpu.memory_space<vmem>>, vector<1x128xf32>
    %52 = vector.broadcast %51 : vector<1x128xf32> to vector<64x128xf32>
    %53 = arith.mulf %50, %52 : vector<64x128xf32>
    %c0_36 = arith.constant 0 : index
    %c0_37 = arith.constant 0 : index
    %54 = vector.load %arg5[%c0_36, %c0_37] : memref<1x128xf32, #tpu.memory_space<vmem>>, vector<1x128xf32>
    %55 = vector.broadcast %54 : vector<1x128xf32> to vector<64x128xf32>
    %56 = arith.addf %53, %55 : vector<64x128xf32>
    %cst_38 = arith.constant 0.000000e+00 : f32
    %57 = vector.broadcast %cst_38 : f32 to vector<64x128xf32>
    %58 = arith.maximumf %56, %57 : vector<64x128xf32>
    %59 = vector.shape_cast %58 : vector<64x128xf32> to vector<8x8x128xf32>
    %60 = arith.truncf %59 : vector<8x8x128xf32> to vector<8x8x128xbf16>
    %cst_39 = arith.constant 0.000000e+00 : bf16
    %61 = vector.broadcast %cst_39 : bf16 to vector<10x10x128xbf16>
    %c0_40 = arith.constant 0 : index
    %c0_41 = arith.constant 0 : index
    %c0_42 = arith.constant 0 : index
    %c0_43 = arith.constant 0 : index
    %62 = vector.load %arg6[%c0_40, %c0_41, %c0_42, %c0_43] : memref<1x10x10x128xbf16, #tpu.memory_space<vmem>>, vector<1x10x10x128xbf16>
    %63 = vector.shape_cast %62 : vector<1x10x10x128xbf16> to vector<10x10x128xbf16>
    %64 = vector.shape_cast %61 : vector<10x10x128xbf16> to vector<1x10x10x128xbf16>
    tpu.vector_store %arg6[%c0_40, %c0_41, %c0_42, %c0_43], %64 {strides = array<i32>} : memref<1x10x10x128xbf16, #tpu.memory_space<vmem>>, vector<1x10x10x128xbf16>,
    %c0_44 = arith.constant 0 : index
    %c1_45 = arith.constant 1 : index
    %c1_46 = arith.constant 1 : index
    %c0_47 = arith.constant 0 : index
    %65 = vector.load %arg6[%c0_44, %c1_45, %c1_46, %c0_47] : memref<1x10x10x128xbf16, #tpu.memory_space<vmem>>, vector<1x8x8x128xbf16>
    %66 = vector.shape_cast %65 : vector<1x8x8x128xbf16> to vector<8x8x128xbf16>
    %67 = vector.shape_cast %60 : vector<8x8x128xbf16> to vector<1x8x8x128xbf16>
    tpu.vector_store %arg6[%c0_44, %c1_45, %c1_46, %c0_47], %67 {strides = array<i32>} : memref<1x10x10x128xbf16, #tpu.memory_space<vmem>>, vector<1x8x8x128xbf16>,
    return
  }
  func.func @transform_0(%arg0: i32, %arg1: i32) -> (i32, i32, i32, i32) {
    %c0_i32 = arith.constant 0 : i32
    %c0_i32_0 = arith.constant 0 : i32
    %c0_i32_1 = arith.constant 0 : i32
    %c0_i32_2 = arith.constant 0 : i32
    return %arg0, %c0_i32, %c0_i32_0, %c0_i32_1 : i32, i32, i32, i32
  }
  func.func @transform_1(%arg0: i32, %arg1: i32) -> (i32, i32) {
    %c0_i32 = arith.constant 0 : i32
    %c0_i32_0 = arith.constant 0 : i32
    return %c0_i32, %arg1 : i32, i32
  }
  func.func @transform_2(%arg0: i32, %arg1: i32) -> (i32, i32) {
    %c0_i32 = arith.constant 0 : i32
    %c0_i32_0 = arith.constant 0 : i32
    return %c0_i32, %arg1 : i32, i32
  }
  func.func @transform_3(%arg0: i32, %arg1: i32) -> (i32, i32) {
    %c0_i32 = arith.constant 0 : i32
    %c0_i32_0 = arith.constant 0 : i32
    return %c0_i32, %arg1 : i32, i32
  }
  func.func @transform_4(%arg0: i32, %arg1: i32) -> (i32, i32, i32, i32) {
    %c0_i32 = arith.constant 0 : i32
    %c0_i32_0 = arith.constant 0 : i32
    %c0_i32_1 = arith.constant 0 : i32
    return %arg0, %c0_i32, %c0_i32_0, %arg1 : i32, i32, i32, i32
  }
}

module attributes {stable_mosaic.version = 11 : i64} {
  func.func @kernel(%arg0: i32, %arg1: i32, %arg2: memref<1x9x9x512xbf16, #tpu.memory_space<vmem>>, %arg3: memref<128x128xbf16, #tpu.memory_space<vmem>>, %arg4: memref<1x128xf32, #tpu.memory_space<vmem>>, %arg5: memref<1x128xf32, #tpu.memory_space<vmem>>, %arg6: memref<1x8x8x128xbf16, #tpu.memory_space<vmem>>) attributes {dimension_semantics = [#tpu.dimension_semantics<parallel>, #tpu.dimension_semantics<parallel>], iteration_bounds = array<i64: 2, 1>, scalar_prefetch = 0 : i64, scratch_operands = 0 : i64, tpu.core_type = #tpu.core_type<tc>, window_params = [{transform_indices = @transform_0, window_bounds = array<i64: 1, 9, 9, 512>}, {transform_indices = @transform_1, window_bounds = array<i64: 128, 128>}, {transform_indices = @transform_2, window_bounds = array<i64: 1, 128>}, {transform_indices = @transform_3, window_bounds = array<i64: 1, 128>}, {transform_indices = @transform_4, window_bounds = array<i64: 1, 8, 8, 128>}]} {
    %cst = arith.constant 0.000000e+00 : f32
    %0 = vector.broadcast %cst : f32 to vector<64x128xf32>
    %c0 = arith.constant 0 : index
    %c0_0 = arith.constant 0 : index
    %c0_1 = arith.constant 0 : index
    %c384 = arith.constant 384 : index
    %1 = vector.load %arg2[%c0, %c0_0, %c0_1, %c384] : memref<1x9x9x512xbf16, #tpu.memory_space<vmem>>, vector<1x8x8x128xbf16>
    %2 = vector.shape_cast %1 : vector<1x8x8x128xbf16> to vector<8x8x128xbf16>
    %3 = vector.shape_cast %2 : vector<8x8x128xbf16> to vector<64x128xbf16>
    %c0_2 = arith.constant 0 : index
    %c0_3 = arith.constant 0 : index
    %4 = vector.load %arg3[%c0_2, %c0_3] : memref<128x128xbf16, #tpu.memory_space<vmem>>, vector<128x128xbf16>
    %cst_4 = arith.constant dense<0.000000e+00> : vector<64x128xf32>
    %5 = tpu.matmul %3, %4, %cst_4 {dimension_numbers = #tpu.dot_dimension_numbers<[1], [0], [0], [1], [0, 0, 1, 1], [], []>} : vector<64x128xbf16>, vector<128x128xbf16>, vector<64x128xf32> -> vector<64x128xf32>
    %6 = arith.addf %0, %5 : vector<64x128xf32>
    %cst_5 = arith.constant dense<0.000000e+00> : vector<128xf32>
    %7 = vector.multi_reduction <add>, %6, %cst_5 [0] : vector<64x128xf32> to vector<128xf32>
    %8 = vector.shape_cast %7 : vector<128xf32> to vector<1x128xf32>
    %9 = arith.mulf %6, %6 : vector<64x128xf32>
    %cst_6 = arith.constant dense<0.000000e+00> : vector<128xf32>
    %10 = vector.multi_reduction <add>, %9, %cst_6 [0] : vector<64x128xf32> to vector<128xf32>
    %11 = vector.shape_cast %10 : vector<128xf32> to vector<1x128xf32>
    %cst_7 = arith.constant 1.562500e-02 : f32
    %12 = vector.broadcast %cst_7 : f32 to vector<1x128xf32>
    %13 = arith.mulf %8, %12 : vector<1x128xf32>
    %cst_8 = arith.constant 1.562500e-02 : f32
    %14 = vector.broadcast %cst_8 : f32 to vector<1x128xf32>
    %15 = arith.mulf %11, %14 : vector<1x128xf32>
    %16 = arith.mulf %13, %13 : vector<1x128xf32>
    %17 = arith.subf %15, %16 : vector<1x128xf32>
    %cst_9 = arith.constant 0.000000e+00 : f32
    %18 = vector.broadcast %cst_9 : f32 to vector<1x128xf32>
    %19 = arith.maximumf %17, %18 : vector<1x128xf32>
    %20 = vector.broadcast %13 : vector<1x128xf32> to vector<64x128xf32>
    %21 = arith.subf %6, %20 : vector<64x128xf32>
    %cst_10 = arith.constant 9.99999974E-6 : f32
    %22 = vector.broadcast %cst_10 : f32 to vector<1x128xf32>
    %23 = arith.addf %19, %22 : vector<1x128xf32>
    %24 = math.rsqrt %23 : vector<1x128xf32>
    %25 = vector.broadcast %24 : vector<1x128xf32> to vector<64x128xf32>
    %26 = arith.mulf %21, %25 : vector<64x128xf32>
    %c0_11 = arith.constant 0 : index
    %c0_12 = arith.constant 0 : index
    %27 = vector.load %arg4[%c0_11, %c0_12] : memref<1x128xf32, #tpu.memory_space<vmem>>, vector<1x128xf32>
    %28 = vector.broadcast %27 : vector<1x128xf32> to vector<64x128xf32>
    %29 = arith.mulf %26, %28 : vector<64x128xf32>
    %c0_13 = arith.constant 0 : index
    %c0_14 = arith.constant 0 : index
    %30 = vector.load %arg5[%c0_13, %c0_14] : memref<1x128xf32, #tpu.memory_space<vmem>>, vector<1x128xf32>
    %31 = vector.broadcast %30 : vector<1x128xf32> to vector<64x128xf32>
    %32 = arith.addf %29, %31 : vector<64x128xf32>
    %33 = vector.shape_cast %32 : vector<64x128xf32> to vector<8x8x128xf32>
    %34 = arith.truncf %33 : vector<8x8x128xf32> to vector<8x8x128xbf16>
    %c0_15 = arith.constant 0 : index
    %c0_16 = arith.constant 0 : index
    %c0_17 = arith.constant 0 : index
    %c0_18 = arith.constant 0 : index
    %35 = vector.load %arg6[%c0_15, %c0_16, %c0_17, %c0_18] : memref<1x8x8x128xbf16, #tpu.memory_space<vmem>>, vector<1x8x8x128xbf16>
    %36 = vector.shape_cast %35 : vector<1x8x8x128xbf16> to vector<8x8x128xbf16>
    %37 = vector.shape_cast %34 : vector<8x8x128xbf16> to vector<1x8x8x128xbf16>
    tpu.vector_store %arg6[%c0_15, %c0_16, %c0_17, %c0_18], %37 {strides = array<i32>} : memref<1x8x8x128xbf16, #tpu.memory_space<vmem>>, vector<1x8x8x128xbf16>,
    return
  }
  func.func @transform_0(%arg0: i32, %arg1: i32) -> (i32, i32, i32, i32) {
    %c0_i32 = arith.constant 0 : i32
    %c0_i32_0 = arith.constant 0 : i32
    %c0_i32_1 = arith.constant 0 : i32
    %c0_i32_2 = arith.constant 0 : i32
    return %arg0, %c0_i32, %c0_i32_0, %c0_i32_1 : i32, i32, i32, i32
  }
  func.func @transform_1(%arg0: i32, %arg1: i32) -> (i32, i32) {
    %c0_i32 = arith.constant 0 : i32
    %c0_i32_0 = arith.constant 0 : i32
    return %c0_i32, %arg1 : i32, i32
  }
  func.func @transform_2(%arg0: i32, %arg1: i32) -> (i32, i32) {
    %c0_i32 = arith.constant 0 : i32
    %c0_i32_0 = arith.constant 0 : i32
    return %c0_i32, %arg1 : i32, i32
  }
  func.func @transform_3(%arg0: i32, %arg1: i32) -> (i32, i32) {
    %c0_i32 = arith.constant 0 : i32
    %c0_i32_0 = arith.constant 0 : i32
    return %c0_i32, %arg1 : i32, i32
  }
  func.func @transform_4(%arg0: i32, %arg1: i32) -> (i32, i32, i32, i32) {
    %c0_i32 = arith.constant 0 : i32
    %c0_i32_0 = arith.constant 0 : i32
    %c0_i32_1 = arith.constant 0 : i32
    return %arg0, %c0_i32, %c0_i32_0, %arg1 : i32, i32, i32, i32
  }
}

module attributes {stable_mosaic.version = 11 : i64} {
  func.func @kernel(%arg0: i32, %arg1: i32, %arg2: memref<1x10x10x128xbf16, #tpu.memory_space<vmem>>, %arg3: memref<3x384x128xbf16, #tpu.memory_space<vmem>>, %arg4: memref<1x128xf32, #tpu.memory_space<vmem>>, %arg5: memref<1x128xf32, #tpu.memory_space<vmem>>, %arg6: memref<1x8x8x128xbf16, #tpu.memory_space<vmem>>, %arg7: memref<1x8x8x128xbf16, #tpu.memory_space<vmem>>, %arg8: memref<10x8x384xbf16, #tpu.memory_space<vmem>>) attributes {dimension_semantics = [#tpu.dimension_semantics<parallel>, #tpu.dimension_semantics<parallel>], iteration_bounds = array<i64: 2, 1>, scalar_prefetch = 0 : i64, scratch_operands = 1 : i64, tpu.core_type = #tpu.core_type<tc>, window_params = [{transform_indices = @transform_0, window_bounds = array<i64: 1, 10, 10, 128>}, {transform_indices = @transform_1, window_bounds = array<i64: 3, 384, 128>}, {transform_indices = @transform_2, window_bounds = array<i64: 1, 128>}, {transform_indices = @transform_3, window_bounds = array<i64: 1, 128>}, {transform_indices = @transform_4, window_bounds = array<i64: 1, 8, 8, 128>}, {transform_indices = @transform_5, window_bounds = array<i64: 1, 8, 8, 128>}]} {
    %c0 = arith.constant 0 : index
    %c0_0 = arith.constant 0 : index
    %c0_1 = arith.constant 0 : index
    %c0_2 = arith.constant 0 : index
    %0 = vector.load %arg2[%c0, %c0_0, %c0_1, %c0_2] : memref<1x10x10x128xbf16, #tpu.memory_space<vmem>>, vector<1x10x8x128xbf16>
    %1 = vector.shape_cast %0 : vector<1x10x8x128xbf16> to vector<10x8x128xbf16>
    %c0_3 = arith.constant 0 : index
    %c0_4 = arith.constant 0 : index
    %c0_5 = arith.constant 0 : index
    %2 = vector.load %arg8[%c0_3, %c0_4, %c0_5] : memref<10x8x384xbf16, #tpu.memory_space<vmem>>, vector<10x8x128xbf16>
    tpu.vector_store %arg8[%c0_3, %c0_4, %c0_5], %1 {strides = array<i32>} : memref<10x8x384xbf16, #tpu.memory_space<vmem>>, vector<10x8x128xbf16>,
    %c0_6 = arith.constant 0 : index
    %c0_7 = arith.constant 0 : index
    %c1 = arith.constant 1 : index
    %c0_8 = arith.constant 0 : index
    %3 = vector.load %arg2[%c0_6, %c0_7, %c1, %c0_8] : memref<1x10x10x128xbf16, #tpu.memory_space<vmem>>, vector<1x10x8x128xbf16>
    %4 = vector.shape_cast %3 : vector<1x10x8x128xbf16> to vector<10x8x128xbf16>
    %c0_9 = arith.constant 0 : index
    %c0_10 = arith.constant 0 : index
    %c128 = arith.constant 128 : index
    %5 = vector.load %arg8[%c0_9, %c0_10, %c128] : memref<10x8x384xbf16, #tpu.memory_space<vmem>>, vector<10x8x128xbf16>
    tpu.vector_store %arg8[%c0_9, %c0_10, %c128], %4 {strides = array<i32>} : memref<10x8x384xbf16, #tpu.memory_space<vmem>>, vector<10x8x128xbf16>,
    %c0_11 = arith.constant 0 : index
    %c0_12 = arith.constant 0 : index
    %c2 = arith.constant 2 : index
    %c0_13 = arith.constant 0 : index
    %6 = vector.load %arg2[%c0_11, %c0_12, %c2, %c0_13] : memref<1x10x10x128xbf16, #tpu.memory_space<vmem>>, vector<1x10x8x128xbf16>
    %7 = vector.shape_cast %6 : vector<1x10x8x128xbf16> to vector<10x8x128xbf16>
    %c0_14 = arith.constant 0 : index
    %c0_15 = arith.constant 0 : index
    %c256 = arith.constant 256 : index
    %8 = vector.load %arg8[%c0_14, %c0_15, %c256] : memref<10x8x384xbf16, #tpu.memory_space<vmem>>, vector<10x8x128xbf16>
    tpu.vector_store %arg8[%c0_14, %c0_15, %c256], %7 {strides = array<i32>} : memref<10x8x384xbf16, #tpu.memory_space<vmem>>, vector<10x8x128xbf16>,
    %cst = arith.constant 0.000000e+00 : f32
    %9 = vector.broadcast %cst : f32 to vector<64x128xf32>
    %c0_16 = arith.constant 0 : index
    %c0_17 = arith.constant 0 : index
    %c0_18 = arith.constant 0 : index
    %10 = vector.load %arg8[%c0_16, %c0_17, %c0_18] : memref<10x8x384xbf16, #tpu.memory_space<vmem>>, vector<8x8x384xbf16>
    %11 = vector.shape_cast %10 : vector<8x8x384xbf16> to vector<64x384xbf16>
    %c0_19 = arith.constant 0 : index
    %c0_20 = arith.constant 0 : index
    %c0_21 = arith.constant 0 : index
    %12 = vector.load %arg3[%c0_19, %c0_20, %c0_21] : memref<3x384x128xbf16, #tpu.memory_space<vmem>>, vector<1x384x128xbf16>
    %13 = vector.shape_cast %12 : vector<1x384x128xbf16> to vector<384x128xbf16>
    %cst_22 = arith.constant dense<0.000000e+00> : vector<64x128xf32>
    %14 = tpu.matmul %11, %13, %cst_22 {dimension_numbers = #tpu.dot_dimension_numbers<[1], [0], [0], [1], [0, 0, 1, 1], [], []>} : vector<64x384xbf16>, vector<384x128xbf16>, vector<64x128xf32> -> vector<64x128xf32>
    %15 = arith.addf %9, %14 : vector<64x128xf32>
    %c1_23 = arith.constant 1 : index
    %c0_24 = arith.constant 0 : index
    %c0_25 = arith.constant 0 : index
    %16 = vector.load %arg8[%c1_23, %c0_24, %c0_25] : memref<10x8x384xbf16, #tpu.memory_space<vmem>>, vector<8x8x384xbf16>
    %17 = vector.shape_cast %16 : vector<8x8x384xbf16> to vector<64x384xbf16>
    %c1_26 = arith.constant 1 : index
    %c0_27 = arith.constant 0 : index
    %c0_28 = arith.constant 0 : index
    %18 = vector.load %arg3[%c1_26, %c0_27, %c0_28] : memref<3x384x128xbf16, #tpu.memory_space<vmem>>, vector<1x384x128xbf16>
    %19 = vector.shape_cast %18 : vector<1x384x128xbf16> to vector<384x128xbf16>
    %cst_29 = arith.constant dense<0.000000e+00> : vector<64x128xf32>
    %20 = tpu.matmul %17, %19, %cst_29 {dimension_numbers = #tpu.dot_dimension_numbers<[1], [0], [0], [1], [0, 0, 1, 1], [], []>} : vector<64x384xbf16>, vector<384x128xbf16>, vector<64x128xf32> -> vector<64x128xf32>
    %21 = arith.addf %15, %20 : vector<64x128xf32>
    %c2_30 = arith.constant 2 : index
    %c0_31 = arith.constant 0 : index
    %c0_32 = arith.constant 0 : index
    %22 = vector.load %arg8[%c2_30, %c0_31, %c0_32] : memref<10x8x384xbf16, #tpu.memory_space<vmem>>, vector<8x8x384xbf16>
    %23 = vector.shape_cast %22 : vector<8x8x384xbf16> to vector<64x384xbf16>
    %c2_33 = arith.constant 2 : index
    %c0_34 = arith.constant 0 : index
    %c0_35 = arith.constant 0 : index
    %24 = vector.load %arg3[%c2_33, %c0_34, %c0_35] : memref<3x384x128xbf16, #tpu.memory_space<vmem>>, vector<1x384x128xbf16>
    %25 = vector.shape_cast %24 : vector<1x384x128xbf16> to vector<384x128xbf16>
    %cst_36 = arith.constant dense<0.000000e+00> : vector<64x128xf32>
    %26 = tpu.matmul %23, %25, %cst_36 {dimension_numbers = #tpu.dot_dimension_numbers<[1], [0], [0], [1], [0, 0, 1, 1], [], []>} : vector<64x384xbf16>, vector<384x128xbf16>, vector<64x128xf32> -> vector<64x128xf32>
    %27 = arith.addf %21, %26 : vector<64x128xf32>
    %cst_37 = arith.constant dense<0.000000e+00> : vector<128xf32>
    %28 = vector.multi_reduction <add>, %27, %cst_37 [0] : vector<64x128xf32> to vector<128xf32>
    %29 = vector.shape_cast %28 : vector<128xf32> to vector<1x128xf32>
    %30 = arith.mulf %27, %27 : vector<64x128xf32>
    %cst_38 = arith.constant dense<0.000000e+00> : vector<128xf32>
    %31 = vector.multi_reduction <add>, %30, %cst_38 [0] : vector<64x128xf32> to vector<128xf32>
    %32 = vector.shape_cast %31 : vector<128xf32> to vector<1x128xf32>
    %cst_39 = arith.constant 1.562500e-02 : f32
    %33 = vector.broadcast %cst_39 : f32 to vector<1x128xf32>
    %34 = arith.mulf %29, %33 : vector<1x128xf32>
    %cst_40 = arith.constant 1.562500e-02 : f32
    %35 = vector.broadcast %cst_40 : f32 to vector<1x128xf32>
    %36 = arith.mulf %32, %35 : vector<1x128xf32>
    %37 = arith.mulf %34, %34 : vector<1x128xf32>
    %38 = arith.subf %36, %37 : vector<1x128xf32>
    %cst_41 = arith.constant 0.000000e+00 : f32
    %39 = vector.broadcast %cst_41 : f32 to vector<1x128xf32>
    %40 = arith.maximumf %38, %39 : vector<1x128xf32>
    %41 = vector.broadcast %34 : vector<1x128xf32> to vector<64x128xf32>
    %42 = arith.subf %27, %41 : vector<64x128xf32>
    %cst_42 = arith.constant 9.99999974E-6 : f32
    %43 = vector.broadcast %cst_42 : f32 to vector<1x128xf32>
    %44 = arith.addf %40, %43 : vector<1x128xf32>
    %45 = math.rsqrt %44 : vector<1x128xf32>
    %46 = vector.broadcast %45 : vector<1x128xf32> to vector<64x128xf32>
    %47 = arith.mulf %42, %46 : vector<64x128xf32>
    %c0_43 = arith.constant 0 : index
    %c0_44 = arith.constant 0 : index
    %48 = vector.load %arg4[%c0_43, %c0_44] : memref<1x128xf32, #tpu.memory_space<vmem>>, vector<1x128xf32>
    %49 = vector.broadcast %48 : vector<1x128xf32> to vector<64x128xf32>
    %50 = arith.mulf %47, %49 : vector<64x128xf32>
    %c0_45 = arith.constant 0 : index
    %c0_46 = arith.constant 0 : index
    %51 = vector.load %arg5[%c0_45, %c0_46] : memref<1x128xf32, #tpu.memory_space<vmem>>, vector<1x128xf32>
    %52 = vector.broadcast %51 : vector<1x128xf32> to vector<64x128xf32>
    %53 = arith.addf %50, %52 : vector<64x128xf32>
    %c0_47 = arith.constant 0 : index
    %c0_48 = arith.constant 0 : index
    %c0_49 = arith.constant 0 : index
    %c0_50 = arith.constant 0 : index
    %54 = vector.load %arg6[%c0_47, %c0_48, %c0_49, %c0_50] : memref<1x8x8x128xbf16, #tpu.memory_space<vmem>>, vector<1x8x8x128xbf16>
    %55 = vector.shape_cast %54 : vector<1x8x8x128xbf16> to vector<8x8x128xbf16>
    %56 = vector.shape_cast %55 : vector<8x8x128xbf16> to vector<64x128xbf16>
    %57 = arith.extf %56 : vector<64x128xbf16> to vector<64x128xf32>
    %58 = arith.addf %53, %57 : vector<64x128xf32>
    %59 = vector.shape_cast %58 : vector<64x128xf32> to vector<8x8x128xf32>
    %60 = arith.truncf %59 : vector<8x8x128xf32> to vector<8x8x128xbf16>
    %c0_51 = arith.constant 0 : index
    %c0_52 = arith.constant 0 : index
    %c0_53 = arith.constant 0 : index
    %c0_54 = arith.constant 0 : index
    %61 = vector.load %arg7[%c0_51, %c0_52, %c0_53, %c0_54] : memref<1x8x8x128xbf16, #tpu.memory_space<vmem>>, vector<1x8x8x128xbf16>
    %62 = vector.shape_cast %61 : vector<1x8x8x128xbf16> to vector<8x8x128xbf16>
    %63 = vector.shape_cast %60 : vector<8x8x128xbf16> to vector<1x8x8x128xbf16>
    tpu.vector_store %arg7[%c0_51, %c0_52, %c0_53, %c0_54], %63 {strides = array<i32>} : memref<1x8x8x128xbf16, #tpu.memory_space<vmem>>, vector<1x8x8x128xbf16>,
    return
  }
  func.func @transform_0(%arg0: i32, %arg1: i32) -> (i32, i32, i32, i32) {
    %c0_i32 = arith.constant 0 : i32
    %c0_i32_0 = arith.constant 0 : i32
    %c0_i32_1 = arith.constant 0 : i32
    %c0_i32_2 = arith.constant 0 : i32
    return %arg0, %c0_i32, %c0_i32_0, %c0_i32_1 : i32, i32, i32, i32
  }
  func.func @transform_1(%arg0: i32, %arg1: i32) -> (i32, i32, i32) {
    %c0_i32 = arith.constant 0 : i32
    %c0_i32_0 = arith.constant 0 : i32
    %c0_i32_1 = arith.constant 0 : i32
    return %c0_i32, %c0_i32_0, %arg1 : i32, i32, i32
  }
  func.func @transform_2(%arg0: i32, %arg1: i32) -> (i32, i32) {
    %c0_i32 = arith.constant 0 : i32
    %c0_i32_0 = arith.constant 0 : i32
    return %c0_i32, %arg1 : i32, i32
  }
  func.func @transform_3(%arg0: i32, %arg1: i32) -> (i32, i32) {
    %c0_i32 = arith.constant 0 : i32
    %c0_i32_0 = arith.constant 0 : i32
    return %c0_i32, %arg1 : i32, i32
  }
  func.func @transform_4(%arg0: i32, %arg1: i32) -> (i32, i32, i32, i32) {
    %c0_i32 = arith.constant 0 : i32
    %c0_i32_0 = arith.constant 0 : i32
    %c0_i32_1 = arith.constant 0 : i32
    return %arg0, %c0_i32, %c0_i32_0, %arg1 : i32, i32, i32, i32
  }
  func.func @transform_5(%arg0: i32, %arg1: i32) -> (i32, i32, i32, i32) {
    %c0_i32 = arith.constant 0 : i32
    %c0_i32_0 = arith.constant 0 : i32
    %c0_i32_1 = arith.constant 0 : i32
    return %arg0, %c0_i32, %c0_i32_0, %arg1 : i32, i32, i32, i32
  }
}

</mosaic_0001>

<llo_original>
// kernel: basic_block_ins_forward.4
$region0: #{basic_block_ins_forward.4}
  #allocation0 [shape = 'u32[]', space=smem, size = 0x4, offset = 0x4, fixed_abs, tag = 'smem constant byte address 0x4 - core index']
  #allocation1 [shape = 'u32[144,128]{1,0:T(1,128)}', space=vmem, size = 0x12000, scoped, tag = 'internal scratch']
  %s0 = inlined_call_operand.vmem [shape: bf16[2,9,9,512], index: 0, kind: input, shape index: {}]
  %s1 = inlined_call_operand.vmem [shape: bf16[128,128], index: 1, kind: input, shape index: {}]
  %s2 = inlined_call_operand.vmem [shape: f32[1,128], index: 2, kind: input, shape index: {}]
  %s3 = inlined_call_operand.vmem [shape: f32[1,128], index: 3, kind: input, shape index: {}]
  %s4 = inlined_call_operand.vmem [shape: bf16[2,8,8,128], index: 4, kind: output, shape index: {}]
  %s5 = sld [smem:[#allocation0]]
  $region49: #{basic_block_ins_forward.4} parent=0
    _
  %s7 = ssub.s32 1, %s5
  %s8 = scalar_select 0, %s7, %s5
  loop: start=0, step=1, limit=4
  $region2: #{basic_block_ins_forward.4} parent=0 // loop_pre_header
    _
  $region3: #{basic_block_ins_forward.4} parent=0 // loop_header
    %s10 = sphi 0, %s14
    %p11 = scmp.ge.s32.totalorder %s10, 4
    %s17 = sphi 0, %s29
    %s18 = sphi 0, %s25
    %s19 = sphi 0, %s17
    %s20 = sphi 0, %s18
    %s21 = sphi 0, %s19
    %s22 = sphi 0, %s20
    %s32 = sphi 0, %s34
    %s35 = sphi 0, %s32
    %s36 = sphi 0, %s35
    %s52 = sphi 0, %s36
    %s58 = sphi 0, %s60
    %s61 = sphi 0, %s58
    %s62 = sphi 0, %s61
    %s78 = sphi 0, %s62
    %s84 = sphi 0, %s86
    %s87 = sphi 0, %s84
    %s88 = sphi 0, %s87
    %s104 = sphi 0, %s88
    %s110 = sphi 0, %s112
    %s113 = sphi 0, %s110
    %s114 = sphi 0, %s113
    %s130 = sphi 0, %s114
    %s138 = sphi 0, %s140
    %s141 = sphi 0, %s138
    %s142 = sphi 0, %s141
    %s158 = sphi 0, %s142
  $region4: #{basic_block_ins_forward.4} parent=0 // loop_header_branch
    %13 = sbr.rel (%p11) target = $region8
  $region5: #{basic_block_ins_forward.4} parent=0 // loop_body
    %s15 = ssub.s32 %s10, 1
    %s16 = ssub.s32 %s10, 2
    %s23 = sadd.s32 1, %s18
    %p24 = scmp.ge.s32.totalorder %s23, 1
    %s25 = scalar_select %p24, 0, %s23
    %s26 = sadd.s32 1, %s17
    %s27 = scalar_select %p24, %s26, %s17
    %p28 = scmp.ge.s32.totalorder %s27, 2
    %s29 = scalar_select %p28, 0, %s27
    %s30 = ssub.s32 %s17, %s29
    %p31 = scmp.eq.s32.totalorder %s30, 0
    %s33 = sadd.s32 %s32, 1
    %s34 = scalar_select %p31, %s32, %s33
    %p37 = pneg %p31
    %p38 = scmp.eq.s32.totalorder %s10, 1
    %p39 = por %p37, %p38
    %p40 = scmp.ne.s32.totalorder %s32, %s35
    %p41 = scmp.eq.s32.totalorder %s10, 0
    %p42 = por %p40, %p41
    %p43 = scmp.ne.s32.totalorder %s32, %s35
    %p44 = scmp.eq.s32.totalorder %s15, 1
    %p45 = por %p43, %p44
    %p46 = scmp.ne.s32.totalorder %s35, %s36
    %p47 = scmp.eq.s32.totalorder %s15, 0
    %p48 = por %p46, %p47
    %p49 = scmp.ne.s32.totalorder %s35, %s36
    %p50 = scmp.eq.s32.totalorder %s16, 1
    %p51 = por %p49, %p50
    %p53 = scmp.ne.s32.totalorder %s36, %s52
    %p54 = scmp.eq.s32.totalorder %s16, 0
    %p55 = por %p53, %p54
    %s56 = ssub.s32 %s18, %s25
    %p57 = scmp.eq.s32.totalorder %s56, 0
    %s59 = sadd.s32 %s58, 1
    %s60 = scalar_select %p57, %s58, %s59
    %p63 = pneg %p57
    %p64 = scmp.eq.s32.totalorder %s10, 1
    %p65 = por %p63, %p64
    %p66 = scmp.ne.s32.totalorder %s58, %s61
    %p67 = scmp.eq.s32.totalorder %s10, 0
    %p68 = por %p66, %p67
    %p69 = scmp.ne.s32.totalorder %s58, %s61
    %p70 = scmp.eq.s32.totalorder %s15, 1
    %p71 = por %p69, %p70
    %p72 = scmp.ne.s32.totalorder %s61, %s62
    %p73 = scmp.eq.s32.totalorder %s15, 0
    %p74 = por %p72, %p73
    %p75 = scmp.ne.s32.totalorder %s61, %s62
    %p76 = scmp.eq.s32.totalorder %s16, 1
    %p77 = por %p75, %p76
    %p79 = scmp.ne.s32.totalorder %s62, %s78
    %p80 = scmp.eq.s32.totalorder %s16, 0
    %p81 = por %p79, %p80
    %s82 = ssub.s32 %s18, %s25
    %p83 = scmp.eq.s32.totalorder %s82, 0
    %s85 = sadd.s32 %s84, 1
    %s86 = scalar_select %p83, %s84, %s85
    %p89 = pneg %p83
    %p90 = scmp.eq.s32.totalorder %s10, 1
    %p91 = por %p89, %p90
    %p92 = scmp.ne.s32.totalorder %s84, %s87
    %p93 = scmp.eq.s32.totalorder %s10, 0
    %p94 = por %p92, %p93
    %p95 = scmp.ne.s32.totalorder %s84, %s87
    %p96 = scmp.eq.s32.totalorder %s15, 1
    %p97 = por %p95, %p96
    %p98 = scmp.ne.s32.totalorder %s87, %s88
    %p99 = scmp.eq.s32.totalorder %s15, 0
    %p100 = por %p98, %p99
    %p101 = scmp.ne.s32.totalorder %s87, %s88
    %p102 = scmp.eq.s32.totalorder %s16, 1
    %p103 = por %p101, %p102
    %p105 = scmp.ne.s32.totalorder %s88, %s104
    %p106 = scmp.eq.s32.totalorder %s16, 0
    %p107 = por %p105, %p106
    %s108 = ssub.s32 %s18, %s25
    %p109 = scmp.eq.s32.totalorder %s108, 0
    %s111 = sadd.s32 %s110, 1
    %s112 = scalar_select %p109, %s110, %s111
    %p115 = pneg %p109
    %p116 = scmp.eq.s32.totalorder %s10, 1
    %p117 = por %p115, %p116
    %p118 = scmp.ne.s32.totalorder %s110, %s113
    %p119 = scmp.eq.s32.totalorder %s10, 0
    %p120 = por %p118, %p119
    %p121 = scmp.ne.s32.totalorder %s110, %s113
    %p122 = scmp.eq.s32.totalorder %s15, 1
    %p123 = por %p121, %p122
    %p124 = scmp.ne.s32.totalorder %s113, %s114
    %p125 = scmp.eq.s32.totalorder %s15, 0
    %p126 = por %p124, %p125
    %p127 = scmp.ne.s32.totalorder %s113, %s114
    %p128 = scmp.eq.s32.totalorder %s16, 1
    %p129 = por %p127, %p128
    %p131 = scmp.ne.s32.totalorder %s114, %s130
    %p132 = scmp.eq.s32.totalorder %s16, 0
    %p133 = por %p131, %p132
    %s134 = ssub.s32 %s17, %s29
    %s135 = ssub.s32 %s18, %s25
    %s136 = sor.u32 %s134, %s135
    %p137 = scmp.eq.s32.totalorder %s136, 0
    %s139 = sadd.s32 %s138, 1
    %s140 = scalar_select %p137, %s138, %s139
    %p143 = pneg %p137
    %p144 = scmp.eq.s32.totalorder %s10, 1
    %p145 = por %p143, %p144
    %p146 = scmp.ne.s32.totalorder %s138, %s141
    %p147 = scmp.eq.s32.totalorder %s10, 0
    %p148 = por %p146, %p147
    %p149 = scmp.ne.s32.totalorder %s138, %s141
    %p150 = scmp.eq.s32.totalorder %s15, 1
    %p151 = por %p149, %p150
    %p152 = scmp.ne.s32.totalorder %s141, %s142
    %p153 = scmp.eq.s32.totalorder %s15, 0
    %p154 = por %p152, %p153
    %p155 = scmp.ne.s32.totalorder %s141, %s142
    %p156 = scmp.eq.s32.totalorder %s16, 1
    %p157 = por %p155, %p156
    %p159 = scmp.ne.s32.totalorder %s142, %s158
    %p160 = scmp.eq.s32.totalorder %s16, 0
    %p161 = por %p159, %p160
    %p162 = scmp.le.s32.totalorder 1, %s10
    %p163 = scmp.lt.s32.totalorder %s10, 3
    %p164 = pnand %p162, %p163
    %p165 = pneg %p164
    // Predicated region
    $region9: #{basic_block_ins_forward.4} parent=5 // pred_check
      _
    $region10: #{basic_block_ins_forward.4} parent=5 // pred_check_branch
      %167 = sbr.rel (%p164) target = $region12
    $region11: #{basic_block_ins_forward.4} parent=5 // pred_region
      %s168 = ssub.s32 %s10, 1
      // Predicated region
      $region13: #{basic_block_ins_forward.4} parent=11 // pred_check
        %p169 = pneg %p74
      $region14: #{basic_block_ins_forward.4} parent=11 // pred_check_branch
        %171 = sbr.rel (%p169) target = $region16
      $region15: #{basic_block_ins_forward.4} parent=11 // pred_region
        %p172 = scmp.lt.s32.totalorder %s20, 0
        %s173 = scalar_select %p172, %s20, 0
        %s174 = smul.addr %s173, 4
        %s175 = scalar_lea.vmem %s1, %s174
      $region16: #{basic_block_ins_forward.4} parent=11 // pred_fallthru
        _
      // Predicated region
      $region17: #{basic_block_ins_forward.4} parent=11 // pred_check
        %p176 = pneg %p100
      $region18: #{basic_block_ins_forward.4} parent=11 // pred_check_branch
        %178 = sbr.rel (%p176) target = $region20
      $region19: #{basic_block_ins_forward.4} parent=11 // pred_region
        %p179 = scmp.lt.s32.totalorder %s20, 0
        %s180 = scalar_select %p179, %s20, 0
        %s181 = scalar_lea.vmem %s2, %s180
      $region20: #{basic_block_ins_forward.4} parent=11 // pred_fallthru
        _
      // Predicated region
      $region21: #{basic_block_ins_forward.4} parent=11 // pred_check
        %p182 = pneg %p126
      $region22: #{basic_block_ins_forward.4} parent=11 // pred_check_branch
        %184 = sbr.rel (%p182) target = $region24
      $region23: #{basic_block_ins_forward.4} parent=11 // pred_region
        %p185 = scmp.lt.s32.totalorder %s20, 0
        %s186 = scalar_select %p185, %s20, 0
        %s187 = scalar_lea.vmem %s3, %s186
      $region24: #{basic_block_ins_forward.4} parent=11 // pred_fallthru
        _
    $region12: #{basic_block_ins_forward.4} parent=5 // pred_fallthru
      _
    %p188 = scmp.lt.s32.totalorder %s10, 2
    // Predicated region
    $region25: #{basic_block_ins_forward.4} parent=5 // pred_check
      %p189 = pneg %p188
    $region26: #{basic_block_ins_forward.4} parent=5 // pred_check_branch
      %191 = sbr.rel (%p189) target = $region28
    $region27: #{basic_block_ins_forward.4} parent=5 // pred_region
      // Predicated region
      $region29: #{basic_block_ins_forward.4} parent=27 // pred_check
        %p192 = pneg %p42
      $region30: #{basic_block_ins_forward.4} parent=27 // pred_check_branch
        %194 = sbr.rel (%p192) target = $region32
      $region31: #{basic_block_ins_forward.4} parent=27 // pred_region
        %p195 = scmp.lt.s32.totalorder %s17, 1
        %s196 = scalar_select %p195, %s17, 1
        %s197 = smul.addr %s196, 72
        %s198 = smul.addr %s197, 4
        %s199 = scalar_lea.vmem %s0, %s198
      $region32: #{basic_block_ins_forward.4} parent=27 // pred_fallthru
        _
    $region28: #{basic_block_ins_forward.4} parent=5 // pred_fallthru
      _
    %p200 = scmp.le.s32.totalorder 1, %s10
    %p201 = scmp.lt.s32.totalorder %s10, 3
    %p202 = pnand %p200, %p201
    %p203 = pneg %p202
    // Predicated region
    $region33: #{basic_block_ins_forward.4} parent=5 // pred_check
      _
    $region34: #{basic_block_ins_forward.4} parent=5 // pred_check_branch
      %205 = sbr.rel (%p202) target = $region36
    $region35: #{basic_block_ins_forward.4} parent=5 // pred_region
      %s206 = ssub.s32 %s10, 1
      %p207 = scmp.lt.s32.totalorder %s19, 1
      %s208 = scalar_select %p207, %s19, 1
      %s209 = smul.addr %s208, 72
      %s210 = smul.addr %s209, 4
      %s211 = scalar_lea.vmem %s0, %s210
      %p212 = pneg %p48
      %p213 = pneg %p45
      %p214 = scmp.lt.s32.totalorder %s20, 0
      %s215 = scalar_select %p214, %s20, 0
      %s216 = smul.addr %s215, 4
      %s217 = scalar_lea.vmem %s1, %s216
      %p218 = pneg %p74
      %p219 = pneg %p71
      %p220 = scmp.lt.s32.totalorder %s20, 0
      %s221 = scalar_select %p220, %s20, 0
      %s222 = scalar_lea.vmem %s2, %s221
      %p223 = pneg %p100
      %p224 = pneg %p97
      %p225 = scmp.lt.s32.totalorder %s20, 0
      %s226 = scalar_select %p225, %s20, 0
      %s227 = scalar_lea.vmem %s3, %s226
      %p228 = pneg %p126
      %p229 = pneg %p123
      %p230 = pneg %p154
      %p231 = pneg %p151
      %p232 = scmp.lt.s32.totalorder %s19, 1
      %s233 = scalar_select %p232, %s19, 1
      %p234 = scmp.lt.s32.totalorder %s20, 0
      %s235 = scalar_select %p234, %s20, 0
      %s236 = smul.addr %s233, 8
      %s237 = sadd.s32 %s235, %s236
      %s238 = smul.addr %s237, 4
      %s239 = scalar_lea.vmem %s4, %s238
      %p240 = scmp.lt.s32.totalorder %s19, 1
      %s241 = scalar_select %p240, %s19, 1
      %s242 = smul.addr %s241, 72
      %s243 = smul.addr %s242, 4
      %s244 = scalar_lea.vmem %s0, %s243
      %p245 = scmp.lt.s32.totalorder %s20, 0
      %s246 = scalar_select %p245, %s20, 0
      %s247 = smul.addr %s246, 4
      %s248 = scalar_lea.vmem %s1, %s247
      %p249 = scmp.lt.s32.totalorder %s20, 0
      %s250 = scalar_select %p249, %s20, 0
      %s251 = scalar_lea.vmem %s2, %s250
      %p252 = scmp.lt.s32.totalorder %s20, 0
      %s253 = scalar_select %p252, %s20, 0
      %s254 = scalar_lea.vmem %s3, %s253
      %p255 = scmp.lt.s32.totalorder %s19, 1
      %s256 = scalar_select %p255, %s19, 1
      %p257 = scmp.lt.s32.totalorder %s20, 0
      %s258 = scalar_select %p257, %s20, 0
      %s259 = smul.addr %s256, 8
      %s260 = sadd.s32 %s258, %s259
      %s261 = smul.addr %s260, 4
      %s262 = scalar_lea.vmem %s4, %s261
      %v264 = vld [vmem:[%s244 + $0xc] sm:$0xf]
      %v265 = vld [vmem:[%s244 + $0x2c] sm:$0xf]
      %v266 = vld [vmem:[%s244 + $0x4c] sm:$0xf]
      %v267 = vld [vmem:[%s244 + $0x6c] sm:$0xf]
      %v268 = vld [vmem:[%s244 + $0x8c] sm:$0xf]
      %v269 = vld [vmem:[%s244 + $0xac] sm:$0xf]
      %v270 = vld [vmem:[%s244 + $0xcc] sm:$0xf]
      %v271 = vld [vmem:[%s244 + $0xec] sm:$0xf]
      %v272 = vld [vmem:[%s248] sm:$0xf]
      %v273 = vld [vmem:[%s248 + $0x4] sm:$0xf]
      %v274 = vld [vmem:[%s248 + $0x8] sm:$0xf]
      %v275 = vld [vmem:[%s248 + $0xc] sm:$0xf]
      %v276 = vld [vmem:[%s248 + $0x10] sm:$0xf]
      %v277 = vld [vmem:[%s248 + $0x14] sm:$0xf]
      %v278 = vld [vmem:[%s248 + $0x18] sm:$0xf]
      %v279 = vld [vmem:[%s248 + $0x1c] sm:$0xf]
      %v280 = vld [vmem:[%s248 + $0x20] sm:$0xf]
      %v281 = vld [vmem:[%s248 + $0x24] sm:$0xf]
      %v282 = vld [vmem:[%s248 + $0x28] sm:$0xf]
      %v283 = vld [vmem:[%s248 + $0x2c] sm:$0xf]
      %v284 = vld [vmem:[%s248 + $0x30] sm:$0xf]
      %v285 = vld [vmem:[%s248 + $0x34] sm:$0xf]
      %v286 = vld [vmem:[%s248 + $0x38] sm:$0xf]
      %v287 = vld [vmem:[%s248 + $0x3c] sm:$0xf]
      %v296 = vunpack.c.l.b16 %v264
      %v297 = vunpack.c.l.b16 %v265
      %v298 = vunpack.c.l.b16 %v266
      %v299 = vunpack.c.l.b16 %v267
      %v300 = vunpack.c.l.b16 %v268
      %v301 = vunpack.c.l.b16 %v269
      %v302 = vunpack.c.l.b16 %v270
      %v303 = vunpack.c.l.b16 %v271
      %v304 = vpack.c.b16 %v297, %v296
      %v305 = vpack.c.b16 %v299, %v298
      %v306 = vpack.c.b16 %v301, %v300
      %v307 = vpack.c.b16 %v303, %v302
      %v328 = vunpack.c.l.b16 %v272
      %v329 = vunpack.c.l.b16 %v273
      %v330 = vunpack.c.l.b16 %v274
      %v331 = vunpack.c.l.b16 %v275
      %v332 = vunpack.c.l.b16 %v276
      %v333 = vunpack.c.l.b16 %v277
      %v334 = vunpack.c.l.b16 %v278
      %v335 = vunpack.c.l.b16 %v279
      %v336 = vunpack.c.l.b16 %v280
      %v337 = vunpack.c.l.b16 %v281
      %v338 = vunpack.c.l.b16 %v282
      %v339 = vunpack.c.l.b16 %v283
      %v340 = vunpack.c.l.b16 %v284
      %v341 = vunpack.c.l.b16 %v285
      %v342 = vunpack.c.l.b16 %v286
      %v343 = vunpack.c.l.b16 %v287
      %v344 = vpack.c.b16 %v329, %v328
      %v345 = vpack.c.b16 %v331, %v330
      %v346 = vpack.c.b16 %v333, %v332
      %v347 = vpack.c.b16 %v335, %v334
      %v348 = vpack.c.b16 %v337, %v336
      %v349 = vpack.c.b16 %v339, %v338
      %v350 = vpack.c.b16 %v341, %v340
      %v351 = vpack.c.b16 %v343, %v342
      %360 = vmatprep.subr.bf16.mxu0 0
      %361 = vmatpush1.bf16.msra.mxu0 %v344
      %362 = vmatprep.subr.bf16.mxu0 0
      %363 = vmatpush1.bf16.msra.mxu0 %v345
      %364 = vmatprep.subr.bf16.mxu0 0
      %365 = vmatpush1.bf16.msra.mxu0 %v346
      %366 = vmatprep.subr.bf16.mxu0 0
      %367 = vmatpush1.bf16.msra.mxu0 %v347
      %368 = vmatprep.subr.bf16.mxu0 0
      %369 = vmatpush1.bf16.msra.mxu0 %v348
      %370 = vmatprep.subr.bf16.mxu0 0
      %371 = vmatpush1.bf16.msra.mxu0 %v349
      %372 = vmatprep.subr.bf16.mxu0 0
      %373 = vmatpush1.bf16.msra.mxu0 %v350
      %374 = vmatprep.subr.bf16.mxu0 0
      %375 = vmatpush1.bf16.msra.mxu0 %v351
      %376 = vmatprep.subr.bf16.mxu0 0
      %377 = vmatpush1.bf16.msra.mxu0 0
      %378 = vmatprep.subr.bf16.mxu0 0
      %379 = vmatpush1.bf16.msra.mxu0 0
      %380 = vmatprep.subr.bf16.mxu0 0
      %381 = vmatpush1.bf16.msra.mxu0 0
      %382 = vmatprep.subr.bf16.mxu0 0
      %383 = vmatpush1.bf16.msra.mxu0 0
      %384 = vmatprep.subr.bf16.mxu0 0
      %385 = vmatpush1.bf16.msra.mxu0 0
      %386 = vmatprep.subr.bf16.mxu0 0
      %387 = vmatpush1.bf16.msra.mxu0 0
      %388 = vmatprep.subr.bf16.mxu0 0
      %389 = vmatpush1.bf16.msra.mxu0 0
      %390 = vmatprep.subr.bf16.mxu0 0
      %391 = vmatpush1.bf16.msra.mxu0 0
      %392 = vmatprep.mubr.bf16.mxu0 0
      %393 = vmatmul.mubr.bf16.gmra.mrb[0].mxu0 %v304
      %v394 = vpop.f32.mrb[0].mxu0
      %v395 = vadd.f32 0.0, %v394
      %v396 = vpop.f32.mrb[0].mxu0
      %v397 = vpop.f32.mrb[0].mxu0
      %v398 = vadd.f32 0.0, %v397
      %v399 = vpop.f32.mrb[0].mxu0
      %400 = vmatprep.mubr.bf16.mxu0 0
      %401 = vmatmul.mubr.bf16.gmra.mrb[0].mxu0 %v305
      %v402 = vpop.f32.mrb[0].mxu0
      %v403 = vadd.f32 0.0, %v402
      %v404 = vpop.f32.mrb[0].mxu0
      %v405 = vpop.f32.mrb[0].mxu0
      %v406 = vadd.f32 0.0, %v405
      %v407 = vpop.f32.mrb[0].mxu0
      %408 = vmatprep.mubr.bf16.mxu0 0
      %409 = vmatmul.mubr.bf16.gmra.mrb[0].mxu0 %v306
      %v410 = vpop.f32.mrb[0].mxu0
      %v411 = vadd.f32 0.0, %v410
      %v412 = vpop.f32.mrb[0].mxu0
      %v413 = vpop.f32.mrb[0].mxu0
      %v414 = vadd.f32 0.0, %v413
      %v415 = vpop.f32.mrb[0].mxu0
      %416 = vmatprep.mubr.bf16.mxu0 0
      %417 = vmatmul.mubr.bf16.gmra.mrb[0].mxu0 %v307
      %v418 = vpop.f32.mrb[0].mxu0
      %v419 = vadd.f32 0.0, %v418
      %v420 = vpop.f32.mrb[0].mxu0
      %v421 = vpop.f32.mrb[0].mxu0
      %v422 = vadd.f32 0.0, %v421
      %v423 = vpop.f32.mrb[0].mxu0
      %424 = vdwg.mxu0
      %v425 = vadd.f32 %v395, %v398
      %v426 = vadd.f32 %v425, %v403
      %v427 = vadd.f32 %v426, %v406
      %v428 = vadd.f32 %v427, %v411
      %v429 = vadd.f32 %v428, %v414
      %v430 = vadd.f32 %v429, %v419
      %v431 = vadd.f32 %v430, %v422
      %v432 = vrot.slane %v431, 4
      %v433 = vadd.f32 %v431, %v432
      %v434 = vrot.slane %v433, 2
      %v435 = vadd.f32 %v433, %v434
      %v436 = vrot.slane %v435, 1
      %v437 = vadd.f32 %v435, %v436
      %v438 = vmul.f32 %v395, %v395
      %v439 = vmul.f32 %v398, %v398
      %v440 = vmul.f32 %v403, %v403
      %v441 = vmul.f32 %v406, %v406
      %v442 = vmul.f32 %v411, %v411
      %v443 = vmul.f32 %v414, %v414
      %v444 = vmul.f32 %v419, %v419
      %v445 = vmul.f32 %v422, %v422
      %v446 = vadd.f32 %v438, %v439
      %v447 = vadd.f32 %v446, %v440
      %v448 = vadd.f32 %v447, %v441
      %v449 = vadd.f32 %v448, %v442
      %v450 = vadd.f32 %v449, %v443
      %v451 = vadd.f32 %v450, %v444
      %v452 = vadd.f32 %v451, %v445
      %v453 = vrot.slane %v452, 4
      %v454 = vadd.f32 %v452, %v453
      %v455 = vrot.slane %v454, 2
      %v456 = vadd.f32 %v454, %v455
      %v457 = vrot.slane %v456, 1
      %v458 = vadd.f32 %v456, %v457
      %v459 = vmul.f32 %v437, 0.015625
      %v460 = vmul.f32 %v458, 0.015625
      %v461 = vmul.f32 %v459, %v459
      %v462 = vsub.f32 %v460, %v461
      %v463 = vmax.f32 %v462, 0.0
      %v464 = vsub.f32 %v395, %v459
      %v465 = vsub.f32 %v398, %v459
      %v466 = vsub.f32 %v403, %v459
      %v467 = vsub.f32 %v406, %v459
      %v468 = vsub.f32 %v411, %v459
      %v469 = vsub.f32 %v414, %v459
      %v470 = vsub.f32 %v419, %v459
      %v471 = vsub.f32 %v422, %v459
      %v472 = vadd.f32 %v463, 1e-05
      %v473 = vrsqrt.pop %v472
      %v474 = vmul.f32 %v464, %v473
      %v475 = vmul.f32 %v465, %v473
      %v476 = vmul.f32 %v466, %v473
      %v477 = vmul.f32 %v467, %v473
      %v478 = vmul.f32 %v468, %v473
      %v479 = vmul.f32 %v469, %v473
      %v480 = vmul.f32 %v470, %v473
      %v481 = vmul.f32 %v471, %v473
      %v482 = vld [vmem:[%s251] sm:$0x1]
      %v484 = vlaneseq
      %v485 = vshrl.u32 %v484, 7
      %v486 = vsub.s32 0, %v485
      %v487 = vrot.slane %v482, %v486
      %v489 = vmul.f32 %v474, %v487
      %v490 = vmul.f32 %v475, %v487
      %v491 = vmul.f32 %v476, %v487
      %v492 = vmul.f32 %v477, %v487
      %v493 = vmul.f32 %v478, %v487
      %v494 = vmul.f32 %v479, %v487
      %v495 = vmul.f32 %v480, %v487
      %v496 = vmul.f32 %v481, %v487
      %v497 = vld [vmem:[%s254] sm:$0x1]
      %v499 = vlaneseq
      %v500 = vshrl.u32 %v499, 7
      %v501 = vsub.s32 0, %v500
      %v502 = vrot.slane %v497, %v501
      %v504 = vadd.f32 %v489, %v502
      %v505 = vadd.f32 %v490, %v502
      %v506 = vadd.f32 %v491, %v502
      %v507 = vadd.f32 %v492, %v502
      %v508 = vadd.f32 %v493, %v502
      %v509 = vadd.f32 %v494, %v502
      %v510 = vadd.f32 %v495, %v502
      %v511 = vadd.f32 %v496, %v502
      %v512 = vpack.c.bf16 %v504, %v504
      %v513 = vpack.c.bf16 %v505, %v505
      %v514 = vpack.c.bf16 %v506, %v506
      %v515 = vpack.c.bf16 %v507, %v507
      %v516 = vpack.c.bf16 %v508, %v508
      %v517 = vpack.c.bf16 %v509, %v509
      %v518 = vpack.c.bf16 %v510, %v510
      %v519 = vpack.c.bf16 %v511, %v511
      %520 = vst [vmem:[%s262] sm:$0xf] %v512
      %521 = vst [vmem:[%s262 + $0x4] sm:$0xf] %v513
      %522 = vst [vmem:[%s262 + $0x8] sm:$0xf] %v514
      %523 = vst [vmem:[%s262 + $0xc] sm:$0xf] %v515
      %524 = vst [vmem:[%s262 + $0x10] sm:$0xf] %v516
      %525 = vst [vmem:[%s262 + $0x14] sm:$0xf] %v517
      %526 = vst [vmem:[%s262 + $0x18] sm:$0xf] %v518
      %527 = vst [vmem:[%s262 + $0x1c] sm:$0xf] %v519
      %p528 = scmp.lt.s32.totalorder %s19, 1
      %s529 = scalar_select %p528, %s19, 1
      %p530 = scmp.lt.s32.totalorder %s20, 0
      %s531 = scalar_select %p530, %s20, 0
      %s532 = smul.addr %s529, 8
      %s533 = sadd.s32 %s531, %s532
      %s534 = smul.addr %s533, 4
      %s535 = scalar_lea.vmem %s4, %s534
      // Predicated region
      $region37: #{basic_block_ins_forward.4} parent=35 // pred_check
        %p536 = pneg %p151
      $region38: #{basic_block_ins_forward.4} parent=35 // pred_check_branch
        %538 = sbr.rel (%p536) target = $region40
      $region39: #{basic_block_ins_forward.4} parent=35 // pred_region
        _
      $region40: #{basic_block_ins_forward.4} parent=35 // pred_fallthru
        _
    $region36: #{basic_block_ins_forward.4} parent=5 // pred_fallthru
      _
    %p539 = scmp.le.s32.totalorder 2, %s10
    // Predicated region
    $region41: #{basic_block_ins_forward.4} parent=5 // pred_check
      %p540 = pneg %p539
    $region42: #{basic_block_ins_forward.4} parent=5 // pred_check_branch
      %542 = sbr.rel (%p540) target = $region44
    $region43: #{basic_block_ins_forward.4} parent=5 // pred_region
      %s543 = ssub.s32 %s10, 2
      // Predicated region
      $region45: #{basic_block_ins_forward.4} parent=43 // pred_check
        %p544 = pneg %p157
      $region46: #{basic_block_ins_forward.4} parent=43 // pred_check_branch
        %546 = sbr.rel (%p544) target = $region48
      $region47: #{basic_block_ins_forward.4} parent=43 // pred_region
        %p547 = scmp.lt.s32.totalorder %s21, 1
        %s548 = scalar_select %p547, %s21, 1
        %p549 = scmp.lt.s32.totalorder %s22, 0
        %s550 = scalar_select %p549, %s22, 0
        %s551 = smul.addr %s548, 8
        %s552 = sadd.s32 %s550, %s551
        %s553 = smul.addr %s552, 4
        %s554 = scalar_lea.vmem %s4, %s553
      $region48: #{basic_block_ins_forward.4} parent=43 // pred_fallthru
        _
    $region44: #{basic_block_ins_forward.4} parent=5 // pred_fallthru
      _
  $region6: #{basic_block_ins_forward.4} parent=0 // loop_footer
    %s14 = sadd.s32 1, %s10
  $region7: #{basic_block_ins_forward.4} parent=0 // loop_footer_branch
    %9 = sbr.rel target = $region3
  $region8: #{basic_block_ins_forward.4} parent=0 // loop_exit
    _

// kernel: basic_block_ins_forward.3
$region0: #{basic_block_ins_forward.3}
  #allocation0 [shape = 'u32[]', space=smem, size = 0x4, offset = 0x4, fixed_abs, tag = 'smem constant byte address 0x4 - core index']
  #allocation1 [shape = 'u32[144,128]{1,0:T(1,128)}', space=vmem, size = 0x12000, scoped, tag = 'internal scratch']
  %s0 = inlined_call_operand.vmem [shape: bf16[2,9,9,512], index: 0, kind: input, shape index: {}]
  %s1 = inlined_call_operand.vmem [shape: bf16[1152,128], index: 1, kind: input, shape index: {}]
  %s2 = inlined_call_operand.vmem [shape: f32[1,128], index: 2, kind: input, shape index: {}]
  %s3 = inlined_call_operand.vmem [shape: f32[1,128], index: 3, kind: input, shape index: {}]
  %s4 = inlined_call_operand.vmem [shape: bf16[2,10,10,128], index: 4, kind: output, shape index: {}]
  %s5 = sld [smem:[#allocation0]]
  $region49: #{basic_block_ins_forward.3} parent=0
    _
  %s7 = ssub.s32 1, %s5
  %s8 = scalar_select 0, %s7, %s5
  loop: start=0, step=1, limit=4
  $region2: #{basic_block_ins_forward.3} parent=0 // loop_pre_header
    _
  $region3: #{basic_block_ins_forward.3} parent=0 // loop_header
    %s10 = sphi 0, %s14
    %p11 = scmp.ge.s32.totalorder %s10, 4
    %s17 = sphi 0, %s29
    %s18 = sphi 0, %s25
    %s19 = sphi 0, %s17
    %s20 = sphi 0, %s18
    %s21 = sphi 0, %s19
    %s22 = sphi 0, %s20
    %s32 = sphi 0, %s34
    %s35 = sphi 0, %s32
    %s36 = sphi 0, %s35
    %s52 = sphi 0, %s36
    %s58 = sphi 0, %s60
    %s61 = sphi 0, %s58
    %s62 = sphi 0, %s61
    %s78 = sphi 0, %s62
    %s84 = sphi 0, %s86
    %s87 = sphi 0, %s84
    %s88 = sphi 0, %s87
    %s104 = sphi 0, %s88
    %s110 = sphi 0, %s112
    %s113 = sphi 0, %s110
    %s114 = sphi 0, %s113
    %s130 = sphi 0, %s114
    %s138 = sphi 0, %s140
    %s141 = sphi 0, %s138
    %s142 = sphi 0, %s141
    %s158 = sphi 0, %s142
  $region4: #{basic_block_ins_forward.3} parent=0 // loop_header_branch
    %13 = sbr.rel (%p11) target = $region8
  $region5: #{basic_block_ins_forward.3} parent=0 // loop_body
    %s15 = ssub.s32 %s10, 1
    %s16 = ssub.s32 %s10, 2
    %s23 = sadd.s32 1, %s18
    %p24 = scmp.ge.s32.totalorder %s23, 1
    %s25 = scalar_select %p24, 0, %s23
    %s26 = sadd.s32 1, %s17
    %s27 = scalar_select %p24, %s26, %s17
    %p28 = scmp.ge.s32.totalorder %s27, 2
    %s29 = scalar_select %p28, 0, %s27
    %s30 = ssub.s32 %s17, %s29
    %p31 = scmp.eq.s32.totalorder %s30, 0
    %s33 = sadd.s32 %s32, 1
    %s34 = scalar_select %p31, %s32, %s33
    %p37 = pneg %p31
    %p38 = scmp.eq.s32.totalorder %s10, 1
    %p39 = por %p37, %p38
    %p40 = scmp.ne.s32.totalorder %s32, %s35
    %p41 = scmp.eq.s32.totalorder %s10, 0
    %p42 = por %p40, %p41
    %p43 = scmp.ne.s32.totalorder %s32, %s35
    %p44 = scmp.eq.s32.totalorder %s15, 1
    %p45 = por %p43, %p44
    %p46 = scmp.ne.s32.totalorder %s35, %s36
    %p47 = scmp.eq.s32.totalorder %s15, 0
    %p48 = por %p46, %p47
    %p49 = scmp.ne.s32.totalorder %s35, %s36
    %p50 = scmp.eq.s32.totalorder %s16, 1
    %p51 = por %p49, %p50
    %p53 = scmp.ne.s32.totalorder %s36, %s52
    %p54 = scmp.eq.s32.totalorder %s16, 0
    %p55 = por %p53, %p54
    %s56 = ssub.s32 %s18, %s25
    %p57 = scmp.eq.s32.totalorder %s56, 0
    %s59 = sadd.s32 %s58, 1
    %s60 = scalar_select %p57, %s58, %s59
    %p63 = pneg %p57
    %p64 = scmp.eq.s32.totalorder %s10, 1
    %p65 = por %p63, %p64
    %p66 = scmp.ne.s32.totalorder %s58, %s61
    %p67 = scmp.eq.s32.totalorder %s10, 0
    %p68 = por %p66, %p67
    %p69 = scmp.ne.s32.totalorder %s58, %s61
    %p70 = scmp.eq.s32.totalorder %s15, 1
    %p71 = por %p69, %p70
    %p72 = scmp.ne.s32.totalorder %s61, %s62
    %p73 = scmp.eq.s32.totalorder %s15, 0
    %p74 = por %p72, %p73
    %p75 = scmp.ne.s32.totalorder %s61, %s62
    %p76 = scmp.eq.s32.totalorder %s16, 1
    %p77 = por %p75, %p76
    %p79 = scmp.ne.s32.totalorder %s62, %s78
    %p80 = scmp.eq.s32.totalorder %s16, 0
    %p81 = por %p79, %p80
    %s82 = ssub.s32 %s18, %s25
    %p83 = scmp.eq.s32.totalorder %s82, 0
    %s85 = sadd.s32 %s84, 1
    %s86 = scalar_select %p83, %s84, %s85
    %p89 = pneg %p83
    %p90 = scmp.eq.s32.totalorder %s10, 1
    %p91 = por %p89, %p90
    %p92 = scmp.ne.s32.totalorder %s84, %s87
    %p93 = scmp.eq.s32.totalorder %s10, 0
    %p94 = por %p92, %p93
    %p95 = scmp.ne.s32.totalorder %s84, %s87
    %p96 = scmp.eq.s32.totalorder %s15, 1
    %p97 = por %p95, %p96
    %p98 = scmp.ne.s32.totalorder %s87, %s88
    %p99 = scmp.eq.s32.totalorder %s15, 0
    %p100 = por %p98, %p99
    %p101 = scmp.ne.s32.totalorder %s87, %s88
    %p102 = scmp.eq.s32.totalorder %s16, 1
    %p103 = por %p101, %p102
    %p105 = scmp.ne.s32.totalorder %s88, %s104
    %p106 = scmp.eq.s32.totalorder %s16, 0
    %p107 = por %p105, %p106
    %s108 = ssub.s32 %s18, %s25
    %p109 = scmp.eq.s32.totalorder %s108, 0
    %s111 = sadd.s32 %s110, 1
    %s112 = scalar_select %p109, %s110, %s111
    %p115 = pneg %p109
    %p116 = scmp.eq.s32.totalorder %s10, 1
    %p117 = por %p115, %p116
    %p118 = scmp.ne.s32.totalorder %s110, %s113
    %p119 = scmp.eq.s32.totalorder %s10, 0
    %p120 = por %p118, %p119
    %p121 = scmp.ne.s32.totalorder %s110, %s113
    %p122 = scmp.eq.s32.totalorder %s15, 1
    %p123 = por %p121, %p122
    %p124 = scmp.ne.s32.totalorder %s113, %s114
    %p125 = scmp.eq.s32.totalorder %s15, 0
    %p126 = por %p124, %p125
    %p127 = scmp.ne.s32.totalorder %s113, %s114
    %p128 = scmp.eq.s32.totalorder %s16, 1
    %p129 = por %p127, %p128
    %p131 = scmp.ne.s32.totalorder %s114, %s130
    %p132 = scmp.eq.s32.totalorder %s16, 0
    %p133 = por %p131, %p132
    %s134 = ssub.s32 %s17, %s29
    %s135 = ssub.s32 %s18, %s25
    %s136 = sor.u32 %s134, %s135
    %p137 = scmp.eq.s32.totalorder %s136, 0
    %s139 = sadd.s32 %s138, 1
    %s140 = scalar_select %p137, %s138, %s139
    %p143 = pneg %p137
    %p144 = scmp.eq.s32.totalorder %s10, 1
    %p145 = por %p143, %p144
    %p146 = scmp.ne.s32.totalorder %s138, %s141
    %p147 = scmp.eq.s32.totalorder %s10, 0
    %p148 = por %p146, %p147
    %p149 = scmp.ne.s32.totalorder %s138, %s141
    %p150 = scmp.eq.s32.totalorder %s15, 1
    %p151 = por %p149, %p150
    %p152 = scmp.ne.s32.totalorder %s141, %s142
    %p153 = scmp.eq.s32.totalorder %s15, 0
    %p154 = por %p152, %p153
    %p155 = scmp.ne.s32.totalorder %s141, %s142
    %p156 = scmp.eq.s32.totalorder %s16, 1
    %p157 = por %p155, %p156
    %p159 = scmp.ne.s32.totalorder %s142, %s158
    %p160 = scmp.eq.s32.totalorder %s16, 0
    %p161 = por %p159, %p160
    %p162 = scmp.le.s32.totalorder 1, %s10
    %p163 = scmp.lt.s32.totalorder %s10, 3
    %p164 = pnand %p162, %p163
    %p165 = pneg %p164
    // Predicated region
    $region9: #{basic_block_ins_forward.3} parent=5 // pred_check
      _
    $region10: #{basic_block_ins_forward.3} parent=5 // pred_check_branch
      %167 = sbr.rel (%p164) target = $region12
    $region11: #{basic_block_ins_forward.3} parent=5 // pred_region
      %s168 = ssub.s32 %s10, 1
      // Predicated region
      $region13: #{basic_block_ins_forward.3} parent=11 // pred_check
        %p169 = pneg %p74
      $region14: #{basic_block_ins_forward.3} parent=11 // pred_check_branch
        %171 = sbr.rel (%p169) target = $region16
      $region15: #{basic_block_ins_forward.3} parent=11 // pred_region
        %p172 = scmp.lt.s32.totalorder %s20, 0
        %s173 = scalar_select %p172, %s20, 0
        %s174 = smul.addr %s173, 4
        %s175 = scalar_lea.vmem %s1, %s174
      $region16: #{basic_block_ins_forward.3} parent=11 // pred_fallthru
        _
      // Predicated region
      $region17: #{basic_block_ins_forward.3} parent=11 // pred_check
        %p176 = pneg %p100
      $region18: #{basic_block_ins_forward.3} parent=11 // pred_check_branch
        %178 = sbr.rel (%p176) target = $region20
      $region19: #{basic_block_ins_forward.3} parent=11 // pred_region
        %p179 = scmp.lt.s32.totalorder %s20, 0
        %s180 = scalar_select %p179, %s20, 0
        %s181 = scalar_lea.vmem %s2, %s180
      $region20: #{basic_block_ins_forward.3} parent=11 // pred_fallthru
        _
      // Predicated region
      $region21: #{basic_block_ins_forward.3} parent=11 // pred_check
        %p182 = pneg %p126
      $region22: #{basic_block_ins_forward.3} parent=11 // pred_check_branch
        %184 = sbr.rel (%p182) target = $region24
      $region23: #{basic_block_ins_forward.3} parent=11 // pred_region
        %p185 = scmp.lt.s32.totalorder %s20, 0
        %s186 = scalar_select %p185, %s20, 0
        %s187 = scalar_lea.vmem %s3, %s186
      $region24: #{basic_block_ins_forward.3} parent=11 // pred_fallthru
        _
    $region12: #{basic_block_ins_forward.3} parent=5 // pred_fallthru
      _
    %p188 = scmp.lt.s32.totalorder %s10, 2
    // Predicated region
    $region25: #{basic_block_ins_forward.3} parent=5 // pred_check
      %p189 = pneg %p188
    $region26: #{basic_block_ins_forward.3} parent=5 // pred_check_branch
      %191 = sbr.rel (%p189) target = $region28
    $region27: #{basic_block_ins_forward.3} parent=5 // pred_region
      // Predicated region
      $region29: #{basic_block_ins_forward.3} parent=27 // pred_check
        %p192 = pneg %p42
      $region30: #{basic_block_ins_forward.3} parent=27 // pred_check_branch
        %194 = sbr.rel (%p192) target = $region32
      $region31: #{basic_block_ins_forward.3} parent=27 // pred_region
        %p195 = scmp.lt.s32.totalorder %s17, 1
        %s196 = scalar_select %p195, %s17, 1
        %s197 = smul.addr %s196, 72
        %s198 = smul.addr %s197, 4
        %s199 = scalar_lea.vmem %s0, %s198
      $region32: #{basic_block_ins_forward.3} parent=27 // pred_fallthru
        _
    $region28: #{basic_block_ins_forward.3} parent=5 // pred_fallthru
      _
    %p200 = scmp.le.s32.totalorder 1, %s10
    %p201 = scmp.lt.s32.totalorder %s10, 3
    %p202 = pnand %p200, %p201
    %p203 = pneg %p202
    // Predicated region
    $region33: #{basic_block_ins_forward.3} parent=5 // pred_check
      _
    $region34: #{basic_block_ins_forward.3} parent=5 // pred_check_branch
      %205 = sbr.rel (%p202) target = $region36
    $region35: #{basic_block_ins_forward.3} parent=5 // pred_region
      %s206 = ssub.s32 %s10, 1
      %p207 = scmp.lt.s32.totalorder %s19, 1
      %s208 = scalar_select %p207, %s19, 1
      %s209 = smul.addr %s208, 72
      %s210 = smul.addr %s209, 4
      %s211 = scalar_lea.vmem %s0, %s210
      %p212 = pneg %p48
      %p213 = pneg %p45
      %p214 = scmp.lt.s32.totalorder %s20, 0
      %s215 = scalar_select %p214, %s20, 0
      %s216 = smul.addr %s215, 4
      %s217 = scalar_lea.vmem %s1, %s216
      %p218 = pneg %p74
      %p219 = pneg %p71
      %p220 = scmp.lt.s32.totalorder %s20, 0
      %s221 = scalar_select %p220, %s20, 0
      %s222 = scalar_lea.vmem %s2, %s221
      %p223 = pneg %p100
      %p224 = pneg %p97
      %p225 = scmp.lt.s32.totalorder %s20, 0
      %s226 = scalar_select %p225, %s20, 0
      %s227 = scalar_lea.vmem %s3, %s226
      %p228 = pneg %p126
      %p229 = pneg %p123
      %p230 = pneg %p154
      %p231 = pneg %p151
      %p232 = scmp.lt.s32.totalorder %s19, 1
      %s233 = scalar_select %p232, %s19, 1
      %p234 = scmp.lt.s32.totalorder %s20, 0
      %s235 = scalar_select %p234, %s20, 0
      %s236 = smul.addr %s233, 20
      %s237 = sadd.s32 %s235, %s236
      %s238 = smul.addr %s237, 4
      %s239 = scalar_lea.vmem %s4, %s238
      %p240 = scmp.lt.s32.totalorder %s19, 1
      %s241 = scalar_select %p240, %s19, 1
      %s242 = smul.addr %s241, 72
      %s243 = smul.addr %s242, 4
      %s244 = scalar_lea.vmem %s0, %s243
      %p245 = scmp.lt.s32.totalorder %s20, 0
      %s246 = scalar_select %p245, %s20, 0
      %s247 = smul.addr %s246, 4
      %s248 = scalar_lea.vmem %s1, %s247
      %p249 = scmp.lt.s32.totalorder %s20, 0
      %s250 = scalar_select %p249, %s20, 0
      %s251 = scalar_lea.vmem %s2, %s250
      %p252 = scmp.lt.s32.totalorder %s20, 0
      %s253 = scalar_select %p252, %s20, 0
      %s254 = scalar_lea.vmem %s3, %s253
      %p255 = scmp.lt.s32.totalorder %s19, 1
      %s256 = scalar_select %p255, %s19, 1
      %p257 = scmp.lt.s32.totalorder %s20, 0
      %s258 = scalar_select %p257, %s20, 0
      %s259 = smul.addr %s256, 20
      %s260 = sadd.s32 %s258, %s259
      %s261 = smul.addr %s260, 4
      %s262 = scalar_lea.vmem %s4, %s261
      %v264 = vld [vmem:[%s244] sm:$0xff]
      %v265 = vld [vmem:[%s244 + $0x8] sm:$0xff]
      %v266 = vld [vmem:[%s244 + $0x20] sm:$0xff]
      %v267 = vld [vmem:[%s244 + $0x28] sm:$0xff]
      %v268 = vld [vmem:[%s244 + $0x40] sm:$0xff]
      %v269 = vld [vmem:[%s244 + $0x48] sm:$0xff]
      %v270 = vld [vmem:[%s244 + $0x60] sm:$0xff]
      %v271 = vld [vmem:[%s244 + $0x68] sm:$0xff]
      %v272 = vld [vmem:[%s244 + $0x80] sm:$0xff]
      %v273 = vld [vmem:[%s244 + $0x88] sm:$0xff]
      %v274 = vld [vmem:[%s244 + $0xa0] sm:$0xff]
      %v275 = vld [vmem:[%s244 + $0xa8] sm:$0xff]
      %v276 = vld [vmem:[%s244 + $0xc0] sm:$0xff]
      %v277 = vld [vmem:[%s244 + $0xc8] sm:$0xff]
      %v278 = vld [vmem:[%s244 + $0xe0] sm:$0xff]
      %v279 = vld [vmem:[%s244 + $0xe8] sm:$0xff]
      %v280 = vld [vmem:[%s248] sm:$0xf]
      %v281 = vld [vmem:[%s248 + $0x4] sm:$0xf]
      %v282 = vld [vmem:[%s248 + $0x8] sm:$0xf]
      %v283 = vld [vmem:[%s248 + $0xc] sm:$0xf]
      %v284 = vld [vmem:[%s248 + $0x10] sm:$0xf]
      %v285 = vld [vmem:[%s248 + $0x14] sm:$0xf]
      %v286 = vld [vmem:[%s248 + $0x18] sm:$0xf]
      %v287 = vld [vmem:[%s248 + $0x1c] sm:$0xf]
      %v288 = vld [vmem:[%s248 + $0x20] sm:$0xf]
      %v289 = vld [vmem:[%s248 + $0x24] sm:$0xf]
      %v290 = vld [vmem:[%s248 + $0x28] sm:$0xf]
      %v291 = vld [vmem:[%s248 + $0x2c] sm:$0xf]
      %v292 = vld [vmem:[%s248 + $0x30] sm:$0xf]
      %v293 = vld [vmem:[%s248 + $0x34] sm:$0xf]
      %v294 = vld [vmem:[%s248 + $0x38] sm:$0xf]
      %v295 = vld [vmem:[%s248 + $0x3c] sm:$0xf]
      %v296 = vld [vmem:[%s248 + $0x40] sm:$0xf]
      %v297 = vld [vmem:[%s248 + $0x44] sm:$0xf]
      %v298 = vld [vmem:[%s248 + $0x48] sm:$0xf]
      %v299 = vld [vmem:[%s248 + $0x4c] sm:$0xf]
      %v300 = vld [vmem:[%s248 + $0x50] sm:$0xf]
      %v301 = vld [vmem:[%s248 + $0x54] sm:$0xf]
      %v302 = vld [vmem:[%s248 + $0x58] sm:$0xf]
      %v303 = vld [vmem:[%s248 + $0x5c] sm:$0xf]
      %v304 = vld [vmem:[%s248 + $0x60] sm:$0xf]
      %v305 = vld [vmem:[%s248 + $0x64] sm:$0xf]
      %v306 = vld [vmem:[%s248 + $0x68] sm:$0xf]
      %v307 = vld [vmem:[%s248 + $0x6c] sm:$0xf]
      %v308 = vld [vmem:[%s248 + $0x70] sm:$0xf]
      %v309 = vld [vmem:[%s248 + $0x74] sm:$0xf]
      %v310 = vld [vmem:[%s248 + $0x78] sm:$0xf]
      %v311 = vld [vmem:[%s248 + $0x7c] sm:$0xf]
      %v312 = vld [vmem:[%s248 + $0x80] sm:$0xf]
      %v313 = vld [vmem:[%s248 + $0x84] sm:$0xf]
      %v314 = vld [vmem:[%s248 + $0x88] sm:$0xf]
      %v315 = vld [vmem:[%s248 + $0x8c] sm:$0xf]
      %v316 = vld [vmem:[%s248 + $0x90] sm:$0xf]
      %v317 = vld [vmem:[%s248 + $0x94] sm:$0xf]
      %v318 = vld [vmem:[%s248 + $0x98] sm:$0xf]
      %v319 = vld [vmem:[%s248 + $0x9c] sm:$0xf]
      %v320 = vld [vmem:[%s248 + $0xa0] sm:$0xf]
      %v321 = vld [vmem:[%s248 + $0xa4] sm:$0xf]
      %v322 = vld [vmem:[%s248 + $0xa8] sm:$0xf]
      %v323 = vld [vmem:[%s248 + $0xac] sm:$0xf]
      %v324 = vld [vmem:[%s248 + $0xb0] sm:$0xf]
      %v325 = vld [vmem:[%s248 + $0xb4] sm:$0xf]
      %v326 = vld [vmem:[%s248 + $0xb8] sm:$0xf]
      %v327 = vld [vmem:[%s248 + $0xbc] sm:$0xf]
      %v328 = vld [vmem:[%s248 + $0xc0] sm:$0xf]
      %v329 = vld [vmem:[%s248 + $0xc4] sm:$0xf]
      %v330 = vld [vmem:[%s248 + $0xc8] sm:$0xf]
      %v331 = vld [vmem:[%s248 + $0xcc] sm:$0xf]
      %v332 = vld [vmem:[%s248 + $0xd0] sm:$0xf]
      %v333 = vld [vmem:[%s248 + $0xd4] sm:$0xf]
      %v334 = vld [vmem:[%s248 + $0xd8] sm:$0xf]
      %v335 = vld [vmem:[%s248 + $0xdc] sm:$0xf]
      %v336 = vld [vmem:[%s248 + $0xe0] sm:$0xf]
      %v337 = vld [vmem:[%s248 + $0xe4] sm:$0xf]
      %v338 = vld [vmem:[%s248 + $0xe8] sm:$0xf]
      %v339 = vld [vmem:[%s248 + $0xec] sm:$0xf]
      %v340 = vld [vmem:[%s248 + $0xf0] sm:$0xf]
      %v341 = vld [vmem:[%s248 + $0xf4] sm:$0xf]
      %v342 = vld [vmem:[%s248 + $0xf8] sm:$0xf]
      %v343 = vld [vmem:[%s248 + $0xfc] sm:$0xf]
      %v344 = vld [vmem:[%s244] sm:$0xf]
      %v345 = vld [vmem:[%s244 + $0x10] sm:$0x1]
      %v346 = vld [vmem:[%s244 + $0x20] sm:$0xf]
      %v347 = vld [vmem:[%s244 + $0x30] sm:$0x1]
      %v348 = vld [vmem:[%s244 + $0x40] sm:$0xf]
      %v349 = vld [vmem:[%s244 + $0x50] sm:$0x1]
      %v350 = vld [vmem:[%s244 + $0x60] sm:$0xf]
      %v351 = vld [vmem:[%s244 + $0x70] sm:$0x1]
      %v352 = vld [vmem:[%s244 + $0x80] sm:$0xf]
      %v353 = vld [vmem:[%s244 + $0x90] sm:$0x1]
      %v354 = vld [vmem:[%s244 + $0xa0] sm:$0xf]
      %v355 = vld [vmem:[%s244 + $0xb0] sm:$0x1]
      %v356 = vld [vmem:[%s244 + $0xc0] sm:$0xf]
      %v357 = vld [vmem:[%s244 + $0xd0] sm:$0x1]
      %v358 = vld [vmem:[%s244 + $0xe0] sm:$0xf]
      %v359 = vld [vmem:[%s244 + $0xf0] sm:$0x1]
      %vm360 = vsmask.f32 3328
      %vm361 = vsmask.f32 7440
      %vm362 = vmor %vm360, %vm361
      %v364 = vshrl.u32 %v344, 16
      %v366 = vrot.slane %v364, 4
      %v367 = vshll.u32 %v344, 16
      %v369 = vrot.slane %v367, 5
      %v370 = vor.u32 %v366, %v369
      %v371 = vrot.slane %v370, 4
      %v373 = vshll.u32 %v345, 16
      %v375 = vrot.slane %v373, 5
      %v376 = vsel %vm362, %v371, %v375
      %v378 = vshrl.u32 %v346, 16
      %v380 = vrot.slane %v378, 4
      %v381 = vshll.u32 %v346, 16
      %v383 = vrot.slane %v381, 5
      %v384 = vor.u32 %v380, %v383
      %v385 = vrot.slane %v384, 4
      %v387 = vshll.u32 %v347, 16
      %v389 = vrot.slane %v387, 5
      %v390 = vsel %vm362, %v385, %v389
      %v392 = vshrl.u32 %v348, 16
      %v394 = vrot.slane %v392, 4
      %v395 = vshll.u32 %v348, 16
      %v397 = vrot.slane %v395, 5
      %v398 = vor.u32 %v394, %v397
      %v399 = vrot.slane %v398, 4
      %v401 = vshll.u32 %v349, 16
      %v403 = vrot.slane %v401, 5
      %v404 = vsel %vm362, %v399, %v403
      %v406 = vshrl.u32 %v350, 16
      %v408 = vrot.slane %v406, 4
      %v409 = vshll.u32 %v350, 16
      %v411 = vrot.slane %v409, 5
      %v412 = vor.u32 %v408, %v411
      %v413 = vrot.slane %v412, 4
      %v415 = vshll.u32 %v351, 16
      %v417 = vrot.slane %v415, 5
      %v418 = vsel %vm362, %v413, %v417
      %v420 = vshrl.u32 %v352, 16
      %v422 = vrot.slane %v420, 4
      %v423 = vshll.u32 %v352, 16
      %v425 = vrot.slane %v423, 5
      %v426 = vor.u32 %v422, %v425
      %v427 = vrot.slane %v426, 4
      %v429 = vshll.u32 %v353, 16
      %v431 = vrot.slane %v429, 5
      %v432 = vsel %vm362, %v427, %v431
      %v434 = vshrl.u32 %v354, 16
      %v436 = vrot.slane %v434, 4
      %v437 = vshll.u32 %v354, 16
      %v439 = vrot.slane %v437, 5
      %v440 = vor.u32 %v436, %v439
      %v441 = vrot.slane %v440, 4
      %v443 = vshll.u32 %v355, 16
      %v445 = vrot.slane %v443, 5
      %v446 = vsel %vm362, %v441, %v445
      %v448 = vshrl.u32 %v356, 16
      %v450 = vrot.slane %v448, 4
      %v451 = vshll.u32 %v356, 16
      %v453 = vrot.slane %v451, 5
      %v454 = vor.u32 %v450, %v453
      %v455 = vrot.slane %v454, 4
      %v457 = vshll.u32 %v357, 16
      %v459 = vrot.slane %v457, 5
      %v460 = vsel %vm362, %v455, %v459
      %v462 = vshrl.u32 %v358, 16
      %v464 = vrot.slane %v462, 4
      %v465 = vshll.u32 %v358, 16
      %v467 = vrot.slane %v465, 5
      %v468 = vor.u32 %v464, %v467
      %v469 = vrot.slane %v468, 4
      %v471 = vshll.u32 %v359, 16
      %v473 = vrot.slane %v471, 5
      %v474 = vsel %vm362, %v469, %v473
      %v475 = vld [vmem:[%s248 + $0x100] sm:$0xf]
      %v476 = vld [vmem:[%s248 + $0x104] sm:$0xf]
      %v477 = vld [vmem:[%s248 + $0x108] sm:$0xf]
      %v478 = vld [vmem:[%s248 + $0x10c] sm:$0xf]
      %v479 = vld [vmem:[%s248 + $0x110] sm:$0xf]
      %v480 = vld [vmem:[%s248 + $0x114] sm:$0xf]
      %v481 = vld [vmem:[%s248 + $0x118] sm:$0xf]
      %v482 = vld [vmem:[%s248 + $0x11c] sm:$0xf]
      %v483 = vld [vmem:[%s248 + $0x120] sm:$0xf]
      %v484 = vld [vmem:[%s248 + $0x124] sm:$0xf]
      %v485 = vld [vmem:[%s248 + $0x128] sm:$0xf]
      %v486 = vld [vmem:[%s248 + $0x12c] sm:$0xf]
      %v487 = vld [vmem:[%s248 + $0x130] sm:$0xf]
      %v488 = vld [vmem:[%s248 + $0x134] sm:$0xf]
      %v489 = vld [vmem:[%s248 + $0x138] sm:$0xf]
      %v490 = vld [vmem:[%s248 + $0x13c] sm:$0xf]
      %v491 = vunpack.c.l.b16 %v376
      %v492 = vunpack.c.l.b16 %v390
      %v493 = vunpack.c.l.b16 %v404
      %v494 = vunpack.c.l.b16 %v418
      %v495 = vunpack.c.l.b16 %v432
      %v496 = vunpack.c.l.b16 %v446
      %v497 = vunpack.c.l.b16 %v460
      %v498 = vunpack.c.l.b16 %v474
      %v499 = vpack.c.b16 %v492, %v491
      %v500 = vpack.c.b16 %v494, %v493
      %v501 = vpack.c.b16 %v496, %v495
      %v502 = vpack.c.b16 %v498, %v497
      %v523 = vunpack.c.l.b16 %v475
      %v524 = vunpack.c.l.b16 %v476
      %v525 = vunpack.c.l.b16 %v477
      %v526 = vunpack.c.l.b16 %v478
      %v527 = vunpack.c.l.b16 %v479
      %v528 = vunpack.c.l.b16 %v480
      %v529 = vunpack.c.l.b16 %v481
      %v530 = vunpack.c.l.b16 %v482
      %v531 = vunpack.c.l.b16 %v483
      %v532 = vunpack.c.l.b16 %v484
      %v533 = vunpack.c.l.b16 %v485
      %v534 = vunpack.c.l.b16 %v486
      %v535 = vunpack.c.l.b16 %v487
      %v536 = vunpack.c.l.b16 %v488
      %v537 = vunpack.c.l.b16 %v489
      %v538 = vunpack.c.l.b16 %v490
      %v539 = vpack.c.b16 %v524, %v523
      %v540 = vpack.c.b16 %v526, %v525
      %v541 = vpack.c.b16 %v528, %v527
      %v542 = vpack.c.b16 %v530, %v529
      %v543 = vpack.c.b16 %v532, %v531
      %v544 = vpack.c.b16 %v534, %v533
      %v545 = vpack.c.b16 %v536, %v535
      %v546 = vpack.c.b16 %v538, %v537
      %555 = vmatprep.subr.bf16.mxu0 0
      %556 = vmatpush1.bf16.msra.mxu0 %v539
      %557 = vmatprep.subr.bf16.mxu0 0
      %558 = vmatpush1.bf16.msra.mxu0 %v540
      %559 = vmatprep.subr.bf16.mxu0 0
      %560 = vmatpush1.bf16.msra.mxu0 %v541
      %561 = vmatprep.subr.bf16.mxu0 0
      %562 = vmatpush1.bf16.msra.mxu0 %v542
      %563 = vmatprep.subr.bf16.mxu0 0
      %564 = vmatpush1.bf16.msra.mxu0 %v543
      %565 = vmatprep.subr.bf16.mxu0 0
      %566 = vmatpush1.bf16.msra.mxu0 %v544
      %567 = vmatprep.subr.bf16.mxu0 0
      %568 = vmatpush1.bf16.msra.mxu0 %v545
      %569 = vmatprep.subr.bf16.mxu0 0
      %570 = vmatpush1.bf16.msra.mxu0 %v546
      %571 = vmatprep.subr.bf16.mxu0 0
      %572 = vmatpush1.bf16.msra.mxu0 0
      %573 = vmatprep.subr.bf16.mxu0 0
      %574 = vmatpush1.bf16.msra.mxu0 0
      %575 = vmatprep.subr.bf16.mxu0 0
      %576 = vmatpush1.bf16.msra.mxu0 0
      %577 = vmatprep.subr.bf16.mxu0 0
      %578 = vmatpush1.bf16.msra.mxu0 0
      %579 = vmatprep.subr.bf16.mxu0 0
      %580 = vmatpush1.bf16.msra.mxu0 0
      %581 = vmatprep.subr.bf16.mxu0 0
      %582 = vmatpush1.bf16.msra.mxu0 0
      %583 = vmatprep.subr.bf16.mxu0 0
      %584 = vmatpush1.bf16.msra.mxu0 0
      %585 = vmatprep.subr.bf16.mxu0 0
      %586 = vmatpush1.bf16.msra.mxu0 0
      %587 = vmatprep.mubr.bf16.mxu0 0
      %588 = vmatmul.mubr.bf16.gmra.mrb[0].mxu0 %v499
      %v589 = vpop.f32.mrb[0].mxu0
      %v590 = vadd.f32 0.0, %v589
      %v591 = vpop.f32.mrb[0].mxu0
      %v592 = vpop.f32.mrb[0].mxu0
      %v593 = vadd.f32 0.0, %v592
      %v594 = vpop.f32.mrb[0].mxu0
      %595 = vmatprep.mubr.bf16.mxu0 0
      %596 = vmatmul.mubr.bf16.gmra.mrb[0].mxu0 %v500
      %v597 = vpop.f32.mrb[0].mxu0
      %v598 = vadd.f32 0.0, %v597
      %v599 = vpop.f32.mrb[0].mxu0
      %v600 = vpop.f32.mrb[0].mxu0
      %v601 = vadd.f32 0.0, %v600
      %v602 = vpop.f32.mrb[0].mxu0
      %603 = vmatprep.mubr.bf16.mxu0 0
      %604 = vmatmul.mubr.bf16.gmra.mrb[0].mxu0 %v501
      %v605 = vpop.f32.mrb[0].mxu0
      %v606 = vadd.f32 0.0, %v605
      %v607 = vpop.f32.mrb[0].mxu0
      %v608 = vpop.f32.mrb[0].mxu0
      %v609 = vadd.f32 0.0, %v608
      %v610 = vpop.f32.mrb[0].mxu0
      %611 = vmatprep.mubr.bf16.mxu0 0
      %612 = vmatmul.mubr.bf16.gmra.mrb[0].mxu0 %v502
      %v613 = vpop.f32.mrb[0].mxu0
      %v614 = vadd.f32 0.0, %v613
      %v615 = vpop.f32.mrb[0].mxu0
      %v616 = vpop.f32.mrb[0].mxu0
      %v617 = vadd.f32 0.0, %v616
      %v618 = vpop.f32.mrb[0].mxu0
      %619 = vdwg.mxu0
      %v636 = vunpack.c.l.b16 %v264
      %v637 = vunpack.c.h.b16 %v264
      %v638 = vunpack.c.l.b16 %v265
      %v639 = vunpack.c.h.b16 %v265
      %v640 = vunpack.c.l.b16 %v266
      %v641 = vunpack.c.h.b16 %v266
      %v642 = vunpack.c.l.b16 %v267
      %v643 = vunpack.c.h.b16 %v267
      %v644 = vunpack.c.l.b16 %v268
      %v645 = vunpack.c.h.b16 %v268
      %v646 = vunpack.c.l.b16 %v269
      %v647 = vunpack.c.h.b16 %v269
      %v648 = vunpack.c.l.b16 %v270
      %v649 = vunpack.c.h.b16 %v270
      %v650 = vunpack.c.l.b16 %v271
      %v651 = vunpack.c.h.b16 %v271
      %v652 = vunpack.c.l.b16 %v272
      %v653 = vunpack.c.h.b16 %v272
      %v654 = vunpack.c.l.b16 %v273
      %v655 = vunpack.c.h.b16 %v273
      %v656 = vunpack.c.l.b16 %v274
      %v657 = vunpack.c.h.b16 %v274
      %v658 = vunpack.c.l.b16 %v275
      %v659 = vunpack.c.h.b16 %v275
      %v660 = vunpack.c.l.b16 %v276
      %v661 = vunpack.c.h.b16 %v276
      %v662 = vunpack.c.l.b16 %v277
      %v663 = vunpack.c.h.b16 %v277
      %v664 = vunpack.c.l.b16 %v278
      %v665 = vunpack.c.h.b16 %v278
      %v666 = vunpack.c.l.b16 %v279
      %v667 = vunpack.c.h.b16 %v279
      %v668 = vpack.c.b16 %v640, %v636
      %v669 = vpack.c.b16 %v641, %v637
      %v670 = vpack.c.b16 %v642, %v638
      %v671 = vpack.c.b16 %v643, %v639
      %v672 = vpack.c.b16 %v648, %v644
      %v673 = vpack.c.b16 %v649, %v645
      %v674 = vpack.c.b16 %v650, %v646
      %v675 = vpack.c.b16 %v651, %v647
      %v676 = vpack.c.b16 %v656, %v652
      %v677 = vpack.c.b16 %v657, %v653
      %v678 = vpack.c.b16 %v658, %v654
      %v679 = vpack.c.b16 %v659, %v655
      %v680 = vpack.c.b16 %v664, %v660
      %v681 = vpack.c.b16 %v665, %v661
      %v682 = vpack.c.b16 %v666, %v662
      %v683 = vpack.c.b16 %v667, %v663
      %v764 = vunpack.c.l.b16 %v280
      %v765 = vunpack.c.l.b16 %v281
      %v766 = vunpack.c.l.b16 %v282
      %v767 = vunpack.c.l.b16 %v283
      %v768 = vunpack.c.l.b16 %v284
      %v769 = vunpack.c.l.b16 %v285
      %v770 = vunpack.c.l.b16 %v286
      %v771 = vunpack.c.l.b16 %v287
      %v772 = vunpack.c.l.b16 %v288
      %v773 = vunpack.c.l.b16 %v289
      %v774 = vunpack.c.l.b16 %v290
      %v775 = vunpack.c.l.b16 %v291
      %v776 = vunpack.c.l.b16 %v292
      %v777 = vunpack.c.l.b16 %v293
      %v778 = vunpack.c.l.b16 %v294
      %v779 = vunpack.c.l.b16 %v295
      %v780 = vunpack.c.l.b16 %v296
      %v781 = vunpack.c.l.b16 %v297
      %v782 = vunpack.c.l.b16 %v298
      %v783 = vunpack.c.l.b16 %v299
      %v784 = vunpack.c.l.b16 %v300
      %v785 = vunpack.c.l.b16 %v301
      %v786 = vunpack.c.l.b16 %v302
      %v787 = vunpack.c.l.b16 %v303
      %v788 = vunpack.c.l.b16 %v304
      %v789 = vunpack.c.l.b16 %v305
      %v790 = vunpack.c.l.b16 %v306
      %v791 = vunpack.c.l.b16 %v307
      %v792 = vunpack.c.l.b16 %v308
      %v793 = vunpack.c.l.b16 %v309
      %v794 = vunpack.c.l.b16 %v310
      %v795 = vunpack.c.l.b16 %v311
      %v796 = vunpack.c.l.b16 %v312
      %v797 = vunpack.c.l.b16 %v313
      %v798 = vunpack.c.l.b16 %v314
      %v799 = vunpack.c.l.b16 %v315
      %v800 = vunpack.c.l.b16 %v316
      %v801 = vunpack.c.l.b16 %v317
      %v802 = vunpack.c.l.b16 %v318
      %v803 = vunpack.c.l.b16 %v319
      %v804 = vunpack.c.l.b16 %v320
      %v805 = vunpack.c.l.b16 %v321
      %v806 = vunpack.c.l.b16 %v322
      %v807 = vunpack.c.l.b16 %v323
      %v808 = vunpack.c.l.b16 %v324
      %v809 = vunpack.c.l.b16 %v325
      %v810 = vunpack.c.l.b16 %v326
      %v811 = vunpack.c.l.b16 %v327
      %v812 = vunpack.c.l.b16 %v328
      %v813 = vunpack.c.l.b16 %v329
      %v814 = vunpack.c.l.b16 %v330
      %v815 = vunpack.c.l.b16 %v331
      %v816 = vunpack.c.l.b16 %v332
      %v817 = vunpack.c.l.b16 %v333
      %v818 = vunpack.c.l.b16 %v334
      %v819 = vunpack.c.l.b16 %v335
      %v820 = vunpack.c.l.b16 %v336
      %v821 = vunpack.c.l.b16 %v337
      %v822 = vunpack.c.l.b16 %v338
      %v823 = vunpack.c.l.b16 %v339
      %v824 = vunpack.c.l.b16 %v340
      %v825 = vunpack.c.l.b16 %v341
      %v826 = vunpack.c.l.b16 %v342
      %v827 = vunpack.c.l.b16 %v343
      %v828 = vpack.c.b16 %v765, %v764
      %v829 = vpack.c.b16 %v767, %v766
      %v830 = vpack.c.b16 %v769, %v768
      %v831 = vpack.c.b16 %v771, %v770
      %v832 = vpack.c.b16 %v773, %v772
      %v833 = vpack.c.b16 %v775, %v774
      %v834 = vpack.c.b16 %v777, %v776
      %v835 = vpack.c.b16 %v779, %v778
      %v836 = vpack.c.b16 %v781, %v780
      %v837 = vpack.c.b16 %v783, %v782
      %v838 = vpack.c.b16 %v785, %v784
      %v839 = vpack.c.b16 %v787, %v786
      %v840 = vpack.c.b16 %v789, %v788
      %v841 = vpack.c.b16 %v791, %v790
      %v842 = vpack.c.b16 %v793, %v792
      %v843 = vpack.c.b16 %v795, %v794
      %v844 = vpack.c.b16 %v797, %v796
      %v845 = vpack.c.b16 %v799, %v798
      %v846 = vpack.c.b16 %v801, %v800
      %v847 = vpack.c.b16 %v803, %v802
      %v848 = vpack.c.b16 %v805, %v804
      %v849 = vpack.c.b16 %v807, %v806
      %v850 = vpack.c.b16 %v809, %v808
      %v851 = vpack.c.b16 %v811, %v810
      %v852 = vpack.c.b16 %v813, %v812
      %v853 = vpack.c.b16 %v815, %v814
      %v854 = vpack.c.b16 %v817, %v816
      %v855 = vpack.c.b16 %v819, %v818
      %v856 = vpack.c.b16 %v821, %v820
      %v857 = vpack.c.b16 %v823, %v822
      %v858 = vpack.c.b16 %v825, %v824
      %v859 = vpack.c.b16 %v827, %v826
      %892 = vmatprep.subr.bf16.mxu0 0
      %893 = vmatpush1.bf16.msra.mxu0 %v828
      %894 = vmatprep.subr.bf16.mxu0 0
      %895 = vmatpush1.bf16.msra.mxu0 %v829
      %896 = vmatprep.subr.bf16.mxu0 0
      %897 = vmatpush1.bf16.msra.mxu0 %v830
      %898 = vmatprep.subr.bf16.mxu0 0
      %899 = vmatpush1.bf16.msra.mxu0 %v831
      %900 = vmatprep.subr.bf16.mxu0 0
      %901 = vmatpush1.bf16.msra.mxu0 %v832
      %902 = vmatprep.subr.bf16.mxu0 0
      %903 = vmatpush1.bf16.msra.mxu0 %v833
      %904 = vmatprep.subr.bf16.mxu0 0
      %905 = vmatpush1.bf16.msra.mxu0 %v834
      %906 = vmatprep.subr.bf16.mxu0 0
      %907 = vmatpush1.bf16.msra.mxu0 %v835
      %908 = vmatprep.subr.bf16.mxu0 0
      %909 = vmatpush1.bf16.msra.mxu0 %v836
      %910 = vmatprep.subr.bf16.mxu0 0
      %911 = vmatpush1.bf16.msra.mxu0 %v837
      %912 = vmatprep.subr.bf16.mxu0 0
      %913 = vmatpush1.bf16.msra.mxu0 %v838
      %914 = vmatprep.subr.bf16.mxu0 0
      %915 = vmatpush1.bf16.msra.mxu0 %v839
      %916 = vmatprep.subr.bf16.mxu0 0
      %917 = vmatpush1.bf16.msra.mxu0 %v840
      %918 = vmatprep.subr.bf16.mxu0 0
      %919 = vmatpush1.bf16.msra.mxu0 %v841
      %920 = vmatprep.subr.bf16.mxu0 0
      %921 = vmatpush1.bf16.msra.mxu0 %v842
      %922 = vmatprep.subr.bf16.mxu0 0
      %923 = vmatpush1.bf16.msra.mxu0 %v843
      %924 = vmatprep.mubr.bf16.mxu0 %v669
      %925 = vmatmul.mubr.bf16.gmra.mrb[0].mxu0 %v668
      %v926 = vpop.f32.mrb[0].mxu0
      %v927 = vadd.f32 %v590, %v926
      %v928 = vpop.f32.mrb[0].mxu0
      %v929 = vpop.f32.mrb[0].mxu0
      %v930 = vadd.f32 %v593, %v929
      %v931 = vpop.f32.mrb[0].mxu0
      %932 = vmatprep.mubr.bf16.mxu0 %v673
      %933 = vmatmul.mubr.bf16.gmra.mrb[0].mxu0 %v672
      %v934 = vpop.f32.mrb[0].mxu0
      %v935 = vadd.f32 %v598, %v934
      %v936 = vpop.f32.mrb[0].mxu0
      %v937 = vpop.f32.mrb[0].mxu0
      %v938 = vadd.f32 %v601, %v937
      %v939 = vpop.f32.mrb[0].mxu0
      %940 = vmatprep.mubr.bf16.mxu0 %v677
      %941 = vmatmul.mubr.bf16.gmra.mrb[0].mxu0 %v676
      %v942 = vpop.f32.mrb[0].mxu0
      %v943 = vadd.f32 %v606, %v942
      %v944 = vpop.f32.mrb[0].mxu0
      %v945 = vpop.f32.mrb[0].mxu0
      %v946 = vadd.f32 %v609, %v945
      %v947 = vpop.f32.mrb[0].mxu0
      %948 = vmatprep.mubr.bf16.mxu0 %v681
      %949 = vmatmul.mubr.bf16.gmra.mrb[0].mxu0 %v680
      %v950 = vpop.f32.mrb[0].mxu0
      %v951 = vadd.f32 %v614, %v950
      %v952 = vpop.f32.mrb[0].mxu0
      %v953 = vpop.f32.mrb[0].mxu0
      %v954 = vadd.f32 %v617, %v953
      %v955 = vpop.f32.mrb[0].mxu0
      %956 = vdwg.mxu0
      %957 = vmatprep.subr.bf16.mxu0 0
      %958 = vmatpush1.bf16.msra.mxu0 %v844
      %959 = vmatprep.subr.bf16.mxu0 0
      %960 = vmatpush1.bf16.msra.mxu0 %v845
      %961 = vmatprep.subr.bf16.mxu0 0
      %962 = vmatpush1.bf16.msra.mxu0 %v846
      %963 = vmatprep.subr.bf16.mxu0 0
      %964 = vmatpush1.bf16.msra.mxu0 %v847
      %965 = vmatprep.subr.bf16.mxu0 0
      %966 = vmatpush1.bf16.msra.mxu0 %v848
      %967 = vmatprep.subr.bf16.mxu0 0
      %968 = vmatpush1.bf16.msra.mxu0 %v849
      %969 = vmatprep.subr.bf16.mxu0 0
      %970 = vmatpush1.bf16.msra.mxu0 %v850
      %971 = vmatprep.subr.bf16.mxu0 0
      %972 = vmatpush1.bf16.msra.mxu0 %v851
      %973 = vmatprep.subr.bf16.mxu0 0
      %974 = vmatpush1.bf16.msra.mxu0 %v852
      %975 = vmatprep.subr.bf16.mxu0 0
      %976 = vmatpush1.bf16.msra.mxu0 %v853
      %977 = vmatprep.subr.bf16.mxu0 0
      %978 = vmatpush1.bf16.msra.mxu0 %v854
      %979 = vmatprep.subr.bf16.mxu0 0
      %980 = vmatpush1.bf16.msra.mxu0 %v855
      %981 = vmatprep.subr.bf16.mxu0 0
      %982 = vmatpush1.bf16.msra.mxu0 %v856
      %983 = vmatprep.subr.bf16.mxu0 0
      %984 = vmatpush1.bf16.msra.mxu0 %v857
      %985 = vmatprep.subr.bf16.mxu0 0
      %986 = vmatpush1.bf16.msra.mxu0 %v858
      %987 = vmatprep.subr.bf16.mxu0 0
      %988 = vmatpush1.bf16.msra.mxu0 %v859
      %989 = vmatprep.mubr.bf16.mxu0 %v671
      %990 = vmatmul.mubr.bf16.gmra.mrb[0].mxu0 %v670
      %v991 = vpop.f32.mrb[0].mxu0
      %v992 = vadd.f32 %v927, %v991
      %v993 = vpop.f32.mrb[0].mxu0
      %v994 = vpop.f32.mrb[0].mxu0
      %v995 = vadd.f32 %v930, %v994
      %v996 = vpop.f32.mrb[0].mxu0
      %997 = vmatprep.mubr.bf16.mxu0 %v675
      %998 = vmatmul.mubr.bf16.gmra.mrb[0].mxu0 %v674
      %v999 = vpop.f32.mrb[0].mxu0
      %v1000 = vadd.f32 %v935, %v999
      %v1001 = vpop.f32.mrb[0].mxu0
      %v1002 = vpop.f32.mrb[0].mxu0
      %v1003 = vadd.f32 %v938, %v1002
      %v1004 = vpop.f32.mrb[0].mxu0
      %1005 = vmatprep.mubr.bf16.mxu0 %v679
      %1006 = vmatmul.mubr.bf16.gmra.mrb[0].mxu0 %v678
      %v1007 = vpop.f32.mrb[0].mxu0
      %v1008 = vadd.f32 %v943, %v1007
      %v1009 = vpop.f32.mrb[0].mxu0
      %v1010 = vpop.f32.mrb[0].mxu0
      %v1011 = vadd.f32 %v946, %v1010
      %v1012 = vpop.f32.mrb[0].mxu0
      %1013 = vmatprep.mubr.bf16.mxu0 %v683
      %1014 = vmatmul.mubr.bf16.gmra.mrb[0].mxu0 %v682
      %v1015 = vpop.f32.mrb[0].mxu0
      %v1016 = vadd.f32 %v951, %v1015
      %v1017 = vpop.f32.mrb[0].mxu0
      %v1018 = vpop.f32.mrb[0].mxu0
      %v1019 = vadd.f32 %v954, %v1018
      %v1020 = vpop.f32.mrb[0].mxu0
      %1021 = vdwg.mxu0
      %v1022 = vld [vmem:[%s244 + $0x8] sm:$0xf]
      %v1023 = vld [vmem:[%s244 + $0x18] sm:$0x1]
      %v1024 = vld [vmem:[%s244 + $0x28] sm:$0xf]
      %v1025 = vld [vmem:[%s244 + $0x38] sm:$0x1]
      %v1026 = vld [vmem:[%s244 + $0x48] sm:$0xf]
      %v1027 = vld [vmem:[%s244 + $0x58] sm:$0x1]
      %v1028 = vld [vmem:[%s244 + $0x68] sm:$0xf]
      %v1029 = vld [vmem:[%s244 + $0x78] sm:$0x1]
      %v1030 = vld [vmem:[%s244 + $0x88] sm:$0xf]
      %v1031 = vld [vmem:[%s244 + $0x98] sm:$0x1]
      %v1032 = vld [vmem:[%s244 + $0xa8] sm:$0xf]
      %v1033 = vld [vmem:[%s244 + $0xb8] sm:$0x1]
      %v1034 = vld [vmem:[%s244 + $0xc8] sm:$0xf]
      %v1035 = vld [vmem:[%s244 + $0xd8] sm:$0x1]
      %v1036 = vld [vmem:[%s244 + $0xe8] sm:$0xf]
      %v1037 = vld [vmem:[%s244 + $0xf8] sm:$0x1]
      %v1039 = vshrl.u32 %v1022, 16
      %v1041 = vrot.slane %v1039, 4
      %v1042 = vshll.u32 %v1022, 16
      %v1044 = vrot.slane %v1042, 5
      %v1045 = vor.u32 %v1041, %v1044
      %v1046 = vrot.slane %v1045, 4
      %v1048 = vshll.u32 %v1023, 16
      %v1050 = vrot.slane %v1048, 5
      %v1051 = vsel %vm362, %v1046, %v1050
      %v1053 = vshrl.u32 %v1024, 16
      %v1055 = vrot.slane %v1053, 4
      %v1056 = vshll.u32 %v1024, 16
      %v1058 = vrot.slane %v1056, 5
      %v1059 = vor.u32 %v1055, %v1058
      %v1060 = vrot.slane %v1059, 4
      %v1062 = vshll.u32 %v1025, 16
      %v1064 = vrot.slane %v1062, 5
      %v1065 = vsel %vm362, %v1060, %v1064
      %v1067 = vshrl.u32 %v1026, 16
      %v1069 = vrot.slane %v1067, 4
      %v1070 = vshll.u32 %v1026, 16
      %v1072 = vrot.slane %v1070, 5
      %v1073 = vor.u32 %v1069, %v1072
      %v1074 = vrot.slane %v1073, 4
      %v1076 = vshll.u32 %v1027, 16
      %v1078 = vrot.slane %v1076, 5
      %v1079 = vsel %vm362, %v1074, %v1078
      %v1081 = vshrl.u32 %v1028, 16
      %v1083 = vrot.slane %v1081, 4
      %v1084 = vshll.u32 %v1028, 16
      %v1086 = vrot.slane %v1084, 5
      %v1087 = vor.u32 %v1083, %v1086
      %v1088 = vrot.slane %v1087, 4
      %v1090 = vshll.u32 %v1029, 16
      %v1092 = vrot.slane %v1090, 5
      %v1093 = vsel %vm362, %v1088, %v1092
      %v1095 = vshrl.u32 %v1030, 16
      %v1097 = vrot.slane %v1095, 4
      %v1098 = vshll.u32 %v1030, 16
      %v1100 = vrot.slane %v1098, 5
      %v1101 = vor.u32 %v1097, %v1100
      %v1102 = vrot.slane %v1101, 4
      %v1104 = vshll.u32 %v1031, 16
      %v1106 = vrot.slane %v1104, 5
      %v1107 = vsel %vm362, %v1102, %v1106
      %v1109 = vshrl.u32 %v1032, 16
      %v1111 = vrot.slane %v1109, 4
      %v1112 = vshll.u32 %v1032, 16
      %v1114 = vrot.slane %v1112, 5
      %v1115 = vor.u32 %v1111, %v1114
      %v1116 = vrot.slane %v1115, 4
      %v1118 = vshll.u32 %v1033, 16
      %v1120 = vrot.slane %v1118, 5
      %v1121 = vsel %vm362, %v1116, %v1120
      %v1123 = vshrl.u32 %v1034, 16
      %v1125 = vrot.slane %v1123, 4
      %v1126 = vshll.u32 %v1034, 16
      %v1128 = vrot.slane %v1126, 5
      %v1129 = vor.u32 %v1125, %v1128
      %v1130 = vrot.slane %v1129, 4
      %v1132 = vshll.u32 %v1035, 16
      %v1134 = vrot.slane %v1132, 5
      %v1135 = vsel %vm362, %v1130, %v1134
      %v1137 = vshrl.u32 %v1036, 16
      %v1139 = vrot.slane %v1137, 4
      %v1140 = vshll.u32 %v1036, 16
      %v1142 = vrot.slane %v1140, 5
      %v1143 = vor.u32 %v1139, %v1142
      %v1144 = vrot.slane %v1143, 4
      %v1146 = vshll.u32 %v1037, 16
      %v1148 = vrot.slane %v1146, 5
      %v1149 = vsel %vm362, %v1144, %v1148
      %v1150 = vld [vmem:[%s248 + $0x140] sm:$0xf]
      %v1151 = vld [vmem:[%s248 + $0x144] sm:$0xf]
      %v1152 = vld [vmem:[%s248 + $0x148] sm:$0xf]
      %v1153 = vld [vmem:[%s248 + $0x14c] sm:$0xf]
      %v1154 = vld [vmem:[%s248 + $0x150] sm:$0xf]
      %v1155 = vld [vmem:[%s248 + $0x154] sm:$0xf]
      %v1156 = vld [vmem:[%s248 + $0x158] sm:$0xf]
      %v1157 = vld [vmem:[%s248 + $0x15c] sm:$0xf]
      %v1158 = vld [vmem:[%s248 + $0x160] sm:$0xf]
      %v1159 = vld [vmem:[%s248 + $0x164] sm:$0xf]
      %v1160 = vld [vmem:[%s248 + $0x168] sm:$0xf]
      %v1161 = vld [vmem:[%s248 + $0x16c] sm:$0xf]
      %v1162 = vld [vmem:[%s248 + $0x170] sm:$0xf]
      %v1163 = vld [vmem:[%s248 + $0x174] sm:$0xf]
      %v1164 = vld [vmem:[%s248 + $0x178] sm:$0xf]
      %v1165 = vld [vmem:[%s248 + $0x17c] sm:$0xf]
      %v1166 = vunpack.c.l.b16 %v1051
      %v1167 = vunpack.c.l.b16 %v1065
      %v1168 = vunpack.c.l.b16 %v1079
      %v1169 = vunpack.c.l.b16 %v1093
      %v1170 = vunpack.c.l.b16 %v1107
      %v1171 = vunpack.c.l.b16 %v1121
      %v1172 = vunpack.c.l.b16 %v1135
      %v1173 = vunpack.c.l.b16 %v1149
      %v1174 = vpack.c.b16 %v1167, %v1166
      %v1175 = vpack.c.b16 %v1169, %v1168
      %v1176 = vpack.c.b16 %v1171, %v1170
      %v1177 = vpack.c.b16 %v1173, %v1172
      %v1198 = vunpack.c.l.b16 %v1150
      %v1199 = vunpack.c.l.b16 %v1151
      %v1200 = vunpack.c.l.b16 %v1152
      %v1201 = vunpack.c.l.b16 %v1153
      %v1202 = vunpack.c.l.b16 %v1154
      %v1203 = vunpack.c.l.b16 %v1155
      %v1204 = vunpack.c.l.b16 %v1156
      %v1205 = vunpack.c.l.b16 %v1157
      %v1206 = vunpack.c.l.b16 %v1158
      %v1207 = vunpack.c.l.b16 %v1159
      %v1208 = vunpack.c.l.b16 %v1160
      %v1209 = vunpack.c.l.b16 %v1161
      %v1210 = vunpack.c.l.b16 %v1162
      %v1211 = vunpack.c.l.b16 %v1163
      %v1212 = vunpack.c.l.b16 %v1164
      %v1213 = vunpack.c.l.b16 %v1165
      %v1214 = vpack.c.b16 %v1199, %v1198
      %v1215 = vpack.c.b16 %v1201, %v1200
      %v1216 = vpack.c.b16 %v1203, %v1202
      %v1217 = vpack.c.b16 %v1205, %v1204
      %v1218 = vpack.c.b16 %v1207, %v1206
      %v1219 = vpack.c.b16 %v1209, %v1208
      %v1220 = vpack.c.b16 %v1211, %v1210
      %v1221 = vpack.c.b16 %v1213, %v1212
      %1230 = vmatprep.subr.bf16.mxu0 0
      %1231 = vmatpush1.bf16.msra.mxu0 %v1214
      %1232 = vmatprep.subr.bf16.mxu0 0
      %1233 = vmatpush1.bf16.msra.mxu0 %v1215
      %1234 = vmatprep.subr.bf16.mxu0 0
      %1235 = vmatpush1.bf16.msra.mxu0 %v1216
      %1236 = vmatprep.subr.bf16.mxu0 0
      %1237 = vmatpush1.bf16.msra.mxu0 %v1217
      %1238 = vmatprep.subr.bf16.mxu0 0
      %1239 = vmatpush1.bf16.msra.mxu0 %v1218
      %1240 = vmatprep.subr.bf16.mxu0 0
      %1241 = vmatpush1.bf16.msra.mxu0 %v1219
      %1242 = vmatprep.subr.bf16.mxu0 0
      %1243 = vmatpush1.bf16.msra.mxu0 %v1220
      %1244 = vmatprep.subr.bf16.mxu0 0
      %1245 = vmatpush1.bf16.msra.mxu0 %v1221
      %1246 = vmatprep.subr.bf16.mxu0 0
      %1247 = vmatpush1.bf16.msra.mxu0 0
      %1248 = vmatprep.subr.bf16.mxu0 0
      %1249 = vmatpush1.bf16.msra.mxu0 0
      %1250 = vmatprep.subr.bf16.mxu0 0
      %1251 = vmatpush1.bf16.msra.mxu0 0
      %1252 = vmatprep.subr.bf16.mxu0 0
      %1253 = vmatpush1.bf16.msra.mxu0 0
      %1254 = vmatprep.subr.bf16.mxu0 0
      %1255 = vmatpush1.bf16.msra.mxu0 0
      %1256 = vmatprep.subr.bf16.mxu0 0
      %1257 = vmatpush1.bf16.msra.mxu0 0
      %1258 = vmatprep.subr.bf16.mxu0 0
      %1259 = vmatpush1.bf16.msra.mxu0 0
      %1260 = vmatprep.subr.bf16.mxu0 0
      %1261 = vmatpush1.bf16.msra.mxu0 0
      %1262 = vmatprep.mubr.bf16.mxu0 0
      %1263 = vmatmul.mubr.bf16.gmra.mrb[0].mxu0 %v1174
      %v1264 = vpop.f32.mrb[0].mxu0
      %v1265 = vadd.f32 0.0, %v1264
      %v1266 = vpop.f32.mrb[0].mxu0
      %v1267 = vpop.f32.mrb[0].mxu0
      %v1268 = vadd.f32 0.0, %v1267
      %v1269 = vpop.f32.mrb[0].mxu0
      %1270 = vmatprep.mubr.bf16.mxu0 0
      %1271 = vmatmul.mubr.bf16.gmra.mrb[0].mxu0 %v1175
      %v1272 = vpop.f32.mrb[0].mxu0
      %v1273 = vadd.f32 0.0, %v1272
      %v1274 = vpop.f32.mrb[0].mxu0
      %v1275 = vpop.f32.mrb[0].mxu0
      %v1276 = vadd.f32 0.0, %v1275
      %v1277 = vpop.f32.mrb[0].mxu0
      %1278 = vmatprep.mubr.bf16.mxu0 0
      %1279 = vmatmul.mubr.bf16.gmra.mrb[0].mxu0 %v1176
      %v1280 = vpop.f32.mrb[0].mxu0
      %v1281 = vadd.f32 0.0, %v1280
      %v1282 = vpop.f32.mrb[0].mxu0
      %v1283 = vpop.f32.mrb[0].mxu0
      %v1284 = vadd.f32 0.0, %v1283
      %v1285 = vpop.f32.mrb[0].mxu0
      %1286 = vmatprep.mubr.bf16.mxu0 0
      %1287 = vmatmul.mubr.bf16.gmra.mrb[0].mxu0 %v1177
      %v1288 = vpop.f32.mrb[0].mxu0
      %v1289 = vadd.f32 0.0, %v1288
      %v1290 = vpop.f32.mrb[0].mxu0
      %v1291 = vpop.f32.mrb[0].mxu0
      %v1292 = vadd.f32 0.0, %v1291
      %v1293 = vpop.f32.mrb[0].mxu0
      %1294 = vdwg.mxu0
      %v1295 = vadd.f32 %v992, %v1265
      %v1296 = vadd.f32 %v995, %v1268
      %v1297 = vadd.f32 %v1000, %v1273
      %v1298 = vadd.f32 %v1003, %v1276
      %v1299 = vadd.f32 %v1008, %v1281
      %v1300 = vadd.f32 %v1011, %v1284
      %v1301 = vadd.f32 %v1016, %v1289
      %v1302 = vadd.f32 %v1019, %v1292
      %s1303 = scalar_lea.vmem %s244, 32
      %v1304 = vld [vmem:[%s1303] sm:$0xff]
      %v1305 = vld [vmem:[%s1303 + $0x20] sm:$0xff]
      %v1306 = vld [vmem:[%s1303 + $0x40] sm:$0xff]
      %v1307 = vld [vmem:[%s1303 + $0x60] sm:$0xff]
      %v1308 = vld [vmem:[%s1303 + $0x80] sm:$0xff]
      %v1309 = vld [vmem:[%s1303 + $0xa0] sm:$0xff]
      %v1310 = vld [vmem:[%s1303 + $0xc0] sm:$0xff]
      %v1311 = vld [vmem:[%s1303 + $0xe0] sm:$0xff]
      %v1312 = vld [vmem:[%s248 + $0x180] sm:$0xf]
      %v1313 = vld [vmem:[%s248 + $0x184] sm:$0xf]
      %v1314 = vld [vmem:[%s248 + $0x188] sm:$0xf]
      %v1315 = vld [vmem:[%s248 + $0x18c] sm:$0xf]
      %v1316 = vld [vmem:[%s248 + $0x190] sm:$0xf]
      %v1317 = vld [vmem:[%s248 + $0x194] sm:$0xf]
      %v1318 = vld [vmem:[%s248 + $0x198] sm:$0xf]
      %v1319 = vld [vmem:[%s248 + $0x19c] sm:$0xf]
      %v1320 = vld [vmem:[%s248 + $0x1a0] sm:$0xf]
      %v1321 = vld [vmem:[%s248 + $0x1a4] sm:$0xf]
      %v1322 = vld [vmem:[%s248 + $0x1a8] sm:$0xf]
      %v1323 = vld [vmem:[%s248 + $0x1ac] sm:$0xf]
      %v1324 = vld [vmem:[%s248 + $0x1b0] sm:$0xf]
      %v1325 = vld [vmem:[%s248 + $0x1b4] sm:$0xf]
      %v1326 = vld [vmem:[%s248 + $0x1b8] sm:$0xf]
      %v1327 = vld [vmem:[%s248 + $0x1bc] sm:$0xf]
      %v1328 = vld [vmem:[%s248 + $0x1c0] sm:$0xf]
      %v1329 = vld [vmem:[%s248 + $0x1c4] sm:$0xf]
      %v1330 = vld [vmem:[%s248 + $0x1c8] sm:$0xf]
      %v1331 = vld [vmem:[%s248 + $0x1cc] sm:$0xf]
      %v1332 = vld [vmem:[%s248 + $0x1d0] sm:$0xf]
      %v1333 = vld [vmem:[%s248 + $0x1d4] sm:$0xf]
      %v1334 = vld [vmem:[%s248 + $0x1d8] sm:$0xf]
      %v1335 = vld [vmem:[%s248 + $0x1dc] sm:$0xf]
      %v1336 = vld [vmem:[%s248 + $0x1e0] sm:$0xf]
      %v1337 = vld [vmem:[%s248 + $0x1e4] sm:$0xf]
      %v1338 = vld [vmem:[%s248 + $0x1e8] sm:$0xf]
      %v1339 = vld [vmem:[%s248 + $0x1ec] sm:$0xf]
      %v1340 = vld [vmem:[%s248 + $0x1f0] sm:$0xf]
      %v1341 = vld [vmem:[%s248 + $0x1f4] sm:$0xf]
      %v1342 = vld [vmem:[%s248 + $0x1f8] sm:$0xf]
      %v1343 = vld [vmem:[%s248 + $0x1fc] sm:$0xf]
      %v1352 = vunpack.c.l.b16 %v1304
      %v1353 = vunpack.c.h.b16 %v1304
      %v1354 = vunpack.c.l.b16 %v1305
      %v1355 = vunpack.c.h.b16 %v1305
      %v1356 = vunpack.c.l.b16 %v1306
      %v1357 = vunpack.c.h.b16 %v1306
      %v1358 = vunpack.c.l.b16 %v1307
      %v1359 = vunpack.c.h.b16 %v1307
      %v1360 = vunpack.c.l.b16 %v1308
      %v1361 = vunpack.c.h.b16 %v1308
      %v1362 = vunpack.c.l.b16 %v1309
      %v1363 = vunpack.c.h.b16 %v1309
      %v1364 = vunpack.c.l.b16 %v1310
      %v1365 = vunpack.c.h.b16 %v1310
      %v1366 = vunpack.c.l.b16 %v1311
      %v1367 = vunpack.c.h.b16 %v1311
      %v1368 = vpack.c.b16 %v1354, %v1352
      %v1369 = vpack.c.b16 %v1355, %v1353
      %v1370 = vpack.c.b16 %v1358, %v1356
      %v1371 = vpack.c.b16 %v1359, %v1357
      %v1372 = vpack.c.b16 %v1362, %v1360
      %v1373 = vpack.c.b16 %v1363, %v1361
      %v1374 = vpack.c.b16 %v1366, %v1364
      %v1375 = vpack.c.b16 %v1367, %v1365
      %v1416 = vunpack.c.l.b16 %v1312
      %v1417 = vunpack.c.l.b16 %v1313
      %v1418 = vunpack.c.l.b16 %v1314
      %v1419 = vunpack.c.l.b16 %v1315
      %v1420 = vunpack.c.l.b16 %v1316
      %v1421 = vunpack.c.l.b16 %v1317
      %v1422 = vunpack.c.l.b16 %v1318
      %v1423 = vunpack.c.l.b16 %v1319
      %v1424 = vunpack.c.l.b16 %v1320
      %v1425 = vunpack.c.l.b16 %v1321
      %v1426 = vunpack.c.l.b16 %v1322
      %v1427 = vunpack.c.l.b16 %v1323
      %v1428 = vunpack.c.l.b16 %v1324
      %v1429 = vunpack.c.l.b16 %v1325
      %v1430 = vunpack.c.l.b16 %v1326
      %v1431 = vunpack.c.l.b16 %v1327
      %v1432 = vunpack.c.l.b16 %v1328
      %v1433 = vunpack.c.l.b16 %v1329
      %v1434 = vunpack.c.l.b16 %v1330
      %v1435 = vunpack.c.l.b16 %v1331
      %v1436 = vunpack.c.l.b16 %v1332
      %v1437 = vunpack.c.l.b16 %v1333
      %v1438 = vunpack.c.l.b16 %v1334
      %v1439 = vunpack.c.l.b16 %v1335
      %v1440 = vunpack.c.l.b16 %v1336
      %v1441 = vunpack.c.l.b16 %v1337
      %v1442 = vunpack.c.l.b16 %v1338
      %v1443 = vunpack.c.l.b16 %v1339
      %v1444 = vunpack.c.l.b16 %v1340
      %v1445 = vunpack.c.l.b16 %v1341
      %v1446 = vunpack.c.l.b16 %v1342
      %v1447 = vunpack.c.l.b16 %v1343
      %v1448 = vpack.c.b16 %v1417, %v1416
      %v1449 = vpack.c.b16 %v1419, %v1418
      %v1450 = vpack.c.b16 %v1421, %v1420
      %v1451 = vpack.c.b16 %v1423, %v1422
      %v1452 = vpack.c.b16 %v1425, %v1424
      %v1453 = vpack.c.b16 %v1427, %v1426
      %v1454 = vpack.c.b16 %v1429, %v1428
      %v1455 = vpack.c.b16 %v1431, %v1430
      %v1456 = vpack.c.b16 %v1433, %v1432
      %v1457 = vpack.c.b16 %v1435, %v1434
      %v1458 = vpack.c.b16 %v1437, %v1436
      %v1459 = vpack.c.b16 %v1439, %v1438
      %v1460 = vpack.c.b16 %v1441, %v1440
      %v1461 = vpack.c.b16 %v1443, %v1442
      %v1462 = vpack.c.b16 %v1445, %v1444
      %v1463 = vpack.c.b16 %v1447, %v1446
      %1480 = vmatprep.subr.bf16.mxu0 0
      %1481 = vmatpush1.bf16.msra.mxu0 %v1448
      %1482 = vmatprep.subr.bf16.mxu0 0
      %1483 = vmatpush1.bf16.msra.mxu0 %v1449
      %1484 = vmatprep.subr.bf16.mxu0 0
      %1485 = vmatpush1.bf16.msra.mxu0 %v1450
      %1486 = vmatprep.subr.bf16.mxu0 0
      %1487 = vmatpush1.bf16.msra.mxu0 %v1451
      %1488 = vmatprep.subr.bf16.mxu0 0
      %1489 = vmatpush1.bf16.msra.mxu0 %v1452
      %1490 = vmatprep.subr.bf16.mxu0 0
      %1491 = vmatpush1.bf16.msra.mxu0 %v1453
      %1492 = vmatprep.subr.bf16.mxu0 0
      %1493 = vmatpush1.bf16.msra.mxu0 %v1454
      %1494 = vmatprep.subr.bf16.mxu0 0
      %1495 = vmatpush1.bf16.msra.mxu0 %v1455
      %1496 = vmatprep.subr.bf16.mxu0 0
      %1497 = vmatpush1.bf16.msra.mxu0 %v1456
      %1498 = vmatprep.subr.bf16.mxu0 0
      %1499 = vmatpush1.bf16.msra.mxu0 %v1457
      %1500 = vmatprep.subr.bf16.mxu0 0
      %1501 = vmatpush1.bf16.msra.mxu0 %v1458
      %1502 = vmatprep.subr.bf16.mxu0 0
      %1503 = vmatpush1.bf16.msra.mxu0 %v1459
      %1504 = vmatprep.subr.bf16.mxu0 0
      %1505 = vmatpush1.bf16.msra.mxu0 %v1460
      %1506 = vmatprep.subr.bf16.mxu0 0
      %1507 = vmatpush1.bf16.msra.mxu0 %v1461
      %1508 = vmatprep.subr.bf16.mxu0 0
      %1509 = vmatpush1.bf16.msra.mxu0 %v1462
      %1510 = vmatprep.subr.bf16.mxu0 0
      %1511 = vmatpush1.bf16.msra.mxu0 %v1463
      %1512 = vmatprep.mubr.bf16.mxu0 %v1369
      %1513 = vmatmul.mubr.bf16.gmra.mrb[0].mxu0 %v1368
      %v1514 = vpop.f32.mrb[0].mxu0
      %v1515 = vadd.f32 0.0, %v1514
      %v1516 = vpop.f32.mrb[0].mxu0
      %v1517 = vpop.f32.mrb[0].mxu0
      %v1518 = vadd.f32 0.0, %v1517
      %v1519 = vpop.f32.mrb[0].mxu0
      %1520 = vmatprep.mubr.bf16.mxu0 %v1371
      %1521 = vmatmul.mubr.bf16.gmra.mrb[0].mxu0 %v1370
      %v1522 = vpop.f32.mrb[0].mxu0
      %v1523 = vadd.f32 0.0, %v1522
      %v1524 = vpop.f32.mrb[0].mxu0
      %v1525 = vpop.f32.mrb[0].mxu0
      %v1526 = vadd.f32 0.0, %v1525
      %v1527 = vpop.f32.mrb[0].mxu0
      %1528 = vmatprep.mubr.bf16.mxu0 %v1373
      %1529 = vmatmul.mubr.bf16.gmra.mrb[0].mxu0 %v1372
      %v1530 = vpop.f32.mrb[0].mxu0
      %v1531 = vadd.f32 0.0, %v1530
      %v1532 = vpop.f32.mrb[0].mxu0
      %v1533 = vpop.f32.mrb[0].mxu0
      %v1534 = vadd.f32 0.0, %v1533
      %v1535 = vpop.f32.mrb[0].mxu0
      %1536 = vmatprep.mubr.bf16.mxu0 %v1375
      %1537 = vmatmul.mubr.bf16.gmra.mrb[0].mxu0 %v1374
      %v1538 = vpop.f32.mrb[0].mxu0
      %v1539 = vadd.f32 0.0, %v1538
      %v1540 = vpop.f32.mrb[0].mxu0
      %v1541 = vpop.f32.mrb[0].mxu0
      %v1542 = vadd.f32 0.0, %v1541
      %v1543 = vpop.f32.mrb[0].mxu0
      %1544 = vdwg.mxu0
      %v1545 = vadd.f32 %v1295, %v1515
      %v1546 = vadd.f32 %v1296, %v1518
      %v1547 = vadd.f32 %v1297, %v1523
      %v1548 = vadd.f32 %v1298, %v1526
      %v1549 = vadd.f32 %v1299, %v1531
      %v1550 = vadd.f32 %v1300, %v1534
      %v1551 = vadd.f32 %v1301, %v1539
      %v1552 = vadd.f32 %v1302, %v1542
      %v1553 = vld [vmem:[%s1303] sm:$0xf]
      %v1554 = vld [vmem:[%s1303 + $0x10] sm:$0x1]
      %v1555 = vld [vmem:[%s1303 + $0x20] sm:$0xf]
      %v1556 = vld [vmem:[%s1303 + $0x30] sm:$0x1]
      %v1557 = vld [vmem:[%s1303 + $0x40] sm:$0xf]
      %v1558 = vld [vmem:[%s1303 + $0x50] sm:$0x1]
      %v1559 = vld [vmem:[%s1303 + $0x60] sm:$0xf]
      %v1560 = vld [vmem:[%s1303 + $0x70] sm:$0x1]
      %v1561 = vld [vmem:[%s1303 + $0x80] sm:$0xf]
      %v1562 = vld [vmem:[%s1303 + $0x90] sm:$0x1]
      %v1563 = vld [vmem:[%s1303 + $0xa0] sm:$0xf]
      %v1564 = vld [vmem:[%s1303 + $0xb0] sm:$0x1]
      %v1565 = vld [vmem:[%s1303 + $0xc0] sm:$0xf]
      %v1566 = vld [vmem:[%s1303 + $0xd0] sm:$0x1]
      %v1567 = vld [vmem:[%s1303 + $0xe0] sm:$0xf]
      %v1568 = vld [vmem:[%s1303 + $0xf0] sm:$0x1]
      %v1570 = vshrl.u32 %v1553, 16
      %v1572 = vrot.slane %v1570, 4
      %v1573 = vshll.u32 %v1553, 16
      %v1575 = vrot.slane %v1573, 5
      %v1576 = vor.u32 %v1572, %v1575
      %v1577 = vrot.slane %v1576, 4
      %v1579 = vshll.u32 %v1554, 16
      %v1581 = vrot.slane %v1579, 5
      %v1582 = vsel %vm362, %v1577, %v1581
      %v1584 = vshrl.u32 %v1555, 16
      %v1586 = vrot.slane %v1584, 4
      %v1587 = vshll.u32 %v1555, 16
      %v1589 = vrot.slane %v1587, 5
      %v1590 = vor.u32 %v1586, %v1589
      %v1591 = vrot.slane %v1590, 4
      %v1593 = vshll.u32 %v1556, 16
      %v1595 = vrot.slane %v1593, 5
      %v1596 = vsel %vm362, %v1591, %v1595
      %v1598 = vshrl.u32 %v1557, 16
      %v1600 = vrot.slane %v1598, 4
      %v1601 = vshll.u32 %v1557, 16
      %v1603 = vrot.slane %v1601, 5
      %v1604 = vor.u32 %v1600, %v1603
      %v1605 = vrot.slane %v1604, 4
      %v1607 = vshll.u32 %v1558, 16
      %v1609 = vrot.slane %v1607, 5
      %v1610 = vsel %vm362, %v1605, %v1609
      %v1612 = vshrl.u32 %v1559, 16
      %v1614 = vrot.slane %v1612, 4
      %v1615 = vshll.u32 %v1559, 16
      %v1617 = vrot.slane %v1615, 5
      %v1618 = vor.u32 %v1614, %v1617
      %v1619 = vrot.slane %v1618, 4
      %v1621 = vshll.u32 %v1560, 16
      %v1623 = vrot.slane %v1621, 5
      %v1624 = vsel %vm362, %v1619, %v1623
      %v1626 = vshrl.u32 %v1561, 16
      %v1628 = vrot.slane %v1626, 4
      %v1629 = vshll.u32 %v1561, 16
      %v1631 = vrot.slane %v1629, 5
      %v1632 = vor.u32 %v1628, %v1631
      %v1633 = vrot.slane %v1632, 4
      %v1635 = vshll.u32 %v1562, 16
      %v1637 = vrot.slane %v1635, 5
      %v1638 = vsel %vm362, %v1633, %v1637
      %v1640 = vshrl.u32 %v1563, 16
      %v1642 = vrot.slane %v1640, 4
      %v1643 = vshll.u32 %v1563, 16
      %v1645 = vrot.slane %v1643, 5
      %v1646 = vor.u32 %v1642, %v1645
      %v1647 = vrot.slane %v1646, 4
      %v1649 = vshll.u32 %v1564, 16
      %v1651 = vrot.slane %v1649, 5
      %v1652 = vsel %vm362, %v1647, %v1651
      %v1654 = vshrl.u32 %v1565, 16
      %v1656 = vrot.slane %v1654, 4
      %v1657 = vshll.u32 %v1565, 16
      %v1659 = vrot.slane %v1657, 5
      %v1660 = vor.u32 %v1656, %v1659
      %v1661 = vrot.slane %v1660, 4
      %v1663 = vshll.u32 %v1566, 16
      %v1665 = vrot.slane %v1663, 5
      %v1666 = vsel %vm362, %v1661, %v1665
      %v1668 = vshrl.u32 %v1567, 16
      %v1670 = vrot.slane %v1668, 4
      %v1671 = vshll.u32 %v1567, 16
      %v1673 = vrot.slane %v1671, 5
      %v1674 = vor.u32 %v1670, %v1673
      %v1675 = vrot.slane %v1674, 4
      %v1677 = vshll.u32 %v1568, 16
      %v1679 = vrot.slane %v1677, 5
      %v1680 = vsel %vm362, %v1675, %v1679
      %v1681 = vld [vmem:[%s248 + $0x200] sm:$0xf]
      %v1682 = vld [vmem:[%s248 + $0x204] sm:$0xf]
      %v1683 = vld [vmem:[%s248 + $0x208] sm:$0xf]
      %v1684 = vld [vmem:[%s248 + $0x20c] sm:$0xf]
      %v1685 = vld [vmem:[%s248 + $0x210] sm:$0xf]
      %v1686 = vld [vmem:[%s248 + $0x214] sm:$0xf]
      %v1687 = vld [vmem:[%s248 + $0x218] sm:$0xf]
      %v1688 = vld [vmem:[%s248 + $0x21c] sm:$0xf]
      %v1689 = vld [vmem:[%s248 + $0x220] sm:$0xf]
      %v1690 = vld [vmem:[%s248 + $0x224] sm:$0xf]
      %v1691 = vld [vmem:[%s248 + $0x228] sm:$0xf]
      %v1692 = vld [vmem:[%s248 + $0x22c] sm:$0xf]
      %v1693 = vld [vmem:[%s248 + $0x230] sm:$0xf]
      %v1694 = vld [vmem:[%s248 + $0x234] sm:$0xf]
      %v1695 = vld [vmem:[%s248 + $0x238] sm:$0xf]
      %v1696 = vld [vmem:[%s248 + $0x23c] sm:$0xf]
      %v1697 = vunpack.c.l.b16 %v1582
      %v1698 = vunpack.c.l.b16 %v1596
      %v1699 = vunpack.c.l.b16 %v1610
      %v1700 = vunpack.c.l.b16 %v1624
      %v1701 = vunpack.c.l.b16 %v1638
      %v1702 = vunpack.c.l.b16 %v1652
      %v1703 = vunpack.c.l.b16 %v1666
      %v1704 = vunpack.c.l.b16 %v1680
      %v1705 = vpack.c.b16 %v1698, %v1697
      %v1706 = vpack.c.b16 %v1700, %v1699
      %v1707 = vpack.c.b16 %v1702, %v1701
      %v1708 = vpack.c.b16 %v1704, %v1703
      %v1729 = vunpack.c.l.b16 %v1681
      %v1730 = vunpack.c.l.b16 %v1682
      %v1731 = vunpack.c.l.b16 %v1683
      %v1732 = vunpack.c.l.b16 %v1684
      %v1733 = vunpack.c.l.b16 %v1685
      %v1734 = vunpack.c.l.b16 %v1686
      %v1735 = vunpack.c.l.b16 %v1687
      %v1736 = vunpack.c.l.b16 %v1688
      %v1737 = vunpack.c.l.b16 %v1689
      %v1738 = vunpack.c.l.b16 %v1690
      %v1739 = vunpack.c.l.b16 %v1691
      %v1740 = vunpack.c.l.b16 %v1692
      %v1741 = vunpack.c.l.b16 %v1693
      %v1742 = vunpack.c.l.b16 %v1694
      %v1743 = vunpack.c.l.b16 %v1695
      %v1744 = vunpack.c.l.b16 %v1696
      %v1745 = vpack.c.b16 %v1730, %v1729
      %v1746 = vpack.c.b16 %v1732, %v1731
      %v1747 = vpack.c.b16 %v1734, %v1733
      %v1748 = vpack.c.b16 %v1736, %v1735
      %v1749 = vpack.c.b16 %v1738, %v1737
      %v1750 = vpack.c.b16 %v1740, %v1739
      %v1751 = vpack.c.b16 %v1742, %v1741
      %v1752 = vpack.c.b16 %v1744, %v1743
      %1761 = vmatprep.subr.bf16.mxu0 0
      %1762 = vmatpush1.bf16.msra.mxu0 %v1745
      %1763 = vmatprep.subr.bf16.mxu0 0
      %1764 = vmatpush1.bf16.msra.mxu0 %v1746
      %1765 = vmatprep.subr.bf16.mxu0 0
      %1766 = vmatpush1.bf16.msra.mxu0 %v1747
      %1767 = vmatprep.subr.bf16.mxu0 0
      %1768 = vmatpush1.bf16.msra.mxu0 %v1748
      %1769 = vmatprep.subr.bf16.mxu0 0
      %1770 = vmatpush1.bf16.msra.mxu0 %v1749
      %1771 = vmatprep.subr.bf16.mxu0 0
      %1772 = vmatpush1.bf16.msra.mxu0 %v1750
      %1773 = vmatprep.subr.bf16.mxu0 0
      %1774 = vmatpush1.bf16.msra.mxu0 %v1751
      %1775 = vmatprep.subr.bf16.mxu0 0
      %1776 = vmatpush1.bf16.msra.mxu0 %v1752
      %1777 = vmatprep.subr.bf16.mxu0 0
      %1778 = vmatpush1.bf16.msra.mxu0 0
      %1779 = vmatprep.subr.bf16.mxu0 0
      %1780 = vmatpush1.bf16.msra.mxu0 0
      %1781 = vmatprep.subr.bf16.mxu0 0
      %1782 = vmatpush1.bf16.msra.mxu0 0
      %1783 = vmatprep.subr.bf16.mxu0 0
      %1784 = vmatpush1.bf16.msra.mxu0 0
      %1785 = vmatprep.subr.bf16.mxu0 0
      %1786 = vmatpush1.bf16.msra.mxu0 0
      %1787 = vmatprep.subr.bf16.mxu0 0
      %1788 = vmatpush1.bf16.msra.mxu0 0
      %1789 = vmatprep.subr.bf16.mxu0 0
      %1790 = vmatpush1.bf16.msra.mxu0 0
      %1791 = vmatprep.subr.bf16.mxu0 0
      %1792 = vmatpush1.bf16.msra.mxu0 0
      %1793 = vmatprep.mubr.bf16.mxu0 0
      %1794 = vmatmul.mubr.bf16.gmra.mrb[0].mxu0 %v1705
      %v1795 = vpop.f32.mrb[0].mxu0
      %v1796 = vadd.f32 0.0, %v1795
      %v1797 = vpop.f32.mrb[0].mxu0
      %v1798 = vpop.f32.mrb[0].mxu0
      %v1799 = vadd.f32 0.0, %v1798
      %v1800 = vpop.f32.mrb[0].mxu0
      %1801 = vmatprep.mubr.bf16.mxu0 0
      %1802 = vmatmul.mubr.bf16.gmra.mrb[0].mxu0 %v1706
      %v1803 = vpop.f32.mrb[0].mxu0
      %v1804 = vadd.f32 0.0, %v1803
      %v1805 = vpop.f32.mrb[0].mxu0
      %v1806 = vpop.f32.mrb[0].mxu0
      %v1807 = vadd.f32 0.0, %v1806
      %v1808 = vpop.f32.mrb[0].mxu0
      %1809 = vmatprep.mubr.bf16.mxu0 0
      %1810 = vmatmul.mubr.bf16.gmra.mrb[0].mxu0 %v1707
      %v1811 = vpop.f32.mrb[0].mxu0
      %v1812 = vadd.f32 0.0, %v1811
      %v1813 = vpop.f32.mrb[0].mxu0
      %v1814 = vpop.f32.mrb[0].mxu0
      %v1815 = vadd.f32 0.0, %v1814
      %v1816 = vpop.f32.mrb[0].mxu0
      %1817 = vmatprep.mubr.bf16.mxu0 0
      %1818 = vmatmul.mubr.bf16.gmra.mrb[0].mxu0 %v1708
      %v1819 = vpop.f32.mrb[0].mxu0
      %v1820 = vadd.f32 0.0, %v1819
      %v1821 = vpop.f32.mrb[0].mxu0
      %v1822 = vpop.f32.mrb[0].mxu0
      %v1823 = vadd.f32 0.0, %v1822
      %v1824 = vpop.f32.mrb[0].mxu0
      %1825 = vdwg.mxu0
      %v1826 = vadd.f32 %v1545, %v1796
      %v1827 = vadd.f32 %v1546, %v1799
      %v1828 = vadd.f32 %v1547, %v1804
      %v1829 = vadd.f32 %v1548, %v1807
      %v1830 = vadd.f32 %v1549, %v1812
      %v1831 = vadd.f32 %v1550, %v1815
      %v1832 = vadd.f32 %v1551, %v1820
      %v1833 = vadd.f32 %v1552, %v1823
      %v1834 = vadd.f32 %v1826, %v1827
      %v1835 = vadd.f32 %v1834, %v1828
      %v1836 = vadd.f32 %v1835, %v1829
      %v1837 = vadd.f32 %v1836, %v1830
      %v1838 = vadd.f32 %v1837, %v1831
      %v1839 = vadd.f32 %v1838, %v1832
      %v1840 = vadd.f32 %v1839, %v1833
      %v1841 = vrot.slane %v1840, 4
      %v1842 = vadd.f32 %v1840, %v1841
      %v1843 = vrot.slane %v1842, 2
      %v1844 = vadd.f32 %v1842, %v1843
      %v1845 = vrot.slane %v1844, 1
      %v1846 = vadd.f32 %v1844, %v1845
      %v1847 = vmul.f32 %v1826, %v1826
      %v1848 = vmul.f32 %v1827, %v1827
      %v1849 = vmul.f32 %v1828, %v1828
      %v1850 = vmul.f32 %v1829, %v1829
      %v1851 = vmul.f32 %v1830, %v1830
      %v1852 = vmul.f32 %v1831, %v1831
      %v1853 = vmul.f32 %v1832, %v1832
      %v1854 = vmul.f32 %v1833, %v1833
      %v1855 = vadd.f32 %v1847, %v1848
      %v1856 = vadd.f32 %v1855, %v1849
      %v1857 = vadd.f32 %v1856, %v1850
      %v1858 = vadd.f32 %v1857, %v1851
      %v1859 = vadd.f32 %v1858, %v1852
      %v1860 = vadd.f32 %v1859, %v1853
      %v1861 = vadd.f32 %v1860, %v1854
      %v1862 = vrot.slane %v1861, 4
      %v1863 = vadd.f32 %v1861, %v1862
      %v1864 = vrot.slane %v1863, 2
      %v1865 = vadd.f32 %v1863, %v1864
      %v1866 = vrot.slane %v1865, 1
      %v1867 = vadd.f32 %v1865, %v1866
      %v1868 = vmul.f32 %v1846, 0.015625
      %v1869 = vmul.f32 %v1867, 0.015625
      %v1870 = vmul.f32 %v1868, %v1868
      %v1871 = vsub.f32 %v1869, %v1870
      %v1872 = vmax.f32 %v1871, 0.0
      %v1873 = vsub.f32 %v1826, %v1868
      %v1874 = vsub.f32 %v1827, %v1868
      %v1875 = vsub.f32 %v1828, %v1868
      %v1876 = vsub.f32 %v1829, %v1868
      %v1877 = vsub.f32 %v1830, %v1868
      %v1878 = vsub.f32 %v1831, %v1868
      %v1879 = vsub.f32 %v1832, %v1868
      %v1880 = vsub.f32 %v1833, %v1868
      %v1881 = vadd.f32 %v1872, 1e-05
      %v1882 = vrsqrt.pop %v1881
      %v1883 = vmul.f32 %v1873, %v1882
      %v1884 = vmul.f32 %v1874, %v1882
      %v1885 = vmul.f32 %v1875, %v1882
      %v1886 = vmul.f32 %v1876, %v1882
      %v1887 = vmul.f32 %v1877, %v1882
      %v1888 = vmul.f32 %v1878, %v1882
      %v1889 = vmul.f32 %v1879, %v1882
      %v1890 = vmul.f32 %v1880, %v1882
      %v1891 = vld [vmem:[%s251] sm:$0x1]
      %v1893 = vlaneseq
      %v1894 = vshrl.u32 %v1893, 7
      %v1895 = vsub.s32 0, %v1894
      %v1896 = vrot.slane %v1891, %v1895
      %v1898 = vmul.f32 %v1883, %v1896
      %v1899 = vmul.f32 %v1884, %v1896
      %v1900 = vmul.f32 %v1885, %v1896
      %v1901 = vmul.f32 %v1886, %v1896
      %v1902 = vmul.f32 %v1887, %v1896
      %v1903 = vmul.f32 %v1888, %v1896
      %v1904 = vmul.f32 %v1889, %v1896
      %v1905 = vmul.f32 %v1890, %v1896
      %v1906 = vld [vmem:[%s254] sm:$0x1]
      %v1908 = vlaneseq
      %v1909 = vshrl.u32 %v1908, 7
      %v1910 = vsub.s32 0, %v1909
      %v1911 = vrot.slane %v1906, %v1910
      %v1913 = vadd.f32 %v1898, %v1911
      %v1914 = vadd.f32 %v1899, %v1911
      %v1915 = vadd.f32 %v1900, %v1911
      %v1916 = vadd.f32 %v1901, %v1911
      %v1917 = vadd.f32 %v1902, %v1911
      %v1918 = vadd.f32 %v1903, %v1911
      %v1919 = vadd.f32 %v1904, %v1911
      %v1920 = vadd.f32 %v1905, %v1911
      %v1921 = vmax.f32 %v1913, 0.0
      %v1922 = vmax.f32 %v1914, 0.0
      %v1923 = vmax.f32 %v1915, 0.0
      %v1924 = vmax.f32 %v1916, 0.0
      %v1925 = vmax.f32 %v1917, 0.0
      %v1926 = vmax.f32 %v1918, 0.0
      %v1927 = vmax.f32 %v1919, 0.0
      %v1928 = vmax.f32 %v1920, 0.0
      %v1929 = vpack.c.bf16 %v1921, %v1921
      %v1930 = vpack.c.bf16 %v1922, %v1922
      %v1931 = vpack.c.bf16 %v1923, %v1923
      %v1932 = vpack.c.bf16 %v1924, %v1924
      %v1933 = vpack.c.bf16 %v1925, %v1925
      %v1934 = vpack.c.bf16 %v1926, %v1926
      %v1935 = vpack.c.bf16 %v1927, %v1927
      %v1936 = vpack.c.bf16 %v1928, %v1928
      %1937 = vst [vmem:[%s262] sm:$0xf] 0
      %1938 = vst [vmem:[%s262 + $0x4] sm:$0x1] 0
      %1939 = vst [vmem:[%s262 + $0x8] sm:$0xf] 0
      %1940 = vst [vmem:[%s262 + $0xc] sm:$0x1] 0
      %1941 = vst [vmem:[%s262 + $0x10] sm:$0xf] 0
      %1942 = vst [vmem:[%s262 + $0x14] sm:$0x1] 0
      %1943 = vst [vmem:[%s262 + $0x18] sm:$0xf] 0
      %1944 = vst [vmem:[%s262 + $0x1c] sm:$0x1] 0
      %1945 = vst [vmem:[%s262 + $0x20] sm:$0xf] 0
      %1946 = vst [vmem:[%s262 + $0x24] sm:$0x1] 0
      %1947 = vst [vmem:[%s262 + $0x28] sm:$0xf] 0
      %1948 = vst [vmem:[%s262 + $0x2c] sm:$0x1] 0
      %1949 = vst [vmem:[%s262 + $0x30] sm:$0xf] 0
      %1950 = vst [vmem:[%s262 + $0x34] sm:$0x1] 0
      %1951 = vst [vmem:[%s262 + $0x38] sm:$0xf] 0
      %1952 = vst [vmem:[%s262 + $0x3c] sm:$0x1] 0
      %1953 = vst [vmem:[%s262 + $0x40] sm:$0xf] 0
      %1954 = vst [vmem:[%s262 + $0x44] sm:$0x1] 0
      %1955 = vst [vmem:[%s262 + $0x48] sm:$0xf] 0
      %1956 = vst [vmem:[%s262 + $0x4c] sm:$0x1] 0
      %v1965 = vunpack.c.l.b16 %v1929
      %v1966 = vunpack.c.l.b16 %v1930
      %v1967 = vunpack.c.l.b16 %v1931
      %v1968 = vunpack.c.l.b16 %v1932
      %v1969 = vunpack.c.l.b16 %v1933
      %v1970 = vunpack.c.l.b16 %v1934
      %v1971 = vunpack.c.l.b16 %v1935
      %v1972 = vunpack.c.l.b16 %v1936
      %v1973 = vpack.c.b16 %v1965, %v1965
      %v1974 = vpack.c.b16 %v1966, %v1966
      %v1975 = vpack.c.b16 %v1967, %v1967
      %v1976 = vpack.c.b16 %v1968, %v1968
      %v1977 = vpack.c.b16 %v1969, %v1969
      %v1978 = vpack.c.b16 %v1970, %v1970
      %v1979 = vpack.c.b16 %v1971, %v1971
      %v1980 = vpack.c.b16 %v1972, %v1972
      %v1982 = vshrl.u32 %v1973, 16
      %v1984 = vrot.slane %v1982, 7
      %v1985 = vshll.u32 %v1973, 16
      %v1987 = vor.u32 %v1984, %v1985
      %v1988 = vrot.slane %v1984, 4
      %v1990 = vshrl.u32 %v1974, 16
      %v1992 = vrot.slane %v1990, 7
      %v1993 = vshll.u32 %v1974, 16
      %v1995 = vor.u32 %v1992, %v1993
      %v1996 = vrot.slane %v1992, 4
      %v1998 = vshrl.u32 %v1975, 16
      %v2000 = vrot.slane %v1998, 7
      %v2001 = vshll.u32 %v1975, 16
      %v2003 = vor.u32 %v2000, %v2001
      %v2004 = vrot.slane %v2000, 4
      %v2006 = vshrl.u32 %v1976, 16
      %v2008 = vrot.slane %v2006, 7
      %v2009 = vshll.u32 %v1976, 16
      %v2011 = vor.u32 %v2008, %v2009
      %v2012 = vrot.slane %v2008, 4
      %v2014 = vshrl.u32 %v1977, 16
      %v2016 = vrot.slane %v2014, 7
      %v2017 = vshll.u32 %v1977, 16
      %v2019 = vor.u32 %v2016, %v2017
      %v2020 = vrot.slane %v2016, 4
      %v2022 = vshrl.u32 %v1978, 16
      %v2024 = vrot.slane %v2022, 7
      %v2025 = vshll.u32 %v1978, 16
      %v2027 = vor.u32 %v2024, %v2025
      %v2028 = vrot.slane %v2024, 4
      %v2030 = vshrl.u32 %v1979, 16
      %v2032 = vrot.slane %v2030, 7
      %v2033 = vshll.u32 %v1979, 16
      %v2035 = vor.u32 %v2032, %v2033
      %v2036 = vrot.slane %v2032, 4
      %v2038 = vshrl.u32 %v1980, 16
      %v2040 = vrot.slane %v2038, 7
      %v2041 = vshll.u32 %v1980, 16
      %v2043 = vor.u32 %v2040, %v2041
      %v2044 = vrot.slane %v2040, 4
      %s2061 = scalar_lea.vmem %s262, 8
      %vm2062 = vcmask 1043456
      %vm2063 = vsmask.f32 7938
      %vm2064 = vmand %vm2062, %vm2063
      %v2065 = vld [vmem:[%s2061] sm:$0xf]
      %v2066 = vsel %vm2064, %v1987, %v2065
      %2067 = vst [vmem:[%s2061] sm:$0xf] %v2066
      %vm2068 = vcmask 1040384
      %vm2069 = vsmask.f32 256
      %vm2070 = vmand %vm2068, %vm2069
      %v2071 = vld [vmem:[%s2061 + $0x4] sm:$0x1]
      %v2072 = vsel %vm2070, %v1988, %v2071
      %2073 = vst [vmem:[%s2061 + $0x4] sm:$0x1] %v2072
      %v2074 = vld [vmem:[%s2061 + $0x8] sm:$0xf]
      %v2075 = vsel %vm2064, %v1995, %v2074
      %2076 = vst [vmem:[%s2061 + $0x8] sm:$0xf] %v2075
      %v2077 = vld [vmem:[%s2061 + $0xc] sm:$0x1]
      %v2078 = vsel %vm2070, %v1996, %v2077
      %2079 = vst [vmem:[%s2061 + $0xc] sm:$0x1] %v2078
      %v2080 = vld [vmem:[%s2061 + $0x10] sm:$0xf]
      %v2081 = vsel %vm2064, %v2003, %v2080
      %2082 = vst [vmem:[%s2061 + $0x10] sm:$0xf] %v2081
      %v2083 = vld [vmem:[%s2061 + $0x14] sm:$0x1]
      %v2084 = vsel %vm2070, %v2004, %v2083
      %2085 = vst [vmem:[%s2061 + $0x14] sm:$0x1] %v2084
      %v2086 = vld [vmem:[%s2061 + $0x18] sm:$0xf]
      %v2087 = vsel %vm2064, %v2011, %v2086
      %2088 = vst [vmem:[%s2061 + $0x18] sm:$0xf] %v2087
      %v2089 = vld [vmem:[%s2061 + $0x1c] sm:$0x1]
      %v2090 = vsel %vm2070, %v2012, %v2089
      %2091 = vst [vmem:[%s2061 + $0x1c] sm:$0x1] %v2090
      %v2092 = vld [vmem:[%s2061 + $0x20] sm:$0xf]
      %v2093 = vsel %vm2064, %v2019, %v2092
      %2094 = vst [vmem:[%s2061 + $0x20] sm:$0xf] %v2093
      %v2095 = vld [vmem:[%s2061 + $0x24] sm:$0x1]
      %v2096 = vsel %vm2070, %v2020, %v2095
      %2097 = vst [vmem:[%s2061 + $0x24] sm:$0x1] %v2096
      %v2098 = vld [vmem:[%s2061 + $0x28] sm:$0xf]
      %v2099 = vsel %vm2064, %v2027, %v2098
      %2100 = vst [vmem:[%s2061 + $0x28] sm:$0xf] %v2099
      %v2101 = vld [vmem:[%s2061 + $0x2c] sm:$0x1]
      %v2102 = vsel %vm2070, %v2028, %v2101
      %2103 = vst [vmem:[%s2061 + $0x2c] sm:$0x1] %v2102
      %v2104 = vld [vmem:[%s2061 + $0x30] sm:$0xf]
      %v2105 = vsel %vm2064, %v2035, %v2104
      %2106 = vst [vmem:[%s2061 + $0x30] sm:$0xf] %v2105
      %v2107 = vld [vmem:[%s2061 + $0x34] sm:$0x1]
      %v2108 = vsel %vm2070, %v2036, %v2107
      %2109 = vst [vmem:[%s2061 + $0x34] sm:$0x1] %v2108
      %v2110 = vld [vmem:[%s2061 + $0x38] sm:$0xf]
      %v2111 = vsel %vm2064, %v2043, %v2110
      %2112 = vst [vmem:[%s2061 + $0x38] sm:$0xf] %v2111
      %v2113 = vld [vmem:[%s2061 + $0x3c] sm:$0x1]
      %v2114 = vsel %vm2070, %v2044, %v2113
      %2115 = vst [vmem:[%s2061 + $0x3c] sm:$0x1] %v2114
      %p2116 = scmp.lt.s32.totalorder %s19, 1
      %s2117 = scalar_select %p2116, %s19, 1
      %p2118 = scmp.lt.s32.totalorder %s20, 0
      %s2119 = scalar_select %p2118, %s20, 0
      %s2120 = smul.addr %s2117, 20
      %s2121 = sadd.s32 %s2119, %s2120
      %s2122 = smul.addr %s2121, 4
      %s2123 = scalar_lea.vmem %s4, %s2122
      // Predicated region
      $region37: #{basic_block_ins_forward.3} parent=35 // pred_check
        %p2124 = pneg %p151
      $region38: #{basic_block_ins_forward.3} parent=35 // pred_check_branch
        %2126 = sbr.rel (%p2124) target = $region40
      $region39: #{basic_block_ins_forward.3} parent=35 // pred_region
        _
      $region40: #{basic_block_ins_forward.3} parent=35 // pred_fallthru
        _
    $region36: #{basic_block_ins_forward.3} parent=5 // pred_fallthru
      _
    %p2127 = scmp.le.s32.totalorder 2, %s10
    // Predicated region
    $region41: #{basic_block_ins_forward.3} parent=5 // pred_check
      %p2128 = pneg %p2127
    $region42: #{basic_block_ins_forward.3} parent=5 // pred_check_branch
      %2130 = sbr.rel (%p2128) target = $region44
    $region43: #{basic_block_ins_forward.3} parent=5 // pred_region
      %s2131 = ssub.s32 %s10, 2
      // Predicated region
      $region45: #{basic_block_ins_forward.3} parent=43 // pred_check
        %p2132 = pneg %p157
      $region46: #{basic_block_ins_forward.3} parent=43 // pred_check_branch
        %2134 = sbr.rel (%p2132) target = $region48
      $region47: #{basic_block_ins_forward.3} parent=43 // pred_region
        %p2135 = scmp.lt.s32.totalorder %s21, 1
        %s2136 = scalar_select %p2135, %s21, 1
        %p2137 = scmp.lt.s32.totalorder %s22, 0
        %s2138 = scalar_select %p2137, %s22, 0
        %s2139 = smul.addr %s2136, 20
        %s2140 = sadd.s32 %s2138, %s2139
        %s2141 = smul.addr %s2140, 4
        %s2142 = scalar_lea.vmem %s4, %s2141
      $region48: #{basic_block_ins_forward.3} parent=43 // pred_fallthru
        _
    $region44: #{basic_block_ins_forward.3} parent=5 // pred_fallthru
      _
  $region6: #{basic_block_ins_forward.3} parent=0 // loop_footer
    %s14 = sadd.s32 1, %s10
  $region7: #{basic_block_ins_forward.3} parent=0 // loop_footer_branch
    %9 = sbr.rel target = $region3
  $region8: #{basic_block_ins_forward.3} parent=0 // loop_exit
    _

// kernel: basic_block_ins_forward.5
$region0: #{basic_block_ins_forward.5}
  #allocation0 [shape = 'u32[]', space=smem, size = 0x4, offset = 0x4, fixed_abs, tag = 'smem constant byte address 0x4 - core index']
  #allocation1 [shape = 'u32[144,128]{1,0:T(1,128)}', space=vmem, size = 0x12000, scoped, tag = 'internal scratch']
  #allocation2 [shape = 'bf16[10,8,384]{2,1,0:T(8,128)(2,1)}', space=vmem, size = 0xf000, scoped, tag = 'scratch operand']
  %s0 = inlined_call_operand.vmem [shape: bf16[2,10,10,128], index: 0, kind: input, shape index: {}]
  %s1 = inlined_call_operand.vmem [shape: bf16[3,384,128], index: 1, kind: input, shape index: {}]
  %s2 = inlined_call_operand.vmem [shape: f32[1,128], index: 2, kind: input, shape index: {}]
  %s3 = inlined_call_operand.vmem [shape: f32[1,128], index: 3, kind: input, shape index: {}]
  %s4 = inlined_call_operand.vmem [shape: bf16[2,8,8,128], index: 4, kind: input, shape index: {}]
  %s5 = inlined_call_operand.vmem [shape: bf16[2,8,8,128], index: 5, kind: output, shape index: {}]
  %s6 = sld [smem:[#allocation0]]
  $region53: #{basic_block_ins_forward.5} parent=0
    _
  %s8 = ssub.s32 1, %s6
  %s9 = scalar_select 0, %s8, %s6
  loop: start=0, step=1, limit=4
  $region2: #{basic_block_ins_forward.5} parent=0 // loop_pre_header
    _
  $region3: #{basic_block_ins_forward.5} parent=0 // loop_header
    %s11 = sphi 0, %s15
    %p12 = scmp.ge.s32.totalorder %s11, 4
    %s18 = sphi 0, %s30
    %s19 = sphi 0, %s26
    %s20 = sphi 0, %s18
    %s21 = sphi 0, %s19
    %s22 = sphi 0, %s20
    %s23 = sphi 0, %s21
    %s33 = sphi 0, %s35
    %s36 = sphi 0, %s33
    %s37 = sphi 0, %s36
    %s53 = sphi 0, %s37
    %s59 = sphi 0, %s61
    %s62 = sphi 0, %s59
    %s63 = sphi 0, %s62
    %s79 = sphi 0, %s63
    %s85 = sphi 0, %s87
    %s88 = sphi 0, %s85
    %s89 = sphi 0, %s88
    %s105 = sphi 0, %s89
    %s111 = sphi 0, %s113
    %s114 = sphi 0, %s111
    %s115 = sphi 0, %s114
    %s131 = sphi 0, %s115
    %s139 = sphi 0, %s141
    %s142 = sphi 0, %s139
    %s143 = sphi 0, %s142
    %s159 = sphi 0, %s143
    %s167 = sphi 0, %s169
    %s170 = sphi 0, %s167
    %s171 = sphi 0, %s170
    %s187 = sphi 0, %s171
  $region4: #{basic_block_ins_forward.5} parent=0 // loop_header_branch
    %14 = sbr.rel (%p12) target = $region8
  $region5: #{basic_block_ins_forward.5} parent=0 // loop_body
    %s16 = ssub.s32 %s11, 1
    %s17 = ssub.s32 %s11, 2
    %s24 = sadd.s32 1, %s19
    %p25 = scmp.ge.s32.totalorder %s24, 1
    %s26 = scalar_select %p25, 0, %s24
    %s27 = sadd.s32 1, %s18
    %s28 = scalar_select %p25, %s27, %s18
    %p29 = scmp.ge.s32.totalorder %s28, 2
    %s30 = scalar_select %p29, 0, %s28
    %s31 = ssub.s32 %s18, %s30
    %p32 = scmp.eq.s32.totalorder %s31, 0
    %s34 = sadd.s32 %s33, 1
    %s35 = scalar_select %p32, %s33, %s34
    %p38 = pneg %p32
    %p39 = scmp.eq.s32.totalorder %s11, 1
    %p40 = por %p38, %p39
    %p41 = scmp.ne.s32.totalorder %s33, %s36
    %p42 = scmp.eq.s32.totalorder %s11, 0
    %p43 = por %p41, %p42
    %p44 = scmp.ne.s32.totalorder %s33, %s36
    %p45 = scmp.eq.s32.totalorder %s16, 1
    %p46 = por %p44, %p45
    %p47 = scmp.ne.s32.totalorder %s36, %s37
    %p48 = scmp.eq.s32.totalorder %s16, 0
    %p49 = por %p47, %p48
    %p50 = scmp.ne.s32.totalorder %s36, %s37
    %p51 = scmp.eq.s32.totalorder %s17, 1
    %p52 = por %p50, %p51
    %p54 = scmp.ne.s32.totalorder %s37, %s53
    %p55 = scmp.eq.s32.totalorder %s17, 0
    %p56 = por %p54, %p55
    %s57 = ssub.s32 %s19, %s26
    %p58 = scmp.eq.s32.totalorder %s57, 0
    %s60 = sadd.s32 %s59, 1
    %s61 = scalar_select %p58, %s59, %s60
    %p64 = pneg %p58
    %p65 = scmp.eq.s32.totalorder %s11, 1
    %p66 = por %p64, %p65
    %p67 = scmp.ne.s32.totalorder %s59, %s62
    %p68 = scmp.eq.s32.totalorder %s11, 0
    %p69 = por %p67, %p68
    %p70 = scmp.ne.s32.totalorder %s59, %s62
    %p71 = scmp.eq.s32.totalorder %s16, 1
    %p72 = por %p70, %p71
    %p73 = scmp.ne.s32.totalorder %s62, %s63
    %p74 = scmp.eq.s32.totalorder %s16, 0
    %p75 = por %p73, %p74
    %p76 = scmp.ne.s32.totalorder %s62, %s63
    %p77 = scmp.eq.s32.totalorder %s17, 1
    %p78 = por %p76, %p77
    %p80 = scmp.ne.s32.totalorder %s63, %s79
    %p81 = scmp.eq.s32.totalorder %s17, 0
    %p82 = por %p80, %p81
    %s83 = ssub.s32 %s19, %s26
    %p84 = scmp.eq.s32.totalorder %s83, 0
    %s86 = sadd.s32 %s85, 1
    %s87 = scalar_select %p84, %s85, %s86
    %p90 = pneg %p84
    %p91 = scmp.eq.s32.totalorder %s11, 1
    %p92 = por %p90, %p91
    %p93 = scmp.ne.s32.totalorder %s85, %s88
    %p94 = scmp.eq.s32.totalorder %s11, 0
    %p95 = por %p93, %p94
    %p96 = scmp.ne.s32.totalorder %s85, %s88
    %p97 = scmp.eq.s32.totalorder %s16, 1
    %p98 = por %p96, %p97
    %p99 = scmp.ne.s32.totalorder %s88, %s89
    %p100 = scmp.eq.s32.totalorder %s16, 0
    %p101 = por %p99, %p100
    %p102 = scmp.ne.s32.totalorder %s88, %s89
    %p103 = scmp.eq.s32.totalorder %s17, 1
    %p104 = por %p102, %p103
    %p106 = scmp.ne.s32.totalorder %s89, %s105
    %p107 = scmp.eq.s32.totalorder %s17, 0
    %p108 = por %p106, %p107
    %s109 = ssub.s32 %s19, %s26
    %p110 = scmp.eq.s32.totalorder %s109, 0
    %s112 = sadd.s32 %s111, 1
    %s113 = scalar_select %p110, %s111, %s112
    %p116 = pneg %p110
    %p117 = scmp.eq.s32.totalorder %s11, 1
    %p118 = por %p116, %p117
    %p119 = scmp.ne.s32.totalorder %s111, %s114
    %p120 = scmp.eq.s32.totalorder %s11, 0
    %p121 = por %p119, %p120
    %p122 = scmp.ne.s32.totalorder %s111, %s114
    %p123 = scmp.eq.s32.totalorder %s16, 1
    %p124 = por %p122, %p123
    %p125 = scmp.ne.s32.totalorder %s114, %s115
    %p126 = scmp.eq.s32.totalorder %s16, 0
    %p127 = por %p125, %p126
    %p128 = scmp.ne.s32.totalorder %s114, %s115
    %p129 = scmp.eq.s32.totalorder %s17, 1
    %p130 = por %p128, %p129
    %p132 = scmp.ne.s32.totalorder %s115, %s131
    %p133 = scmp.eq.s32.totalorder %s17, 0
    %p134 = por %p132, %p133
    %s135 = ssub.s32 %s18, %s30
    %s136 = ssub.s32 %s19, %s26
    %s137 = sor.u32 %s135, %s136
    %p138 = scmp.eq.s32.totalorder %s137, 0
    %s140 = sadd.s32 %s139, 1
    %s141 = scalar_select %p138, %s139, %s140
    %p144 = pneg %p138
    %p145 = scmp.eq.s32.totalorder %s11, 1
    %p146 = por %p144, %p145
    %p147 = scmp.ne.s32.totalorder %s139, %s142
    %p148 = scmp.eq.s32.totalorder %s11, 0
    %p149 = por %p147, %p148
    %p150 = scmp.ne.s32.totalorder %s139, %s142
    %p151 = scmp.eq.s32.totalorder %s16, 1
    %p152 = por %p150, %p151
    %p153 = scmp.ne.s32.totalorder %s142, %s143
    %p154 = scmp.eq.s32.totalorder %s16, 0
    %p155 = por %p153, %p154
    %p156 = scmp.ne.s32.totalorder %s142, %s143
    %p157 = scmp.eq.s32.totalorder %s17, 1
    %p158 = por %p156, %p157
    %p160 = scmp.ne.s32.totalorder %s143, %s159
    %p161 = scmp.eq.s32.totalorder %s17, 0
    %p162 = por %p160, %p161
    %s163 = ssub.s32 %s18, %s30
    %s164 = ssub.s32 %s19, %s26
    %s165 = sor.u32 %s163, %s164
    %p166 = scmp.eq.s32.totalorder %s165, 0
    %s168 = sadd.s32 %s167, 1
    %s169 = scalar_select %p166, %s167, %s168
    %p172 = pneg %p166
    %p173 = scmp.eq.s32.totalorder %s11, 1
    %p174 = por %p172, %p173
    %p175 = scmp.ne.s32.totalorder %s167, %s170
    %p176 = scmp.eq.s32.totalorder %s11, 0
    %p177 = por %p175, %p176
    %p178 = scmp.ne.s32.totalorder %s167, %s170
    %p179 = scmp.eq.s32.totalorder %s16, 1
    %p180 = por %p178, %p179
    %p181 = scmp.ne.s32.totalorder %s170, %s171
    %p182 = scmp.eq.s32.totalorder %s16, 0
    %p183 = por %p181, %p182
    %p184 = scmp.ne.s32.totalorder %s170, %s171
    %p185 = scmp.eq.s32.totalorder %s17, 1
    %p186 = por %p184, %p185
    %p188 = scmp.ne.s32.totalorder %s171, %s187
    %p189 = scmp.eq.s32.totalorder %s17, 0
    %p190 = por %p188, %p189
    %p191 = scmp.le.s32.totalorder 1, %s11
    %p192 = scmp.lt.s32.totalorder %s11, 3
    %p193 = pnand %p191, %p192
    %p194 = pneg %p193
    // Predicated region
    $region9: #{basic_block_ins_forward.5} parent=5 // pred_check
      _
    $region10: #{basic_block_ins_forward.5} parent=5 // pred_check_branch
      %196 = sbr.rel (%p193) target = $region12
    $region11: #{basic_block_ins_forward.5} parent=5 // pred_region
      %s197 = ssub.s32 %s11, 1
      // Predicated region
      $region13: #{basic_block_ins_forward.5} parent=11 // pred_check
        %p198 = pneg %p75
      $region14: #{basic_block_ins_forward.5} parent=11 // pred_check_branch
        %200 = sbr.rel (%p198) target = $region16
      $region15: #{basic_block_ins_forward.5} parent=11 // pred_region
        %p201 = scmp.lt.s32.totalorder %s21, 0
        %s202 = scalar_select %p201, %s21, 0
        %s203 = smul.addr %s202, 4
        %s204 = scalar_lea.vmem %s1, %s203
      $region16: #{basic_block_ins_forward.5} parent=11 // pred_fallthru
        _
      // Predicated region
      $region17: #{basic_block_ins_forward.5} parent=11 // pred_check
        %p205 = pneg %p101
      $region18: #{basic_block_ins_forward.5} parent=11 // pred_check_branch
        %207 = sbr.rel (%p205) target = $region20
      $region19: #{basic_block_ins_forward.5} parent=11 // pred_region
        %p208 = scmp.lt.s32.totalorder %s21, 0
        %s209 = scalar_select %p208, %s21, 0
        %s210 = scalar_lea.vmem %s2, %s209
      $region20: #{basic_block_ins_forward.5} parent=11 // pred_fallthru
        _
      // Predicated region
      $region21: #{basic_block_ins_forward.5} parent=11 // pred_check
        %p211 = pneg %p127
      $region22: #{basic_block_ins_forward.5} parent=11 // pred_check_branch
        %213 = sbr.rel (%p211) target = $region24
      $region23: #{basic_block_ins_forward.5} parent=11 // pred_region
        %p214 = scmp.lt.s32.totalorder %s21, 0
        %s215 = scalar_select %p214, %s21, 0
        %s216 = scalar_lea.vmem %s3, %s215
      $region24: #{basic_block_ins_forward.5} parent=11 // pred_fallthru
        _
    $region12: #{basic_block_ins_forward.5} parent=5 // pred_fallthru
      _
    %p217 = scmp.lt.s32.totalorder %s11, 2
    // Predicated region
    $region25: #{basic_block_ins_forward.5} parent=5 // pred_check
      %p218 = pneg %p217
    $region26: #{basic_block_ins_forward.5} parent=5 // pred_check_branch
      %220 = sbr.rel (%p218) target = $region28
    $region27: #{basic_block_ins_forward.5} parent=5 // pred_region
      // Predicated region
      $region29: #{basic_block_ins_forward.5} parent=27 // pred_check
        %p221 = pneg %p43
      $region30: #{basic_block_ins_forward.5} parent=27 // pred_check_branch
        %223 = sbr.rel (%p221) target = $region32
      $region31: #{basic_block_ins_forward.5} parent=27 // pred_region
        %p224 = scmp.lt.s32.totalorder %s18, 1
        %s225 = scalar_select %p224, %s18, 1
        %s226 = smul.addr %s225, 20
        %s227 = smul.addr %s226, 4
        %s228 = scalar_lea.vmem %s0, %s227
      $region32: #{basic_block_ins_forward.5} parent=27 // pred_fallthru
        _
      // Predicated region
      $region33: #{basic_block_ins_forward.5} parent=27 // pred_check
        %p229 = pneg %p149
      $region34: #{basic_block_ins_forward.5} parent=27 // pred_check_branch
        %231 = sbr.rel (%p229) target = $region36
      $region35: #{basic_block_ins_forward.5} parent=27 // pred_region
        %p232 = scmp.lt.s32.totalorder %s18, 1
        %s233 = scalar_select %p232, %s18, 1
        %p234 = scmp.lt.s32.totalorder %s19, 0
        %s235 = scalar_select %p234, %s19, 0
        %s236 = smul.addr %s233, 8
        %s237 = sadd.s32 %s235, %s236
        %s238 = smul.addr %s237, 4
        %s239 = scalar_lea.vmem %s4, %s238
      $region36: #{basic_block_ins_forward.5} parent=27 // pred_fallthru
        _
    $region28: #{basic_block_ins_forward.5} parent=5 // pred_fallthru
      _
    %p240 = scmp.le.s32.totalorder 1, %s11
    %p241 = scmp.lt.s32.totalorder %s11, 3
    %p242 = pnand %p240, %p241
    %p243 = pneg %p242
    // Predicated region
    $region37: #{basic_block_ins_forward.5} parent=5 // pred_check
      _
    $region38: #{basic_block_ins_forward.5} parent=5 // pred_check_branch
      %245 = sbr.rel (%p242) target = $region40
    $region39: #{basic_block_ins_forward.5} parent=5 // pred_region
      %s246 = ssub.s32 %s11, 1
      %p247 = scmp.lt.s32.totalorder %s20, 1
      %s248 = scalar_select %p247, %s20, 1
      %s249 = smul.addr %s248, 20
      %s250 = smul.addr %s249, 4
      %s251 = scalar_lea.vmem %s0, %s250
      %p252 = pneg %p49
      %p253 = pneg %p46
      %p254 = scmp.lt.s32.totalorder %s21, 0
      %s255 = scalar_select %p254, %s21, 0
      %s256 = smul.addr %s255, 4
      %s257 = scalar_lea.vmem %s1, %s256
      %p258 = pneg %p75
      %p259 = pneg %p72
      %p260 = scmp.lt.s32.totalorder %s21, 0
      %s261 = scalar_select %p260, %s21, 0
      %s262 = scalar_lea.vmem %s2, %s261
      %p263 = pneg %p101
      %p264 = pneg %p98
      %p265 = scmp.lt.s32.totalorder %s21, 0
      %s266 = scalar_select %p265, %s21, 0
      %s267 = scalar_lea.vmem %s3, %s266
      %p268 = pneg %p127
      %p269 = pneg %p124
      %p270 = scmp.lt.s32.totalorder %s20, 1
      %s271 = scalar_select %p270, %s20, 1
      %p272 = scmp.lt.s32.totalorder %s21, 0
      %s273 = scalar_select %p272, %s21, 0
      %s274 = smul.addr %s271, 8
      %s275 = sadd.s32 %s273, %s274
      %s276 = smul.addr %s275, 4
      %s277 = scalar_lea.vmem %s4, %s276
      %p278 = pneg %p155
      %p279 = pneg %p152
      %p280 = pneg %p183
      %p281 = pneg %p180
      %p282 = scmp.lt.s32.totalorder %s20, 1
      %s283 = scalar_select %p282, %s20, 1
      %p284 = scmp.lt.s32.totalorder %s21, 0
      %s285 = scalar_select %p284, %s21, 0
      %s286 = smul.addr %s283, 8
      %s287 = sadd.s32 %s285, %s286
      %s288 = smul.addr %s287, 4
      %s289 = scalar_lea.vmem %s5, %s288
      %p290 = scmp.lt.s32.totalorder %s20, 1
      %s291 = scalar_select %p290, %s20, 1
      %s292 = smul.addr %s291, 20
      %s293 = smul.addr %s292, 4
      %s294 = scalar_lea.vmem %s0, %s293
      %p295 = scmp.lt.s32.totalorder %s21, 0
      %s296 = scalar_select %p295, %s21, 0
      %s297 = smul.addr %s296, 4
      %s298 = scalar_lea.vmem %s1, %s297
      %p299 = scmp.lt.s32.totalorder %s21, 0
      %s300 = scalar_select %p299, %s21, 0
      %s301 = scalar_lea.vmem %s2, %s300
      %p302 = scmp.lt.s32.totalorder %s21, 0
      %s303 = scalar_select %p302, %s21, 0
      %s304 = scalar_lea.vmem %s3, %s303
      %p305 = scmp.lt.s32.totalorder %s20, 1
      %s306 = scalar_select %p305, %s20, 1
      %p307 = scmp.lt.s32.totalorder %s21, 0
      %s308 = scalar_select %p307, %s21, 0
      %s309 = smul.addr %s306, 8
      %s310 = sadd.s32 %s308, %s309
      %s311 = smul.addr %s310, 4
      %s312 = scalar_lea.vmem %s4, %s311
      %p313 = scmp.lt.s32.totalorder %s20, 1
      %s314 = scalar_select %p313, %s20, 1
      %p315 = scmp.lt.s32.totalorder %s21, 0
      %s316 = scalar_select %p315, %s21, 0
      %s317 = smul.addr %s314, 8
      %s318 = sadd.s32 %s316, %s317
      %s319 = smul.addr %s318, 4
      %s320 = scalar_lea.vmem %s5, %s319
      %v322 = vld [vmem:[%s294] sm:$0xf]
      %v323 = vld [vmem:[%s294 + $0x8] sm:$0xf]
      %v324 = vld [vmem:[%s294 + $0x10] sm:$0xf]
      %v325 = vld [vmem:[%s294 + $0x18] sm:$0xf]
      %v326 = vld [vmem:[%s294 + $0x20] sm:$0xf]
      %v327 = vld [vmem:[%s294 + $0x28] sm:$0xf]
      %v328 = vld [vmem:[%s294 + $0x30] sm:$0xf]
      %v329 = vld [vmem:[%s294 + $0x38] sm:$0xf]
      %v330 = vld [vmem:[%s294 + $0x40] sm:$0xf]
      %v331 = vld [vmem:[%s294 + $0x48] sm:$0xf]
      %332 = vst [vmem:[#allocation2] sm:$0xf] %v322
      %333 = vst [vmem:[#allocation2 + $0xc] sm:$0xf] %v323
      %334 = vst [vmem:[#allocation2 + $0x18] sm:$0xf] %v324
      %335 = vst [vmem:[#allocation2 + $0x24] sm:$0xf] %v325
      %336 = vst [vmem:[#allocation2 + $0x30] sm:$0xf] %v326
      %337 = vst [vmem:[#allocation2 + $0x3c] sm:$0xf] %v327
      %338 = vst [vmem:[#allocation2 + $0x48] sm:$0xf] %v328
      %339 = vst [vmem:[#allocation2 + $0x54] sm:$0xf] %v329
      %340 = vst [vmem:[#allocation2 + $0x60] sm:$0xf] %v330
      %341 = vst [vmem:[#allocation2 + $0x6c] sm:$0xf] %v331
      %v342 = vld [vmem:[%s294] sm:$0xf]
      %v343 = vld [vmem:[%s294 + $0x4] sm:$0x1]
      %v344 = vld [vmem:[%s294 + $0x8] sm:$0xf]
      %v345 = vld [vmem:[%s294 + $0xc] sm:$0x1]
      %v346 = vld [vmem:[%s294 + $0x10] sm:$0xf]
      %v347 = vld [vmem:[%s294 + $0x14] sm:$0x1]
      %v348 = vld [vmem:[%s294 + $0x18] sm:$0xf]
      %v349 = vld [vmem:[%s294 + $0x1c] sm:$0x1]
      %v350 = vld [vmem:[%s294 + $0x20] sm:$0xf]
      %v351 = vld [vmem:[%s294 + $0x24] sm:$0x1]
      %v352 = vld [vmem:[%s294 + $0x28] sm:$0xf]
      %v353 = vld [vmem:[%s294 + $0x2c] sm:$0x1]
      %v354 = vld [vmem:[%s294 + $0x30] sm:$0xf]
      %v355 = vld [vmem:[%s294 + $0x34] sm:$0x1]
      %v356 = vld [vmem:[%s294 + $0x38] sm:$0xf]
      %v357 = vld [vmem:[%s294 + $0x3c] sm:$0x1]
      %v358 = vld [vmem:[%s294 + $0x40] sm:$0xf]
      %v359 = vld [vmem:[%s294 + $0x44] sm:$0x1]
      %v360 = vld [vmem:[%s294 + $0x48] sm:$0xf]
      %v361 = vld [vmem:[%s294 + $0x4c] sm:$0x1]
      %vm362 = vsmask.f32 3328
      %vm363 = vsmask.f32 7440
      %vm364 = vmor %vm362, %vm363
      %v366 = vshrl.u32 %v342, 16
      %v368 = vrot.slane %v366, 4
      %v369 = vshll.u32 %v342, 16
      %v371 = vrot.slane %v369, 5
      %v372 = vor.u32 %v368, %v371
      %v373 = vrot.slane %v372, 4
      %v375 = vshll.u32 %v343, 16
      %v377 = vrot.slane %v375, 5
      %v378 = vsel %vm364, %v373, %v377
      %v380 = vshrl.u32 %v344, 16
      %v382 = vrot.slane %v380, 4
      %v383 = vshll.u32 %v344, 16
      %v385 = vrot.slane %v383, 5
      %v386 = vor.u32 %v382, %v385
      %v387 = vrot.slane %v386, 4
      %v389 = vshll.u32 %v345, 16
      %v391 = vrot.slane %v389, 5
      %v392 = vsel %vm364, %v387, %v391
      %v394 = vshrl.u32 %v346, 16
      %v396 = vrot.slane %v394, 4
      %v397 = vshll.u32 %v346, 16
      %v399 = vrot.slane %v397, 5
      %v400 = vor.u32 %v396, %v399
      %v401 = vrot.slane %v400, 4
      %v403 = vshll.u32 %v347, 16
      %v405 = vrot.slane %v403, 5
      %v406 = vsel %vm364, %v401, %v405
      %v408 = vshrl.u32 %v348, 16
      %v410 = vrot.slane %v408, 4
      %v411 = vshll.u32 %v348, 16
      %v413 = vrot.slane %v411, 5
      %v414 = vor.u32 %v410, %v413
      %v415 = vrot.slane %v414, 4
      %v417 = vshll.u32 %v349, 16
      %v419 = vrot.slane %v417, 5
      %v420 = vsel %vm364, %v415, %v419
      %v422 = vshrl.u32 %v350, 16
      %v424 = vrot.slane %v422, 4
      %v425 = vshll.u32 %v350, 16
      %v427 = vrot.slane %v425, 5
      %v428 = vor.u32 %v424, %v427
      %v429 = vrot.slane %v428, 4
      %v431 = vshll.u32 %v351, 16
      %v433 = vrot.slane %v431, 5
      %v434 = vsel %vm364, %v429, %v433
      %v436 = vshrl.u32 %v352, 16
      %v438 = vrot.slane %v436, 4
      %v439 = vshll.u32 %v352, 16
      %v441 = vrot.slane %v439, 5
      %v442 = vor.u32 %v438, %v441
      %v443 = vrot.slane %v442, 4
      %v445 = vshll.u32 %v353, 16
      %v447 = vrot.slane %v445, 5
      %v448 = vsel %vm364, %v443, %v447
      %v450 = vshrl.u32 %v354, 16
      %v452 = vrot.slane %v450, 4
      %v453 = vshll.u32 %v354, 16
      %v455 = vrot.slane %v453, 5
      %v456 = vor.u32 %v452, %v455
      %v457 = vrot.slane %v456, 4
      %v459 = vshll.u32 %v355, 16
      %v461 = vrot.slane %v459, 5
      %v462 = vsel %vm364, %v457, %v461
      %v464 = vshrl.u32 %v356, 16
      %v466 = vrot.slane %v464, 4
      %v467 = vshll.u32 %v356, 16
      %v469 = vrot.slane %v467, 5
      %v470 = vor.u32 %v466, %v469
      %v471 = vrot.slane %v470, 4
      %v473 = vshll.u32 %v357, 16
      %v475 = vrot.slane %v473, 5
      %v476 = vsel %vm364, %v471, %v475
      %v478 = vshrl.u32 %v358, 16
      %v480 = vrot.slane %v478, 4
      %v481 = vshll.u32 %v358, 16
      %v483 = vrot.slane %v481, 5
      %v484 = vor.u32 %v480, %v483
      %v485 = vrot.slane %v484, 4
      %v487 = vshll.u32 %v359, 16
      %v489 = vrot.slane %v487, 5
      %v490 = vsel %vm364, %v485, %v489
      %v492 = vshrl.u32 %v360, 16
      %v494 = vrot.slane %v492, 4
      %v495 = vshll.u32 %v360, 16
      %v497 = vrot.slane %v495, 5
      %v498 = vor.u32 %v494, %v497
      %v499 = vrot.slane %v498, 4
      %v501 = vshll.u32 %v361, 16
      %v503 = vrot.slane %v501, 5
      %v504 = vsel %vm364, %v499, %v503
      %515 = vst [vmem:[#allocation2 + $0x4] sm:$0xf] %v378
      %516 = vst [vmem:[#allocation2 + $0x10] sm:$0xf] %v392
      %517 = vst [vmem:[#allocation2 + $0x1c] sm:$0xf] %v406
      %518 = vst [vmem:[#allocation2 + $0x28] sm:$0xf] %v420
      %519 = vst [vmem:[#allocation2 + $0x34] sm:$0xf] %v434
      %520 = vst [vmem:[#allocation2 + $0x40] sm:$0xf] %v448
      %521 = vst [vmem:[#allocation2 + $0x4c] sm:$0xf] %v462
      %522 = vst [vmem:[#allocation2 + $0x58] sm:$0xf] %v476
      %523 = vst [vmem:[#allocation2 + $0x64] sm:$0xf] %v490
      %524 = vst [vmem:[#allocation2 + $0x70] sm:$0xf] %v504
      %v525 = vld [vmem:[%s294] sm:$0xe]
      %v526 = vld [vmem:[%s294 + $0x4] sm:$0x1]
      %v527 = vld [vmem:[%s294 + $0x8] sm:$0xe]
      %v528 = vld [vmem:[%s294 + $0xc] sm:$0x1]
      %v529 = vld [vmem:[%s294 + $0x10] sm:$0xe]
      %v530 = vld [vmem:[%s294 + $0x14] sm:$0x1]
      %v531 = vld [vmem:[%s294 + $0x18] sm:$0xe]
      %v532 = vld [vmem:[%s294 + $0x1c] sm:$0x1]
      %v533 = vld [vmem:[%s294 + $0x20] sm:$0xe]
      %v534 = vld [vmem:[%s294 + $0x24] sm:$0x1]
      %v535 = vld [vmem:[%s294 + $0x28] sm:$0xe]
      %v536 = vld [vmem:[%s294 + $0x2c] sm:$0x1]
      %v537 = vld [vmem:[%s294 + $0x30] sm:$0xe]
      %v538 = vld [vmem:[%s294 + $0x34] sm:$0x1]
      %v539 = vld [vmem:[%s294 + $0x38] sm:$0xe]
      %v540 = vld [vmem:[%s294 + $0x3c] sm:$0x1]
      %v541 = vld [vmem:[%s294 + $0x40] sm:$0xe]
      %v542 = vld [vmem:[%s294 + $0x44] sm:$0x1]
      %v543 = vld [vmem:[%s294 + $0x48] sm:$0xe]
      %v544 = vld [vmem:[%s294 + $0x4c] sm:$0x1]
      %vm565 = vcmask 1042432
      %vm566 = vcmask 1046532
      %vm567 = vmor %vm565, %vm566
      %v568 = vrot.slane %v525, 5
      %v569 = vrot.slane %v568, 4
      %v570 = vrot.slane %v526, 5
      %v571 = vsel %vm567, %v569, %v570
      %v572 = vrot.slane %v527, 5
      %v573 = vrot.slane %v572, 4
      %v574 = vrot.slane %v528, 5
      %v575 = vsel %vm567, %v573, %v574
      %v576 = vrot.slane %v529, 5
      %v577 = vrot.slane %v576, 4
      %v578 = vrot.slane %v530, 5
      %v579 = vsel %vm567, %v577, %v578
      %v580 = vrot.slane %v531, 5
      %v581 = vrot.slane %v580, 4
      %v582 = vrot.slane %v532, 5
      %v583 = vsel %vm567, %v581, %v582
      %v584 = vrot.slane %v533, 5
      %v585 = vrot.slane %v584, 4
      %v586 = vrot.slane %v534, 5
      %v587 = vsel %vm567, %v585, %v586
      %v588 = vrot.slane %v535, 5
      %v589 = vrot.slane %v588, 4
      %v590 = vrot.slane %v536, 5
      %v591 = vsel %vm567, %v589, %v590
      %v592 = vrot.slane %v537, 5
      %v593 = vrot.slane %v592, 4
      %v594 = vrot.slane %v538, 5
      %v595 = vsel %vm567, %v593, %v594
      %v596 = vrot.slane %v539, 5
      %v597 = vrot.slane %v596, 4
      %v598 = vrot.slane %v540, 5
      %v599 = vsel %vm567, %v597, %v598
      %v600 = vrot.slane %v541, 5
      %v601 = vrot.slane %v600, 4
      %v602 = vrot.slane %v542, 5
      %v603 = vsel %vm567, %v601, %v602
      %v604 = vrot.slane %v543, 5
      %v605 = vrot.slane %v604, 4
      %v606 = vrot.slane %v544, 5
      %v607 = vsel %vm567, %v605, %v606
      %618 = vst [vmem:[#allocation2 + $0x8] sm:$0xf] %v571
      %619 = vst [vmem:[#allocation2 + $0x14] sm:$0xf] %v575
      %620 = vst [vmem:[#allocation2 + $0x20] sm:$0xf] %v579
      %621 = vst [vmem:[#allocation2 + $0x2c] sm:$0xf] %v583
      %622 = vst [vmem:[#allocation2 + $0x38] sm:$0xf] %v587
      %623 = vst [vmem:[#allocation2 + $0x44] sm:$0xf] %v591
      %624 = vst [vmem:[#allocation2 + $0x50] sm:$0xf] %v595
      %625 = vst [vmem:[#allocation2 + $0x5c] sm:$0xf] %v599
      %626 = vst [vmem:[#allocation2 + $0x68] sm:$0xf] %v603
      %627 = vst [vmem:[#allocation2 + $0x74] sm:$0xf] %v607
      %v628 = vld [vmem:[#allocation2] sm:$0xff]
      %v629 = vld [vmem:[#allocation2 + $0x8] sm:$0xf]
      %v630 = vld [vmem:[#allocation2 + $0xc] sm:$0xff]
      %v631 = vld [vmem:[#allocation2 + $0x14] sm:$0xf]
      %v632 = vld [vmem:[#allocation2 + $0x18] sm:$0xff]
      %v633 = vld [vmem:[#allocation2 + $0x20] sm:$0xf]
      %v634 = vld [vmem:[#allocation2 + $0x24] sm:$0xff]
      %v635 = vld [vmem:[#allocation2 + $0x2c] sm:$0xf]
      %v636 = vld [vmem:[#allocation2 + $0x30] sm:$0xff]
      %v637 = vld [vmem:[#allocation2 + $0x38] sm:$0xf]
      %v638 = vld [vmem:[#allocation2 + $0x3c] sm:$0xff]
      %v639 = vld [vmem:[#allocation2 + $0x44] sm:$0xf]
      %v640 = vld [vmem:[#allocation2 + $0x48] sm:$0xff]
      %v641 = vld [vmem:[#allocation2 + $0x50] sm:$0xf]
      %v642 = vld [vmem:[#allocation2 + $0x54] sm:$0xff]
      %v643 = vld [vmem:[#allocation2 + $0x5c] sm:$0xf]
      %v644 = vld [vmem:[%s298] sm:$0xf]
      %v645 = vld [vmem:[%s298 + $0x4] sm:$0xf]
      %v646 = vld [vmem:[%s298 + $0x8] sm:$0xf]
      %v647 = vld [vmem:[%s298 + $0xc] sm:$0xf]
      %v648 = vld [vmem:[%s298 + $0x10] sm:$0xf]
      %v649 = vld [vmem:[%s298 + $0x14] sm:$0xf]
      %v650 = vld [vmem:[%s298 + $0x18] sm:$0xf]
      %v651 = vld [vmem:[%s298 + $0x1c] sm:$0xf]
      %v652 = vld [vmem:[%s298 + $0x20] sm:$0xf]
      %v653 = vld [vmem:[%s298 + $0x24] sm:$0xf]
      %v654 = vld [vmem:[%s298 + $0x28] sm:$0xf]
      %v655 = vld [vmem:[%s298 + $0x2c] sm:$0xf]
      %v656 = vld [vmem:[%s298 + $0x30] sm:$0xf]
      %v657 = vld [vmem:[%s298 + $0x34] sm:$0xf]
      %v658 = vld [vmem:[%s298 + $0x38] sm:$0xf]
      %v659 = vld [vmem:[%s298 + $0x3c] sm:$0xf]
      %v660 = vld [vmem:[%s298 + $0x40] sm:$0xf]
      %v661 = vld [vmem:[%s298 + $0x44] sm:$0xf]
      %v662 = vld [vmem:[%s298 + $0x48] sm:$0xf]
      %v663 = vld [vmem:[%s298 + $0x4c] sm:$0xf]
      %v664 = vld [vmem:[%s298 + $0x50] sm:$0xf]
      %v665 = vld [vmem:[%s298 + $0x54] sm:$0xf]
      %v666 = vld [vmem:[%s298 + $0x58] sm:$0xf]
      %v667 = vld [vmem:[%s298 + $0x5c] sm:$0xf]
      %v668 = vld [vmem:[%s298 + $0x60] sm:$0xf]
      %v669 = vld [vmem:[%s298 + $0x64] sm:$0xf]
      %v670 = vld [vmem:[%s298 + $0x68] sm:$0xf]
      %v671 = vld [vmem:[%s298 + $0x6c] sm:$0xf]
      %v672 = vld [vmem:[%s298 + $0x70] sm:$0xf]
      %v673 = vld [vmem:[%s298 + $0x74] sm:$0xf]
      %v674 = vld [vmem:[%s298 + $0x78] sm:$0xf]
      %v675 = vld [vmem:[%s298 + $0x7c] sm:$0xf]
      %v676 = vld [vmem:[%s298 + $0x80] sm:$0xf]
      %v677 = vld [vmem:[%s298 + $0x84] sm:$0xf]
      %v678 = vld [vmem:[%s298 + $0x88] sm:$0xf]
      %v679 = vld [vmem:[%s298 + $0x8c] sm:$0xf]
      %v680 = vld [vmem:[%s298 + $0x90] sm:$0xf]
      %v681 = vld [vmem:[%s298 + $0x94] sm:$0xf]
      %v682 = vld [vmem:[%s298 + $0x98] sm:$0xf]
      %v683 = vld [vmem:[%s298 + $0x9c] sm:$0xf]
      %v684 = vld [vmem:[%s298 + $0xa0] sm:$0xf]
      %v685 = vld [vmem:[%s298 + $0xa4] sm:$0xf]
      %v686 = vld [vmem:[%s298 + $0xa8] sm:$0xf]
      %v687 = vld [vmem:[%s298 + $0xac] sm:$0xf]
      %v688 = vld [vmem:[%s298 + $0xb0] sm:$0xf]
      %v689 = vld [vmem:[%s298 + $0xb4] sm:$0xf]
      %v690 = vld [vmem:[%s298 + $0xb8] sm:$0xf]
      %v691 = vld [vmem:[%s298 + $0xbc] sm:$0xf]
      %s692 = scalar_lea.vmem [#allocation2], 12
      %v693 = vld [vmem:[%s692] sm:$0xff]
      %v694 = vld [vmem:[%s692 + $0x8] sm:$0xf]
      %v695 = vld [vmem:[%s692 + $0xc] sm:$0xff]
      %v696 = vld [vmem:[%s692 + $0x14] sm:$0xf]
      %v697 = vld [vmem:[%s692 + $0x18] sm:$0xff]
      %v698 = vld [vmem:[%s692 + $0x20] sm:$0xf]
      %v699 = vld [vmem:[%s692 + $0x24] sm:$0xff]
      %v700 = vld [vmem:[%s692 + $0x2c] sm:$0xf]
      %v701 = vld [vmem:[%s692 + $0x30] sm:$0xff]
      %v702 = vld [vmem:[%s692 + $0x38] sm:$0xf]
      %v703 = vld [vmem:[%s692 + $0x3c] sm:$0xff]
      %v704 = vld [vmem:[%s692 + $0x44] sm:$0xf]
      %v705 = vld [vmem:[%s692 + $0x48] sm:$0xff]
      %v706 = vld [vmem:[%s692 + $0x50] sm:$0xf]
      %v707 = vld [vmem:[%s692 + $0x54] sm:$0xff]
      %v708 = vld [vmem:[%s692 + $0x5c] sm:$0xf]
      %s709 = scalar_lea.vmem %s298, 192
      %v710 = vld [vmem:[%s709] sm:$0xf]
      %v711 = vld [vmem:[%s709 + $0x4] sm:$0xf]
      %v712 = vld [vmem:[%s709 + $0x8] sm:$0xf]
      %v713 = vld [vmem:[%s709 + $0xc] sm:$0xf]
      %v714 = vld [vmem:[%s709 + $0x10] sm:$0xf]
      %v715 = vld [vmem:[%s709 + $0x14] sm:$0xf]
      %v716 = vld [vmem:[%s709 + $0x18] sm:$0xf]
      %v717 = vld [vmem:[%s709 + $0x1c] sm:$0xf]
      %v718 = vld [vmem:[%s709 + $0x20] sm:$0xf]
      %v719 = vld [vmem:[%s709 + $0x24] sm:$0xf]
      %v720 = vld [vmem:[%s709 + $0x28] sm:$0xf]
      %v721 = vld [vmem:[%s709 + $0x2c] sm:$0xf]
      %v722 = vld [vmem:[%s709 + $0x30] sm:$0xf]
      %v723 = vld [vmem:[%s709 + $0x34] sm:$0xf]
      %v724 = vld [vmem:[%s709 + $0x38] sm:$0xf]
      %v725 = vld [vmem:[%s709 + $0x3c] sm:$0xf]
      %v726 = vld [vmem:[%s709 + $0x40] sm:$0xf]
      %v727 = vld [vmem:[%s709 + $0x44] sm:$0xf]
      %v728 = vld [vmem:[%s709 + $0x48] sm:$0xf]
      %v729 = vld [vmem:[%s709 + $0x4c] sm:$0xf]
      %v730 = vld [vmem:[%s709 + $0x50] sm:$0xf]
      %v731 = vld [vmem:[%s709 + $0x54] sm:$0xf]
      %v732 = vld [vmem:[%s709 + $0x58] sm:$0xf]
      %v733 = vld [vmem:[%s709 + $0x5c] sm:$0xf]
      %v734 = vld [vmem:[%s709 + $0x60] sm:$0xf]
      %v735 = vld [vmem:[%s709 + $0x64] sm:$0xf]
      %v736 = vld [vmem:[%s709 + $0x68] sm:$0xf]
      %v737 = vld [vmem:[%s709 + $0x6c] sm:$0xf]
      %v738 = vld [vmem:[%s709 + $0x70] sm:$0xf]
      %v739 = vld [vmem:[%s709 + $0x74] sm:$0xf]
      %v740 = vld [vmem:[%s709 + $0x78] sm:$0xf]
      %v741 = vld [vmem:[%s709 + $0x7c] sm:$0xf]
      %v742 = vld [vmem:[%s709 + $0x80] sm:$0xf]
      %v743 = vld [vmem:[%s709 + $0x84] sm:$0xf]
      %v744 = vld [vmem:[%s709 + $0x88] sm:$0xf]
      %v745 = vld [vmem:[%s709 + $0x8c] sm:$0xf]
      %v746 = vld [vmem:[%s709 + $0x90] sm:$0xf]
      %v747 = vld [vmem:[%s709 + $0x94] sm:$0xf]
      %v748 = vld [vmem:[%s709 + $0x98] sm:$0xf]
      %v749 = vld [vmem:[%s709 + $0x9c] sm:$0xf]
      %v750 = vld [vmem:[%s709 + $0xa0] sm:$0xf]
      %v751 = vld [vmem:[%s709 + $0xa4] sm:$0xf]
      %v752 = vld [vmem:[%s709 + $0xa8] sm:$0xf]
      %v753 = vld [vmem:[%s709 + $0xac] sm:$0xf]
      %v754 = vld [vmem:[%s709 + $0xb0] sm:$0xf]
      %v755 = vld [vmem:[%s709 + $0xb4] sm:$0xf]
      %v756 = vld [vmem:[%s709 + $0xb8] sm:$0xf]
      %v757 = vld [vmem:[%s709 + $0xbc] sm:$0xf]
      %v774 = vunpack.c.l.b16 %v693
      %v775 = vunpack.c.h.b16 %v693
      %v776 = vunpack.c.l.b16 %v694
      %v777 = vunpack.c.l.b16 %v695
      %v778 = vunpack.c.h.b16 %v695
      %v779 = vunpack.c.l.b16 %v696
      %v780 = vunpack.c.l.b16 %v697
      %v781 = vunpack.c.h.b16 %v697
      %v782 = vunpack.c.l.b16 %v698
      %v783 = vunpack.c.l.b16 %v699
      %v784 = vunpack.c.h.b16 %v699
      %v785 = vunpack.c.l.b16 %v700
      %v786 = vunpack.c.l.b16 %v701
      %v787 = vunpack.c.h.b16 %v701
      %v788 = vunpack.c.l.b16 %v702
      %v789 = vunpack.c.l.b16 %v703
      %v790 = vunpack.c.h.b16 %v703
      %v791 = vunpack.c.l.b16 %v704
      %v792 = vunpack.c.l.b16 %v705
      %v793 = vunpack.c.h.b16 %v705
      %v794 = vunpack.c.l.b16 %v706
      %v795 = vunpack.c.l.b16 %v707
      %v796 = vunpack.c.h.b16 %v707
      %v797 = vunpack.c.l.b16 %v708
      %v798 = vpack.c.b16 %v777, %v774
      %v799 = vpack.c.b16 %v778, %v775
      %v800 = vpack.c.b16 %v779, %v776
      %v801 = vpack.c.b16 %v783, %v780
      %v802 = vpack.c.b16 %v784, %v781
      %v803 = vpack.c.b16 %v785, %v782
      %v804 = vpack.c.b16 %v789, %v786
      %v805 = vpack.c.b16 %v790, %v787
      %v806 = vpack.c.b16 %v791, %v788
      %v807 = vpack.c.b16 %v795, %v792
      %v808 = vpack.c.b16 %v796, %v793
      %v809 = vpack.c.b16 %v797, %v794
      %v870 = vunpack.c.l.b16 %v710
      %v871 = vunpack.c.l.b16 %v711
      %v872 = vunpack.c.l.b16 %v712
      %v873 = vunpack.c.l.b16 %v713
      %v874 = vunpack.c.l.b16 %v714
      %v875 = vunpack.c.l.b16 %v715
      %v876 = vunpack.c.l.b16 %v716
      %v877 = vunpack.c.l.b16 %v717
      %v878 = vunpack.c.l.b16 %v718
      %v879 = vunpack.c.l.b16 %v719
      %v880 = vunpack.c.l.b16 %v720
      %v881 = vunpack.c.l.b16 %v721
      %v882 = vunpack.c.l.b16 %v722
      %v883 = vunpack.c.l.b16 %v723
      %v884 = vunpack.c.l.b16 %v724
      %v885 = vunpack.c.l.b16 %v725
      %v886 = vunpack.c.l.b16 %v726
      %v887 = vunpack.c.l.b16 %v727
      %v888 = vunpack.c.l.b16 %v728
      %v889 = vunpack.c.l.b16 %v729
      %v890 = vunpack.c.l.b16 %v730
      %v891 = vunpack.c.l.b16 %v731
      %v892 = vunpack.c.l.b16 %v732
      %v893 = vunpack.c.l.b16 %v733
      %v894 = vunpack.c.l.b16 %v734
      %v895 = vunpack.c.l.b16 %v735
      %v896 = vunpack.c.l.b16 %v736
      %v897 = vunpack.c.l.b16 %v737
      %v898 = vunpack.c.l.b16 %v738
      %v899 = vunpack.c.l.b16 %v739
      %v900 = vunpack.c.l.b16 %v740
      %v901 = vunpack.c.l.b16 %v741
      %v902 = vunpack.c.l.b16 %v742
      %v903 = vunpack.c.l.b16 %v743
      %v904 = vunpack.c.l.b16 %v744
      %v905 = vunpack.c.l.b16 %v745
      %v906 = vunpack.c.l.b16 %v746
      %v907 = vunpack.c.l.b16 %v747
      %v908 = vunpack.c.l.b16 %v748
      %v909 = vunpack.c.l.b16 %v749
      %v910 = vunpack.c.l.b16 %v750
      %v911 = vunpack.c.l.b16 %v751
      %v912 = vunpack.c.l.b16 %v752
      %v913 = vunpack.c.l.b16 %v753
      %v914 = vunpack.c.l.b16 %v754
      %v915 = vunpack.c.l.b16 %v755
      %v916 = vunpack.c.l.b16 %v756
      %v917 = vunpack.c.l.b16 %v757
      %v918 = vpack.c.b16 %v871, %v870
      %v919 = vpack.c.b16 %v873, %v872
      %v920 = vpack.c.b16 %v875, %v874
      %v921 = vpack.c.b16 %v877, %v876
      %v922 = vpack.c.b16 %v879, %v878
      %v923 = vpack.c.b16 %v881, %v880
      %v924 = vpack.c.b16 %v883, %v882
      %v925 = vpack.c.b16 %v885, %v884
      %v926 = vpack.c.b16 %v887, %v886
      %v927 = vpack.c.b16 %v889, %v888
      %v928 = vpack.c.b16 %v891, %v890
      %v929 = vpack.c.b16 %v893, %v892
      %v930 = vpack.c.b16 %v895, %v894
      %v931 = vpack.c.b16 %v897, %v896
      %v932 = vpack.c.b16 %v899, %v898
      %v933 = vpack.c.b16 %v901, %v900
      %v934 = vpack.c.b16 %v903, %v902
      %v935 = vpack.c.b16 %v905, %v904
      %v936 = vpack.c.b16 %v907, %v906
      %v937 = vpack.c.b16 %v909, %v908
      %v938 = vpack.c.b16 %v911, %v910
      %v939 = vpack.c.b16 %v913, %v912
      %v940 = vpack.c.b16 %v915, %v914
      %v941 = vpack.c.b16 %v917, %v916
      %966 = vmatprep.subr.bf16.mxu0 0
      %967 = vmatpush1.bf16.msra.mxu0 %v918
      %968 = vmatprep.subr.bf16.mxu0 0
      %969 = vmatpush1.bf16.msra.mxu0 %v919
      %970 = vmatprep.subr.bf16.mxu0 0
      %971 = vmatpush1.bf16.msra.mxu0 %v920
      %972 = vmatprep.subr.bf16.mxu0 0
      %973 = vmatpush1.bf16.msra.mxu0 %v921
      %974 = vmatprep.subr.bf16.mxu0 0
      %975 = vmatpush1.bf16.msra.mxu0 %v922
      %976 = vmatprep.subr.bf16.mxu0 0
      %977 = vmatpush1.bf16.msra.mxu0 %v923
      %978 = vmatprep.subr.bf16.mxu0 0
      %979 = vmatpush1.bf16.msra.mxu0 %v924
      %980 = vmatprep.subr.bf16.mxu0 0
      %981 = vmatpush1.bf16.msra.mxu0 %v925
      %982 = vmatprep.subr.bf16.mxu0 0
      %983 = vmatpush1.bf16.msra.mxu0 %v926
      %984 = vmatprep.subr.bf16.mxu0 0
      %985 = vmatpush1.bf16.msra.mxu0 %v927
      %986 = vmatprep.subr.bf16.mxu0 0
      %987 = vmatpush1.bf16.msra.mxu0 %v928
      %988 = vmatprep.subr.bf16.mxu0 0
      %989 = vmatpush1.bf16.msra.mxu0 %v929
      %990 = vmatprep.subr.bf16.mxu0 0
      %991 = vmatpush1.bf16.msra.mxu0 %v930
      %992 = vmatprep.subr.bf16.mxu0 0
      %993 = vmatpush1.bf16.msra.mxu0 %v931
      %994 = vmatprep.subr.bf16.mxu0 0
      %995 = vmatpush1.bf16.msra.mxu0 %v932
      %996 = vmatprep.subr.bf16.mxu0 0
      %997 = vmatpush1.bf16.msra.mxu0 %v933
      %998 = vmatprep.mubr.bf16.mxu0 %v799
      %999 = vmatmul.mubr.bf16.gmra.mrb[0].mxu0 %v798
      %v1000 = vpop.f32.mrb[0].mxu0
      %v1001 = vadd.f32 0.0, %v1000
      %v1002 = vpop.f32.mrb[0].mxu0
      %v1003 = vpop.f32.mrb[0].mxu0
      %v1004 = vadd.f32 0.0, %v1003
      %v1005 = vpop.f32.mrb[0].mxu0
      %1006 = vmatprep.mubr.bf16.mxu0 %v802
      %1007 = vmatmul.mubr.bf16.gmra.mrb[0].mxu0 %v801
      %v1008 = vpop.f32.mrb[0].mxu0
      %v1009 = vadd.f32 0.0, %v1008
      %v1010 = vpop.f32.mrb[0].mxu0
      %v1011 = vpop.f32.mrb[0].mxu0
      %v1012 = vadd.f32 0.0, %v1011
      %v1013 = vpop.f32.mrb[0].mxu0
      %1014 = vmatprep.mubr.bf16.mxu0 %v805
      %1015 = vmatmul.mubr.bf16.gmra.mrb[0].mxu0 %v804
      %v1016 = vpop.f32.mrb[0].mxu0
      %v1017 = vadd.f32 0.0, %v1016
      %v1018 = vpop.f32.mrb[0].mxu0
      %v1019 = vpop.f32.mrb[0].mxu0
      %v1020 = vadd.f32 0.0, %v1019
      %v1021 = vpop.f32.mrb[0].mxu0
      %1022 = vmatprep.mubr.bf16.mxu0 %v808
      %1023 = vmatmul.mubr.bf16.gmra.mrb[0].mxu0 %v807
      %v1024 = vpop.f32.mrb[0].mxu0
      %v1025 = vadd.f32 0.0, %v1024
      %v1026 = vpop.f32.mrb[0].mxu0
      %v1027 = vpop.f32.mrb[0].mxu0
      %v1028 = vadd.f32 0.0, %v1027
      %v1029 = vpop.f32.mrb[0].mxu0
      %1030 = vdwg.mxu0
      %1031 = vmatprep.subr.bf16.mxu0 0
      %1032 = vmatpush1.bf16.msra.mxu0 %v934
      %1033 = vmatprep.subr.bf16.mxu0 0
      %1034 = vmatpush1.bf16.msra.mxu0 %v935
      %1035 = vmatprep.subr.bf16.mxu0 0
      %1036 = vmatpush1.bf16.msra.mxu0 %v936
      %1037 = vmatprep.subr.bf16.mxu0 0
      %1038 = vmatpush1.bf16.msra.mxu0 %v937
      %1039 = vmatprep.subr.bf16.mxu0 0
      %1040 = vmatpush1.bf16.msra.mxu0 %v938
      %1041 = vmatprep.subr.bf16.mxu0 0
      %1042 = vmatpush1.bf16.msra.mxu0 %v939
      %1043 = vmatprep.subr.bf16.mxu0 0
      %1044 = vmatpush1.bf16.msra.mxu0 %v940
      %1045 = vmatprep.subr.bf16.mxu0 0
      %1046 = vmatpush1.bf16.msra.mxu0 %v941
      %1047 = vmatprep.subr.bf16.mxu0 0
      %1048 = vmatpush1.bf16.msra.mxu0 0
      %1049 = vmatprep.subr.bf16.mxu0 0
      %1050 = vmatpush1.bf16.msra.mxu0 0
      %1051 = vmatprep.subr.bf16.mxu0 0
      %1052 = vmatpush1.bf16.msra.mxu0 0
      %1053 = vmatprep.subr.bf16.mxu0 0
      %1054 = vmatpush1.bf16.msra.mxu0 0
      %1055 = vmatprep.subr.bf16.mxu0 0
      %1056 = vmatpush1.bf16.msra.mxu0 0
      %1057 = vmatprep.subr.bf16.mxu0 0
      %1058 = vmatpush1.bf16.msra.mxu0 0
      %1059 = vmatprep.subr.bf16.mxu0 0
      %1060 = vmatpush1.bf16.msra.mxu0 0
      %1061 = vmatprep.subr.bf16.mxu0 0
      %1062 = vmatpush1.bf16.msra.mxu0 0
      %1063 = vmatprep.mubr.bf16.mxu0 0
      %1064 = vmatmul.mubr.bf16.gmra.mrb[0].mxu0 %v800
      %v1065 = vpop.f32.mrb[0].mxu0
      %v1066 = vadd.f32 %v1001, %v1065
      %v1067 = vpop.f32.mrb[0].mxu0
      %v1068 = vpop.f32.mrb[0].mxu0
      %v1069 = vadd.f32 %v1004, %v1068
      %v1070 = vpop.f32.mrb[0].mxu0
      %1071 = vmatprep.mubr.bf16.mxu0 0
      %1072 = vmatmul.mubr.bf16.gmra.mrb[0].mxu0 %v803
      %v1073 = vpop.f32.mrb[0].mxu0
      %v1074 = vadd.f32 %v1009, %v1073
      %v1075 = vpop.f32.mrb[0].mxu0
      %v1076 = vpop.f32.mrb[0].mxu0
      %v1077 = vadd.f32 %v1012, %v1076
      %v1078 = vpop.f32.mrb[0].mxu0
      %1079 = vmatprep.mubr.bf16.mxu0 0
      %1080 = vmatmul.mubr.bf16.gmra.mrb[0].mxu0 %v806
      %v1081 = vpop.f32.mrb[0].mxu0
      %v1082 = vadd.f32 %v1017, %v1081
      %v1083 = vpop.f32.mrb[0].mxu0
      %v1084 = vpop.f32.mrb[0].mxu0
      %v1085 = vadd.f32 %v1020, %v1084
      %v1086 = vpop.f32.mrb[0].mxu0
      %1087 = vmatprep.mubr.bf16.mxu0 0
      %1088 = vmatmul.mubr.bf16.gmra.mrb[0].mxu0 %v809
      %v1089 = vpop.f32.mrb[0].mxu0
      %v1090 = vadd.f32 %v1025, %v1089
      %v1091 = vpop.f32.mrb[0].mxu0
      %v1092 = vpop.f32.mrb[0].mxu0
      %v1093 = vadd.f32 %v1028, %v1092
      %v1094 = vpop.f32.mrb[0].mxu0
      %1095 = vdwg.mxu0
      %v1112 = vunpack.c.l.b16 %v628
      %v1113 = vunpack.c.h.b16 %v628
      %v1114 = vunpack.c.l.b16 %v629
      %v1115 = vunpack.c.l.b16 %v630
      %v1116 = vunpack.c.h.b16 %v630
      %v1117 = vunpack.c.l.b16 %v631
      %v1118 = vunpack.c.l.b16 %v632
      %v1119 = vunpack.c.h.b16 %v632
      %v1120 = vunpack.c.l.b16 %v633
      %v1121 = vunpack.c.l.b16 %v634
      %v1122 = vunpack.c.h.b16 %v634
      %v1123 = vunpack.c.l.b16 %v635
      %v1124 = vunpack.c.l.b16 %v636
      %v1125 = vunpack.c.h.b16 %v636
      %v1126 = vunpack.c.l.b16 %v637
      %v1127 = vunpack.c.l.b16 %v638
      %v1128 = vunpack.c.h.b16 %v638
      %v1129 = vunpack.c.l.b16 %v639
      %v1130 = vunpack.c.l.b16 %v640
      %v1131 = vunpack.c.h.b16 %v640
      %v1132 = vunpack.c.l.b16 %v641
      %v1133 = vunpack.c.l.b16 %v642
      %v1134 = vunpack.c.h.b16 %v642
      %v1135 = vunpack.c.l.b16 %v643
      %v1136 = vpack.c.b16 %v1115, %v1112
      %v1137 = vpack.c.b16 %v1116, %v1113
      %v1138 = vpack.c.b16 %v1117, %v1114
      %v1139 = vpack.c.b16 %v1121, %v1118
      %v1140 = vpack.c.b16 %v1122, %v1119
      %v1141 = vpack.c.b16 %v1123, %v1120
      %v1142 = vpack.c.b16 %v1127, %v1124
      %v1143 = vpack.c.b16 %v1128, %v1125
      %v1144 = vpack.c.b16 %v1129, %v1126
      %v1145 = vpack.c.b16 %v1133, %v1130
      %v1146 = vpack.c.b16 %v1134, %v1131
      %v1147 = vpack.c.b16 %v1135, %v1132
      %v1208 = vunpack.c.l.b16 %v644
      %v1209 = vunpack.c.l.b16 %v645
      %v1210 = vunpack.c.l.b16 %v646
      %v1211 = vunpack.c.l.b16 %v647
      %v1212 = vunpack.c.l.b16 %v648
      %v1213 = vunpack.c.l.b16 %v649
      %v1214 = vunpack.c.l.b16 %v650
      %v1215 = vunpack.c.l.b16 %v651
      %v1216 = vunpack.c.l.b16 %v652
      %v1217 = vunpack.c.l.b16 %v653
      %v1218 = vunpack.c.l.b16 %v654
      %v1219 = vunpack.c.l.b16 %v655
      %v1220 = vunpack.c.l.b16 %v656
      %v1221 = vunpack.c.l.b16 %v657
      %v1222 = vunpack.c.l.b16 %v658
      %v1223 = vunpack.c.l.b16 %v659
      %v1224 = vunpack.c.l.b16 %v660
      %v1225 = vunpack.c.l.b16 %v661
      %v1226 = vunpack.c.l.b16 %v662
      %v1227 = vunpack.c.l.b16 %v663
      %v1228 = vunpack.c.l.b16 %v664
      %v1229 = vunpack.c.l.b16 %v665
      %v1230 = vunpack.c.l.b16 %v666
      %v1231 = vunpack.c.l.b16 %v667
      %v1232 = vunpack.c.l.b16 %v668
      %v1233 = vunpack.c.l.b16 %v669
      %v1234 = vunpack.c.l.b16 %v670
      %v1235 = vunpack.c.l.b16 %v671
      %v1236 = vunpack.c.l.b16 %v672
      %v1237 = vunpack.c.l.b16 %v673
      %v1238 = vunpack.c.l.b16 %v674
      %v1239 = vunpack.c.l.b16 %v675
      %v1240 = vunpack.c.l.b16 %v676
      %v1241 = vunpack.c.l.b16 %v677
      %v1242 = vunpack.c.l.b16 %v678
      %v1243 = vunpack.c.l.b16 %v679
      %v1244 = vunpack.c.l.b16 %v680
      %v1245 = vunpack.c.l.b16 %v681
      %v1246 = vunpack.c.l.b16 %v682
      %v1247 = vunpack.c.l.b16 %v683
      %v1248 = vunpack.c.l.b16 %v684
      %v1249 = vunpack.c.l.b16 %v685
      %v1250 = vunpack.c.l.b16 %v686
      %v1251 = vunpack.c.l.b16 %v687
      %v1252 = vunpack.c.l.b16 %v688
      %v1253 = vunpack.c.l.b16 %v689
      %v1254 = vunpack.c.l.b16 %v690
      %v1255 = vunpack.c.l.b16 %v691
      %v1256 = vpack.c.b16 %v1209, %v1208
      %v1257 = vpack.c.b16 %v1211, %v1210
      %v1258 = vpack.c.b16 %v1213, %v1212
      %v1259 = vpack.c.b16 %v1215, %v1214
      %v1260 = vpack.c.b16 %v1217, %v1216
      %v1261 = vpack.c.b16 %v1219, %v1218
      %v1262 = vpack.c.b16 %v1221, %v1220
      %v1263 = vpack.c.b16 %v1223, %v1222
      %v1264 = vpack.c.b16 %v1225, %v1224
      %v1265 = vpack.c.b16 %v1227, %v1226
      %v1266 = vpack.c.b16 %v1229, %v1228
      %v1267 = vpack.c.b16 %v1231, %v1230
      %v1268 = vpack.c.b16 %v1233, %v1232
      %v1269 = vpack.c.b16 %v1235, %v1234
      %v1270 = vpack.c.b16 %v1237, %v1236
      %v1271 = vpack.c.b16 %v1239, %v1238
      %v1272 = vpack.c.b16 %v1241, %v1240
      %v1273 = vpack.c.b16 %v1243, %v1242
      %v1274 = vpack.c.b16 %v1245, %v1244
      %v1275 = vpack.c.b16 %v1247, %v1246
      %v1276 = vpack.c.b16 %v1249, %v1248
      %v1277 = vpack.c.b16 %v1251, %v1250
      %v1278 = vpack.c.b16 %v1253, %v1252
      %v1279 = vpack.c.b16 %v1255, %v1254
      %1304 = vmatprep.subr.bf16.mxu0 0
      %1305 = vmatpush1.bf16.msra.mxu0 %v1256
      %1306 = vmatprep.subr.bf16.mxu0 0
      %1307 = vmatpush1.bf16.msra.mxu0 %v1257
      %1308 = vmatprep.subr.bf16.mxu0 0
      %1309 = vmatpush1.bf16.msra.mxu0 %v1258
      %1310 = vmatprep.subr.bf16.mxu0 0
      %1311 = vmatpush1.bf16.msra.mxu0 %v1259
      %1312 = vmatprep.subr.bf16.mxu0 0
      %1313 = vmatpush1.bf16.msra.mxu0 %v1260
      %1314 = vmatprep.subr.bf16.mxu0 0
      %1315 = vmatpush1.bf16.msra.mxu0 %v1261
      %1316 = vmatprep.subr.bf16.mxu0 0
      %1317 = vmatpush1.bf16.msra.mxu0 %v1262
      %1318 = vmatprep.subr.bf16.mxu0 0
      %1319 = vmatpush1.bf16.msra.mxu0 %v1263
      %1320 = vmatprep.subr.bf16.mxu0 0
      %1321 = vmatpush1.bf16.msra.mxu0 %v1264
      %1322 = vmatprep.subr.bf16.mxu0 0
      %1323 = vmatpush1.bf16.msra.mxu0 %v1265
      %1324 = vmatprep.subr.bf16.mxu0 0
      %1325 = vmatpush1.bf16.msra.mxu0 %v1266
      %1326 = vmatprep.subr.bf16.mxu0 0
      %1327 = vmatpush1.bf16.msra.mxu0 %v1267
      %1328 = vmatprep.subr.bf16.mxu0 0
      %1329 = vmatpush1.bf16.msra.mxu0 %v1268
      %1330 = vmatprep.subr.bf16.mxu0 0
      %1331 = vmatpush1.bf16.msra.mxu0 %v1269
      %1332 = vmatprep.subr.bf16.mxu0 0
      %1333 = vmatpush1.bf16.msra.mxu0 %v1270
      %1334 = vmatprep.subr.bf16.mxu0 0
      %1335 = vmatpush1.bf16.msra.mxu0 %v1271
      %1336 = vmatprep.mubr.bf16.mxu0 %v1137
      %1337 = vmatmul.mubr.bf16.gmra.mrb[0].mxu0 %v1136
      %v1338 = vpop.f32.mrb[0].mxu0
      %v1339 = vadd.f32 %v1066, %v1338
      %v1340 = vpop.f32.mrb[0].mxu0
      %v1341 = vpop.f32.mrb[0].mxu0
      %v1342 = vadd.f32 %v1069, %v1341
      %v1343 = vpop.f32.mrb[0].mxu0
      %1344 = vmatprep.mubr.bf16.mxu0 %v1140
      %1345 = vmatmul.mubr.bf16.gmra.mrb[0].mxu0 %v1139
      %v1346 = vpop.f32.mrb[0].mxu0
      %v1347 = vadd.f32 %v1074, %v1346
      %v1348 = vpop.f32.mrb[0].mxu0
      %v1349 = vpop.f32.mrb[0].mxu0
      %v1350 = vadd.f32 %v1077, %v1349
      %v1351 = vpop.f32.mrb[0].mxu0
      %1352 = vmatprep.mubr.bf16.mxu0 %v1143
      %1353 = vmatmul.mubr.bf16.gmra.mrb[0].mxu0 %v1142
      %v1354 = vpop.f32.mrb[0].mxu0
      %v1355 = vadd.f32 %v1082, %v1354
      %v1356 = vpop.f32.mrb[0].mxu0
      %v1357 = vpop.f32.mrb[0].mxu0
      %v1358 = vadd.f32 %v1085, %v1357
      %v1359 = vpop.f32.mrb[0].mxu0
      %1360 = vmatprep.mubr.bf16.mxu0 %v1146
      %1361 = vmatmul.mubr.bf16.gmra.mrb[0].mxu0 %v1145
      %v1362 = vpop.f32.mrb[0].mxu0
      %v1363 = vadd.f32 %v1090, %v1362
      %v1364 = vpop.f32.mrb[0].mxu0
      %v1365 = vpop.f32.mrb[0].mxu0
      %v1366 = vadd.f32 %v1093, %v1365
      %v1367 = vpop.f32.mrb[0].mxu0
      %1368 = vdwg.mxu0
      %1369 = vmatprep.subr.bf16.mxu0 0
      %1370 = vmatpush1.bf16.msra.mxu0 %v1272
      %1371 = vmatprep.subr.bf16.mxu0 0
      %1372 = vmatpush1.bf16.msra.mxu0 %v1273
      %1373 = vmatprep.subr.bf16.mxu0 0
      %1374 = vmatpush1.bf16.msra.mxu0 %v1274
      %1375 = vmatprep.subr.bf16.mxu0 0
      %1376 = vmatpush1.bf16.msra.mxu0 %v1275
      %1377 = vmatprep.subr.bf16.mxu0 0
      %1378 = vmatpush1.bf16.msra.mxu0 %v1276
      %1379 = vmatprep.subr.bf16.mxu0 0
      %1380 = vmatpush1.bf16.msra.mxu0 %v1277
      %1381 = vmatprep.subr.bf16.mxu0 0
      %1382 = vmatpush1.bf16.msra.mxu0 %v1278
      %1383 = vmatprep.subr.bf16.mxu0 0
      %1384 = vmatpush1.bf16.msra.mxu0 %v1279
      %1385 = vmatprep.subr.bf16.mxu0 0
      %1386 = vmatpush1.bf16.msra.mxu0 0
      %1387 = vmatprep.subr.bf16.mxu0 0
      %1388 = vmatpush1.bf16.msra.mxu0 0
      %1389 = vmatprep.subr.bf16.mxu0 0
      %1390 = vmatpush1.bf16.msra.mxu0 0
      %1391 = vmatprep.subr.bf16.mxu0 0
      %1392 = vmatpush1.bf16.msra.mxu0 0
      %1393 = vmatprep.subr.bf16.mxu0 0
      %1394 = vmatpush1.bf16.msra.mxu0 0
      %1395 = vmatprep.subr.bf16.mxu0 0
      %1396 = vmatpush1.bf16.msra.mxu0 0
      %1397 = vmatprep.subr.bf16.mxu0 0
      %1398 = vmatpush1.bf16.msra.mxu0 0
      %1399 = vmatprep.subr.bf16.mxu0 0
      %1400 = vmatpush1.bf16.msra.mxu0 0
      %1401 = vmatprep.mubr.bf16.mxu0 0
      %1402 = vmatmul.mubr.bf16.gmra.mrb[0].mxu0 %v1138
      %v1403 = vpop.f32.mrb[0].mxu0
      %v1404 = vadd.f32 %v1339, %v1403
      %v1405 = vpop.f32.mrb[0].mxu0
      %v1406 = vpop.f32.mrb[0].mxu0
      %v1407 = vadd.f32 %v1342, %v1406
      %v1408 = vpop.f32.mrb[0].mxu0
      %1409 = vmatprep.mubr.bf16.mxu0 0
      %1410 = vmatmul.mubr.bf16.gmra.mrb[0].mxu0 %v1141
      %v1411 = vpop.f32.mrb[0].mxu0
      %v1412 = vadd.f32 %v1347, %v1411
      %v1413 = vpop.f32.mrb[0].mxu0
      %v1414 = vpop.f32.mrb[0].mxu0
      %v1415 = vadd.f32 %v1350, %v1414
      %v1416 = vpop.f32.mrb[0].mxu0
      %1417 = vmatprep.mubr.bf16.mxu0 0
      %1418 = vmatmul.mubr.bf16.gmra.mrb[0].mxu0 %v1144
      %v1419 = vpop.f32.mrb[0].mxu0
      %v1420 = vadd.f32 %v1355, %v1419
      %v1421 = vpop.f32.mrb[0].mxu0
      %v1422 = vpop.f32.mrb[0].mxu0
      %v1423 = vadd.f32 %v1358, %v1422
      %v1424 = vpop.f32.mrb[0].mxu0
      %1425 = vmatprep.mubr.bf16.mxu0 0
      %1426 = vmatmul.mubr.bf16.gmra.mrb[0].mxu0 %v1147
      %v1427 = vpop.f32.mrb[0].mxu0
      %v1428 = vadd.f32 %v1363, %v1427
      %v1429 = vpop.f32.mrb[0].mxu0
      %v1430 = vpop.f32.mrb[0].mxu0
      %v1431 = vadd.f32 %v1366, %v1430
      %v1432 = vpop.f32.mrb[0].mxu0
      %1433 = vdwg.mxu0
      %s1434 = scalar_lea.vmem [#allocation2], 24
      %v1435 = vld [vmem:[%s1434] sm:$0xff]
      %v1436 = vld [vmem:[%s1434 + $0x8] sm:$0xf]
      %v1437 = vld [vmem:[%s1434 + $0xc] sm:$0xff]
      %v1438 = vld [vmem:[%s1434 + $0x14] sm:$0xf]
      %v1439 = vld [vmem:[%s1434 + $0x18] sm:$0xff]
      %v1440 = vld [vmem:[%s1434 + $0x20] sm:$0xf]
      %v1441 = vld [vmem:[%s1434 + $0x24] sm:$0xff]
      %v1442 = vld [vmem:[%s1434 + $0x2c] sm:$0xf]
      %v1443 = vld [vmem:[%s1434 + $0x30] sm:$0xff]
      %v1444 = vld [vmem:[%s1434 + $0x38] sm:$0xf]
      %v1445 = vld [vmem:[%s1434 + $0x3c] sm:$0xff]
      %v1446 = vld [vmem:[%s1434 + $0x44] sm:$0xf]
      %v1447 = vld [vmem:[%s1434 + $0x48] sm:$0xff]
      %v1448 = vld [vmem:[%s1434 + $0x50] sm:$0xf]
      %v1449 = vld [vmem:[%s1434 + $0x54] sm:$0xff]
      %v1450 = vld [vmem:[%s1434 + $0x5c] sm:$0xf]
      %s1451 = scalar_lea.vmem %s298, 384
      %v1452 = vld [vmem:[%s1451] sm:$0xf]
      %v1453 = vld [vmem:[%s1451 + $0x4] sm:$0xf]
      %v1454 = vld [vmem:[%s1451 + $0x8] sm:$0xf]
      %v1455 = vld [vmem:[%s1451 + $0xc] sm:$0xf]
      %v1456 = vld [vmem:[%s1451 + $0x10] sm:$0xf]
      %v1457 = vld [vmem:[%s1451 + $0x14] sm:$0xf]
      %v1458 = vld [vmem:[%s1451 + $0x18] sm:$0xf]
      %v1459 = vld [vmem:[%s1451 + $0x1c] sm:$0xf]
      %v1460 = vld [vmem:[%s1451 + $0x20] sm:$0xf]
      %v1461 = vld [vmem:[%s1451 + $0x24] sm:$0xf]
      %v1462 = vld [vmem:[%s1451 + $0x28] sm:$0xf]
      %v1463 = vld [vmem:[%s1451 + $0x2c] sm:$0xf]
      %v1464 = vld [vmem:[%s1451 + $0x30] sm:$0xf]
      %v1465 = vld [vmem:[%s1451 + $0x34] sm:$0xf]
      %v1466 = vld [vmem:[%s1451 + $0x38] sm:$0xf]
      %v1467 = vld [vmem:[%s1451 + $0x3c] sm:$0xf]
      %v1468 = vld [vmem:[%s1451 + $0x40] sm:$0xf]
      %v1469 = vld [vmem:[%s1451 + $0x44] sm:$0xf]
      %v1470 = vld [vmem:[%s1451 + $0x48] sm:$0xf]
      %v1471 = vld [vmem:[%s1451 + $0x4c] sm:$0xf]
      %v1472 = vld [vmem:[%s1451 + $0x50] sm:$0xf]
      %v1473 = vld [vmem:[%s1451 + $0x54] sm:$0xf]
      %v1474 = vld [vmem:[%s1451 + $0x58] sm:$0xf]
      %v1475 = vld [vmem:[%s1451 + $0x5c] sm:$0xf]
      %v1476 = vld [vmem:[%s1451 + $0x60] sm:$0xf]
      %v1477 = vld [vmem:[%s1451 + $0x64] sm:$0xf]
      %v1478 = vld [vmem:[%s1451 + $0x68] sm:$0xf]
      %v1479 = vld [vmem:[%s1451 + $0x6c] sm:$0xf]
      %v1480 = vld [vmem:[%s1451 + $0x70] sm:$0xf]
      %v1481 = vld [vmem:[%s1451 + $0x74] sm:$0xf]
      %v1482 = vld [vmem:[%s1451 + $0x78] sm:$0xf]
      %v1483 = vld [vmem:[%s1451 + $0x7c] sm:$0xf]
      %v1484 = vld [vmem:[%s1451 + $0x80] sm:$0xf]
      %v1485 = vld [vmem:[%s1451 + $0x84] sm:$0xf]
      %v1486 = vld [vmem:[%s1451 + $0x88] sm:$0xf]
      %v1487 = vld [vmem:[%s1451 + $0x8c] sm:$0xf]
      %v1488 = vld [vmem:[%s1451 + $0x90] sm:$0xf]
      %v1489 = vld [vmem:[%s1451 + $0x94] sm:$0xf]
      %v1490 = vld [vmem:[%s1451 + $0x98] sm:$0xf]
      %v1491 = vld [vmem:[%s1451 + $0x9c] sm:$0xf]
      %v1492 = vld [vmem:[%s1451 + $0xa0] sm:$0xf]
      %v1493 = vld [vmem:[%s1451 + $0xa4] sm:$0xf]
      %v1494 = vld [vmem:[%s1451 + $0xa8] sm:$0xf]
      %v1495 = vld [vmem:[%s1451 + $0xac] sm:$0xf]
      %v1496 = vld [vmem:[%s1451 + $0xb0] sm:$0xf]
      %v1497 = vld [vmem:[%s1451 + $0xb4] sm:$0xf]
      %v1498 = vld [vmem:[%s1451 + $0xb8] sm:$0xf]
      %v1499 = vld [vmem:[%s1451 + $0xbc] sm:$0xf]
      %v1516 = vunpack.c.l.b16 %v1435
      %v1517 = vunpack.c.h.b16 %v1435
      %v1518 = vunpack.c.l.b16 %v1436
      %v1519 = vunpack.c.l.b16 %v1437
      %v1520 = vunpack.c.h.b16 %v1437
      %v1521 = vunpack.c.l.b16 %v1438
      %v1522 = vunpack.c.l.b16 %v1439
      %v1523 = vunpack.c.h.b16 %v1439
      %v1524 = vunpack.c.l.b16 %v1440
      %v1525 = vunpack.c.l.b16 %v1441
      %v1526 = vunpack.c.h.b16 %v1441
      %v1527 = vunpack.c.l.b16 %v1442
      %v1528 = vunpack.c.l.b16 %v1443
      %v1529 = vunpack.c.h.b16 %v1443
      %v1530 = vunpack.c.l.b16 %v1444
      %v1531 = vunpack.c.l.b16 %v1445
      %v1532 = vunpack.c.h.b16 %v1445
      %v1533 = vunpack.c.l.b16 %v1446
      %v1534 = vunpack.c.l.b16 %v1447
      %v1535 = vunpack.c.h.b16 %v1447
      %v1536 = vunpack.c.l.b16 %v1448
      %v1537 = vunpack.c.l.b16 %v1449
      %v1538 = vunpack.c.h.b16 %v1449
      %v1539 = vunpack.c.l.b16 %v1450
      %v1540 = vpack.c.b16 %v1519, %v1516
      %v1541 = vpack.c.b16 %v1520, %v1517
      %v1542 = vpack.c.b16 %v1521, %v1518
      %v1543 = vpack.c.b16 %v1525, %v1522
      %v1544 = vpack.c.b16 %v1526, %v1523
      %v1545 = vpack.c.b16 %v1527, %v1524
      %v1546 = vpack.c.b16 %v1531, %v1528
      %v1547 = vpack.c.b16 %v1532, %v1529
      %v1548 = vpack.c.b16 %v1533, %v1530
      %v1549 = vpack.c.b16 %v1537, %v1534
      %v1550 = vpack.c.b16 %v1538, %v1535
      %v1551 = vpack.c.b16 %v1539, %v1536
      %v1612 = vunpack.c.l.b16 %v1452
      %v1613 = vunpack.c.l.b16 %v1453
      %v1614 = vunpack.c.l.b16 %v1454
      %v1615 = vunpack.c.l.b16 %v1455
      %v1616 = vunpack.c.l.b16 %v1456
      %v1617 = vunpack.c.l.b16 %v1457
      %v1618 = vunpack.c.l.b16 %v1458
      %v1619 = vunpack.c.l.b16 %v1459
      %v1620 = vunpack.c.l.b16 %v1460
      %v1621 = vunpack.c.l.b16 %v1461
      %v1622 = vunpack.c.l.b16 %v1462
      %v1623 = vunpack.c.l.b16 %v1463
      %v1624 = vunpack.c.l.b16 %v1464
      %v1625 = vunpack.c.l.b16 %v1465
      %v1626 = vunpack.c.l.b16 %v1466
      %v1627 = vunpack.c.l.b16 %v1467
      %v1628 = vunpack.c.l.b16 %v1468
      %v1629 = vunpack.c.l.b16 %v1469
      %v1630 = vunpack.c.l.b16 %v1470
      %v1631 = vunpack.c.l.b16 %v1471
      %v1632 = vunpack.c.l.b16 %v1472
      %v1633 = vunpack.c.l.b16 %v1473
      %v1634 = vunpack.c.l.b16 %v1474
      %v1635 = vunpack.c.l.b16 %v1475
      %v1636 = vunpack.c.l.b16 %v1476
      %v1637 = vunpack.c.l.b16 %v1477
      %v1638 = vunpack.c.l.b16 %v1478
      %v1639 = vunpack.c.l.b16 %v1479
      %v1640 = vunpack.c.l.b16 %v1480
      %v1641 = vunpack.c.l.b16 %v1481
      %v1642 = vunpack.c.l.b16 %v1482
      %v1643 = vunpack.c.l.b16 %v1483
      %v1644 = vunpack.c.l.b16 %v1484
      %v1645 = vunpack.c.l.b16 %v1485
      %v1646 = vunpack.c.l.b16 %v1486
      %v1647 = vunpack.c.l.b16 %v1487
      %v1648 = vunpack.c.l.b16 %v1488
      %v1649 = vunpack.c.l.b16 %v1489
      %v1650 = vunpack.c.l.b16 %v1490
      %v1651 = vunpack.c.l.b16 %v1491
      %v1652 = vunpack.c.l.b16 %v1492
      %v1653 = vunpack.c.l.b16 %v1493
      %v1654 = vunpack.c.l.b16 %v1494
      %v1655 = vunpack.c.l.b16 %v1495
      %v1656 = vunpack.c.l.b16 %v1496
      %v1657 = vunpack.c.l.b16 %v1497
      %v1658 = vunpack.c.l.b16 %v1498
      %v1659 = vunpack.c.l.b16 %v1499
      %v1660 = vpack.c.b16 %v1613, %v1612
      %v1661 = vpack.c.b16 %v1615, %v1614
      %v1662 = vpack.c.b16 %v1617, %v1616
      %v1663 = vpack.c.b16 %v1619, %v1618
      %v1664 = vpack.c.b16 %v1621, %v1620
      %v1665 = vpack.c.b16 %v1623, %v1622
      %v1666 = vpack.c.b16 %v1625, %v1624
      %v1667 = vpack.c.b16 %v1627, %v1626
      %v1668 = vpack.c.b16 %v1629, %v1628
      %v1669 = vpack.c.b16 %v1631, %v1630
      %v1670 = vpack.c.b16 %v1633, %v1632
      %v1671 = vpack.c.b16 %v1635, %v1634
      %v1672 = vpack.c.b16 %v1637, %v1636
      %v1673 = vpack.c.b16 %v1639, %v1638
      %v1674 = vpack.c.b16 %v1641, %v1640
      %v1675 = vpack.c.b16 %v1643, %v1642
      %v1676 = vpack.c.b16 %v1645, %v1644
      %v1677 = vpack.c.b16 %v1647, %v1646
      %v1678 = vpack.c.b16 %v1649, %v1648
      %v1679 = vpack.c.b16 %v1651, %v1650
      %v1680 = vpack.c.b16 %v1653, %v1652
      %v1681 = vpack.c.b16 %v1655, %v1654
      %v1682 = vpack.c.b16 %v1657, %v1656
      %v1683 = vpack.c.b16 %v1659, %v1658
      %1708 = vmatprep.subr.bf16.mxu0 0
      %1709 = vmatpush1.bf16.msra.mxu0 %v1660
      %1710 = vmatprep.subr.bf16.mxu0 0
      %1711 = vmatpush1.bf16.msra.mxu0 %v1661
      %1712 = vmatprep.subr.bf16.mxu0 0
      %1713 = vmatpush1.bf16.msra.mxu0 %v1662
      %1714 = vmatprep.subr.bf16.mxu0 0
      %1715 = vmatpush1.bf16.msra.mxu0 %v1663
      %1716 = vmatprep.subr.bf16.mxu0 0
      %1717 = vmatpush1.bf16.msra.mxu0 %v1664
      %1718 = vmatprep.subr.bf16.mxu0 0
      %1719 = vmatpush1.bf16.msra.mxu0 %v1665
      %1720 = vmatprep.subr.bf16.mxu0 0
      %1721 = vmatpush1.bf16.msra.mxu0 %v1666
      %1722 = vmatprep.subr.bf16.mxu0 0
      %1723 = vmatpush1.bf16.msra.mxu0 %v1667
      %1724 = vmatprep.subr.bf16.mxu0 0
      %1725 = vmatpush1.bf16.msra.mxu0 %v1668
      %1726 = vmatprep.subr.bf16.mxu0 0
      %1727 = vmatpush1.bf16.msra.mxu0 %v1669
      %1728 = vmatprep.subr.bf16.mxu0 0
      %1729 = vmatpush1.bf16.msra.mxu0 %v1670
      %1730 = vmatprep.subr.bf16.mxu0 0
      %1731 = vmatpush1.bf16.msra.mxu0 %v1671
      %1732 = vmatprep.subr.bf16.mxu0 0
      %1733 = vmatpush1.bf16.msra.mxu0 %v1672
      %1734 = vmatprep.subr.bf16.mxu0 0
      %1735 = vmatpush1.bf16.msra.mxu0 %v1673
      %1736 = vmatprep.subr.bf16.mxu0 0
      %1737 = vmatpush1.bf16.msra.mxu0 %v1674
      %1738 = vmatprep.subr.bf16.mxu0 0
      %1739 = vmatpush1.bf16.msra.mxu0 %v1675
      %1740 = vmatprep.mubr.bf16.mxu0 %v1541
      %1741 = vmatmul.mubr.bf16.gmra.mrb[0].mxu0 %v1540
      %v1742 = vpop.f32.mrb[0].mxu0
      %v1743 = vadd.f32 0.0, %v1742
      %v1744 = vpop.f32.mrb[0].mxu0
      %v1745 = vpop.f32.mrb[0].mxu0
      %v1746 = vadd.f32 0.0, %v1745
      %v1747 = vpop.f32.mrb[0].mxu0
      %1748 = vmatprep.mubr.bf16.mxu0 %v1544
      %1749 = vmatmul.mubr.bf16.gmra.mrb[0].mxu0 %v1543
      %v1750 = vpop.f32.mrb[0].mxu0
      %v1751 = vadd.f32 0.0, %v1750
      %v1752 = vpop.f32.mrb[0].mxu0
      %v1753 = vpop.f32.mrb[0].mxu0
      %v1754 = vadd.f32 0.0, %v1753
      %v1755 = vpop.f32.mrb[0].mxu0
      %1756 = vmatprep.mubr.bf16.mxu0 %v1547
      %1757 = vmatmul.mubr.bf16.gmra.mrb[0].mxu0 %v1546
      %v1758 = vpop.f32.mrb[0].mxu0
      %v1759 = vadd.f32 0.0, %v1758
      %v1760 = vpop.f32.mrb[0].mxu0
      %v1761 = vpop.f32.mrb[0].mxu0
      %v1762 = vadd.f32 0.0, %v1761
      %v1763 = vpop.f32.mrb[0].mxu0
      %1764 = vmatprep.mubr.bf16.mxu0 %v1550
      %1765 = vmatmul.mubr.bf16.gmra.mrb[0].mxu0 %v1549
      %v1766 = vpop.f32.mrb[0].mxu0
      %v1767 = vadd.f32 0.0, %v1766
      %v1768 = vpop.f32.mrb[0].mxu0
      %v1769 = vpop.f32.mrb[0].mxu0
      %v1770 = vadd.f32 0.0, %v1769
      %v1771 = vpop.f32.mrb[0].mxu0
      %1772 = vdwg.mxu0
      %1773 = vmatprep.subr.bf16.mxu0 0
      %1774 = vmatpush1.bf16.msra.mxu0 %v1676
      %1775 = vmatprep.subr.bf16.mxu0 0
      %1776 = vmatpush1.bf16.msra.mxu0 %v1677
      %1777 = vmatprep.subr.bf16.mxu0 0
      %1778 = vmatpush1.bf16.msra.mxu0 %v1678
      %1779 = vmatprep.subr.bf16.mxu0 0
      %1780 = vmatpush1.bf16.msra.mxu0 %v1679
      %1781 = vmatprep.subr.bf16.mxu0 0
      %1782 = vmatpush1.bf16.msra.mxu0 %v1680
      %1783 = vmatprep.subr.bf16.mxu0 0
      %1784 = vmatpush1.bf16.msra.mxu0 %v1681
      %1785 = vmatprep.subr.bf16.mxu0 0
      %1786 = vmatpush1.bf16.msra.mxu0 %v1682
      %1787 = vmatprep.subr.bf16.mxu0 0
      %1788 = vmatpush1.bf16.msra.mxu0 %v1683
      %1789 = vmatprep.subr.bf16.mxu0 0
      %1790 = vmatpush1.bf16.msra.mxu0 0
      %1791 = vmatprep.subr.bf16.mxu0 0
      %1792 = vmatpush1.bf16.msra.mxu0 0
      %1793 = vmatprep.subr.bf16.mxu0 0
      %1794 = vmatpush1.bf16.msra.mxu0 0
      %1795 = vmatprep.subr.bf16.mxu0 0
      %1796 = vmatpush1.bf16.msra.mxu0 0
      %1797 = vmatprep.subr.bf16.mxu0 0
      %1798 = vmatpush1.bf16.msra.mxu0 0
      %1799 = vmatprep.subr.bf16.mxu0 0
      %1800 = vmatpush1.bf16.msra.mxu0 0
      %1801 = vmatprep.subr.bf16.mxu0 0
      %1802 = vmatpush1.bf16.msra.mxu0 0
      %1803 = vmatprep.subr.bf16.mxu0 0
      %1804 = vmatpush1.bf16.msra.mxu0 0
      %1805 = vmatprep.mubr.bf16.mxu0 0
      %1806 = vmatmul.mubr.bf16.gmra.mrb[0].mxu0 %v1542
      %v1807 = vpop.f32.mrb[0].mxu0
      %v1808 = vadd.f32 %v1743, %v1807
      %v1809 = vpop.f32.mrb[0].mxu0
      %v1810 = vpop.f32.mrb[0].mxu0
      %v1811 = vadd.f32 %v1746, %v1810
      %v1812 = vpop.f32.mrb[0].mxu0
      %1813 = vmatprep.mubr.bf16.mxu0 0
      %1814 = vmatmul.mubr.bf16.gmra.mrb[0].mxu0 %v1545
      %v1815 = vpop.f32.mrb[0].mxu0
      %v1816 = vadd.f32 %v1751, %v1815
      %v1817 = vpop.f32.mrb[0].mxu0
      %v1818 = vpop.f32.mrb[0].mxu0
      %v1819 = vadd.f32 %v1754, %v1818
      %v1820 = vpop.f32.mrb[0].mxu0
      %1821 = vmatprep.mubr.bf16.mxu0 0
      %1822 = vmatmul.mubr.bf16.gmra.mrb[0].mxu0 %v1548
      %v1823 = vpop.f32.mrb[0].mxu0
      %v1824 = vadd.f32 %v1759, %v1823
      %v1825 = vpop.f32.mrb[0].mxu0
      %v1826 = vpop.f32.mrb[0].mxu0
      %v1827 = vadd.f32 %v1762, %v1826
      %v1828 = vpop.f32.mrb[0].mxu0
      %1829 = vmatprep.mubr.bf16.mxu0 0
      %1830 = vmatmul.mubr.bf16.gmra.mrb[0].mxu0 %v1551
      %v1831 = vpop.f32.mrb[0].mxu0
      %v1832 = vadd.f32 %v1767, %v1831
      %v1833 = vpop.f32.mrb[0].mxu0
      %v1834 = vpop.f32.mrb[0].mxu0
      %v1835 = vadd.f32 %v1770, %v1834
      %v1836 = vpop.f32.mrb[0].mxu0
      %1837 = vdwg.mxu0
      %v1838 = vadd.f32 %v1404, %v1808
      %v1839 = vadd.f32 %v1407, %v1811
      %v1840 = vadd.f32 %v1412, %v1816
      %v1841 = vadd.f32 %v1415, %v1819
      %v1842 = vadd.f32 %v1420, %v1824
      %v1843 = vadd.f32 %v1423, %v1827
      %v1844 = vadd.f32 %v1428, %v1832
      %v1845 = vadd.f32 %v1431, %v1835
      %v1846 = vadd.f32 %v1838, %v1839
      %v1847 = vadd.f32 %v1846, %v1840
      %v1848 = vadd.f32 %v1847, %v1841
      %v1849 = vadd.f32 %v1848, %v1842
      %v1850 = vadd.f32 %v1849, %v1843
      %v1851 = vadd.f32 %v1850, %v1844
      %v1852 = vadd.f32 %v1851, %v1845
      %v1853 = vrot.slane %v1852, 4
      %v1854 = vadd.f32 %v1852, %v1853
      %v1855 = vrot.slane %v1854, 2
      %v1856 = vadd.f32 %v1854, %v1855
      %v1857 = vrot.slane %v1856, 1
      %v1858 = vadd.f32 %v1856, %v1857
      %v1859 = vmul.f32 %v1838, %v1838
      %v1860 = vmul.f32 %v1839, %v1839
      %v1861 = vmul.f32 %v1840, %v1840
      %v1862 = vmul.f32 %v1841, %v1841
      %v1863 = vmul.f32 %v1842, %v1842
      %v1864 = vmul.f32 %v1843, %v1843
      %v1865 = vmul.f32 %v1844, %v1844
      %v1866 = vmul.f32 %v1845, %v1845
      %v1867 = vadd.f32 %v1859, %v1860
      %v1868 = vadd.f32 %v1867, %v1861
      %v1869 = vadd.f32 %v1868, %v1862
      %v1870 = vadd.f32 %v1869, %v1863
      %v1871 = vadd.f32 %v1870, %v1864
      %v1872 = vadd.f32 %v1871, %v1865
      %v1873 = vadd.f32 %v1872, %v1866
      %v1874 = vrot.slane %v1873, 4
      %v1875 = vadd.f32 %v1873, %v1874
      %v1876 = vrot.slane %v1875, 2
      %v1877 = vadd.f32 %v1875, %v1876
      %v1878 = vrot.slane %v1877, 1
      %v1879 = vadd.f32 %v1877, %v1878
      %v1880 = vmul.f32 %v1858, 0.015625
      %v1881 = vmul.f32 %v1879, 0.015625
      %v1882 = vmul.f32 %v1880, %v1880
      %v1883 = vsub.f32 %v1881, %v1882
      %v1884 = vmax.f32 %v1883, 0.0
      %v1885 = vsub.f32 %v1838, %v1880
      %v1886 = vsub.f32 %v1839, %v1880
      %v1887 = vsub.f32 %v1840, %v1880
      %v1888 = vsub.f32 %v1841, %v1880
      %v1889 = vsub.f32 %v1842, %v1880
      %v1890 = vsub.f32 %v1843, %v1880
      %v1891 = vsub.f32 %v1844, %v1880
      %v1892 = vsub.f32 %v1845, %v1880
      %v1893 = vadd.f32 %v1884, 1e-05
      %v1894 = vrsqrt.pop %v1893
      %v1895 = vmul.f32 %v1885, %v1894
      %v1896 = vmul.f32 %v1886, %v1894
      %v1897 = vmul.f32 %v1887, %v1894
      %v1898 = vmul.f32 %v1888, %v1894
      %v1899 = vmul.f32 %v1889, %v1894
      %v1900 = vmul.f32 %v1890, %v1894
      %v1901 = vmul.f32 %v1891, %v1894
      %v1902 = vmul.f32 %v1892, %v1894
      %v1903 = vld [vmem:[%s301] sm:$0x1]
      %v1905 = vlaneseq
      %v1906 = vshrl.u32 %v1905, 7
      %v1907 = vsub.s32 0, %v1906
      %v1908 = vrot.slane %v1903, %v1907
      %v1910 = vmul.f32 %v1895, %v1908
      %v1911 = vmul.f32 %v1896, %v1908
      %v1912 = vmul.f32 %v1897, %v1908
      %v1913 = vmul.f32 %v1898, %v1908
      %v1914 = vmul.f32 %v1899, %v1908
      %v1915 = vmul.f32 %v1900, %v1908
      %v1916 = vmul.f32 %v1901, %v1908
      %v1917 = vmul.f32 %v1902, %v1908
      %v1918 = vld [vmem:[%s304] sm:$0x1]
      %v1920 = vlaneseq
      %v1921 = vshrl.u32 %v1920, 7
      %v1922 = vsub.s32 0, %v1921
      %v1923 = vrot.slane %v1918, %v1922
      %v1925 = vadd.f32 %v1910, %v1923
      %v1926 = vadd.f32 %v1911, %v1923
      %v1927 = vadd.f32 %v1912, %v1923
      %v1928 = vadd.f32 %v1913, %v1923
      %v1929 = vadd.f32 %v1914, %v1923
      %v1930 = vadd.f32 %v1915, %v1923
      %v1931 = vadd.f32 %v1916, %v1923
      %v1932 = vadd.f32 %v1917, %v1923
      %v1933 = vld [vmem:[%s312] sm:$0xf]
      %v1934 = vld [vmem:[%s312 + $0x4] sm:$0xf]
      %v1935 = vld [vmem:[%s312 + $0x8] sm:$0xf]
      %v1936 = vld [vmem:[%s312 + $0xc] sm:$0xf]
      %v1937 = vld [vmem:[%s312 + $0x10] sm:$0xf]
      %v1938 = vld [vmem:[%s312 + $0x14] sm:$0xf]
      %v1939 = vld [vmem:[%s312 + $0x18] sm:$0xf]
      %v1940 = vld [vmem:[%s312 + $0x1c] sm:$0xf]
      %v1941 = vunpack.c.l.bf16 %v1933
      %v1942 = vunpack.c.l.bf16 %v1934
      %v1943 = vunpack.c.l.bf16 %v1935
      %v1944 = vunpack.c.l.bf16 %v1936
      %v1945 = vunpack.c.l.bf16 %v1937
      %v1946 = vunpack.c.l.bf16 %v1938
      %v1947 = vunpack.c.l.bf16 %v1939
      %v1948 = vunpack.c.l.bf16 %v1940
      %v1949 = vadd.f32 %v1925, %v1941
      %v1950 = vadd.f32 %v1926, %v1942
      %v1951 = vadd.f32 %v1927, %v1943
      %v1952 = vadd.f32 %v1928, %v1944
      %v1953 = vadd.f32 %v1929, %v1945
      %v1954 = vadd.f32 %v1930, %v1946
      %v1955 = vadd.f32 %v1931, %v1947
      %v1956 = vadd.f32 %v1932, %v1948
      %v1957 = vpack.c.bf16 %v1949, %v1949
      %v1958 = vpack.c.bf16 %v1950, %v1950
      %v1959 = vpack.c.bf16 %v1951, %v1951
      %v1960 = vpack.c.bf16 %v1952, %v1952
      %v1961 = vpack.c.bf16 %v1953, %v1953
      %v1962 = vpack.c.bf16 %v1954, %v1954
      %v1963 = vpack.c.bf16 %v1955, %v1955
      %v1964 = vpack.c.bf16 %v1956, %v1956
      %1965 = vst [vmem:[%s320] sm:$0xf] %v1957
      %1966 = vst [vmem:[%s320 + $0x4] sm:$0xf] %v1958
      %1967 = vst [vmem:[%s320 + $0x8] sm:$0xf] %v1959
      %1968 = vst [vmem:[%s320 + $0xc] sm:$0xf] %v1960
      %1969 = vst [vmem:[%s320 + $0x10] sm:$0xf] %v1961
      %1970 = vst [vmem:[%s320 + $0x14] sm:$0xf] %v1962
      %1971 = vst [vmem:[%s320 + $0x18] sm:$0xf] %v1963
      %1972 = vst [vmem:[%s320 + $0x1c] sm:$0xf] %v1964
      %p1973 = scmp.lt.s32.totalorder %s20, 1
      %s1974 = scalar_select %p1973, %s20, 1
      %p1975 = scmp.lt.s32.totalorder %s21, 0
      %s1976 = scalar_select %p1975, %s21, 0
      %s1977 = smul.addr %s1974, 8
      %s1978 = sadd.s32 %s1976, %s1977
      %s1979 = smul.addr %s1978, 4
      %s1980 = scalar_lea.vmem %s5, %s1979
      // Predicated region
      $region41: #{basic_block_ins_forward.5} parent=39 // pred_check
        %p1981 = pneg %p180
      $region42: #{basic_block_ins_forward.5} parent=39 // pred_check_branch
        %1983 = sbr.rel (%p1981) target = $region44
      $region43: #{basic_block_ins_forward.5} parent=39 // pred_region
        _
      $region44: #{basic_block_ins_forward.5} parent=39 // pred_fallthru
        _
    $region40: #{basic_block_ins_forward.5} parent=5 // pred_fallthru
      _
    %p1984 = scmp.le.s32.totalorder 2, %s11
    // Predicated region
    $region45: #{basic_block_ins_forward.5} parent=5 // pred_check
      %p1985 = pneg %p1984
    $region46: #{basic_block_ins_forward.5} parent=5 // pred_check_branch
      %1987 = sbr.rel (%p1985) target = $region48
    $region47: #{basic_block_ins_forward.5} parent=5 // pred_region
      %s1988 = ssub.s32 %s11, 2
      // Predicated region
      $region49: #{basic_block_ins_forward.5} parent=47 // pred_check
        %p1989 = pneg %p186
      $region50: #{basic_block_ins_forward.5} parent=47 // pred_check_branch
        %1991 = sbr.rel (%p1989) target = $region52
      $region51: #{basic_block_ins_forward.5} parent=47 // pred_region
        %p1992 = scmp.lt.s32.totalorder %s22, 1
        %s1993 = scalar_select %p1992, %s22, 1
        %p1994 = scmp.lt.s32.totalorder %s23, 0
        %s1995 = scalar_select %p1994, %s23, 0
        %s1996 = smul.addr %s1993, 8
        %s1997 = sadd.s32 %s1995, %s1996
        %s1998 = smul.addr %s1997, 4
        %s1999 = scalar_lea.vmem %s5, %s1998
      $region52: #{basic_block_ins_forward.5} parent=47 // pred_fallthru
        _
    $region48: #{basic_block_ins_forward.5} parent=5 // pred_fallthru
      _
  $region6: #{basic_block_ins_forward.5} parent=0 // loop_footer
    %s15 = sadd.s32 1, %s11
  $region7: #{basic_block_ins_forward.5} parent=0 // loop_footer_branch
    %10 = sbr.rel target = $region3
  $region8: #{basic_block_ins_forward.5} parent=0 // loop_exit
    _

</llo_original>
